<compile_context>
chip_gen: v7x
topology: tpu7x:2x2x1
jax: 0.10.0
libtpu: 0.0.40
codegen_flags: <defaults>
</compile_context>

<pallas_src>
import functools

import numpy as np
import jax
import jax.numpy as jnp
from jax.experimental import pallas as pl
from jax.experimental.pallas import tpu as pltpu

# ----------------------------- hyper-parameters (small) -----------------------------
WORD_DIM = 16          # args.word_embedding_dim
TITLE_LEN = 16         # args.title_word_size
NUM_FILTERS = 32       # args.lstur_num_filters
WIN = 3                # args.lstur_window_sizes
QUERY_DIM = 32         # args.query_vector_dim
SAMPLE_NUM = 4         # args.sample_num
USER_CLICKED_NUM = 2   # args.user_clicked_new_num  (== candidate batch for broadcasting)
CLICKED_PER_USER = 8   # padded length of each user's clicked-news sequence


# ----------------------------- glue: im2col for the title conv -----------------------------
def im2col(x, win):
    # x: (N, T, D) -> (N, T, win*D), "same" padding (win odd)
    N, T, D = x.shape
    pad = (win - 1) // 2
    xp = jnp.pad(x, ((0, 0), (pad, pad), (0, 0)))
    return jnp.concatenate([xp[:, k:k + T, :] for k in range(win)], axis=-1)


# ----------------------------- fused Pallas kernel -----------------------------
# One grid step == one user:
#   encode the user's SN candidate titles (param set 0) and S clicked titles (param set 1),
#   run the length-masked GRU over the clicked encodings (still resident in vregs),
#   emit the SN dot-product scores.  No intermediate ever touches HBM.
def _fused_kernel(title_len,
                  len_ref,                                    # SMEM scalar prefetch: (U,) int32
                  cand_ref, clk_ref,                          # (1, SN*T, WD), (1, S*T, WD)
                  wc_ref, bc_ref, wa_ref, ba_ref, qv_ref, g_ref, b_ref,   # stacked (2, ...)
                  wih_ref, bih_ref, whh_ref, bhh_ref,         # stacked (3, ...)
                  out_ref):                                   # (1, 1, SN)
    u = pl.program_id(0)
    T = title_len
    F = wc_ref.shape[2]
    Q = wa_ref.shape[2]
    SN = cand_ref.shape[1] // T
    S = clk_ref.shape[1] // T

    def encode(x_rows, n_titles, e):
        # x_rows: (n_titles*T, WD) f32.  Conv realized as ONE MXU matmul (bf16 ops, f32 acc).
        conv = jnp.dot(x_rows.astype(jnp.bfloat16), wc_ref[e].astype(jnp.bfloat16),
                       preferred_element_type=jnp.float32) + bc_ref[e]
        conv = jnp.maximum(conv, 0.0)                                           # (n*T, F)
        att = jnp.tanh(jnp.dot(conv.astype(jnp.bfloat16), wa_ref[e].astype(jnp.bfloat16),
                               preferred_element_type=jnp.float32) + ba_ref[e])  # (n*T, Q)
        att3 = att.reshape(n_titles, T, Q)
        s = jnp.sum(att3 * qv_ref[e][None, :, :], axis=2)                       # (n, T)
        s = s - jnp.max(s, axis=1, keepdims=True)
        ex = jnp.exp(s)
        w = ex * pl.reciprocal(jnp.sum(ex, axis=1, keepdims=True), approx=True)  # softmax
        pooled = jnp.sum(conv.reshape(n_titles, T, F) * w[:, :, None], axis=1)  # (n, F)
        mean = jnp.mean(pooled, axis=1, keepdims=True)
        var = jnp.mean((pooled - mean) ** 2, axis=1, keepdims=True)
        normed = (pooled - mean) * jax.lax.rsqrt(var + 1e-5)
        return normed * g_ref[e] + b_ref[e]                                     # (n, F)

    cand_rep = encode(cand_ref[...].reshape(SN * T, -1), SN, 0)                 # (SN, F)
    clk_rep = encode(clk_ref[...].reshape(S * T, -1), S, 1)                     # (S, F)

    # ---- GRU over the clicked sequence (time-major, this user) ----
    # x-side projection hoisted out of the recurrence; one (S,F)@(F,F) per gate (bf16/MXU).
    xb = clk_rep.astype(jnp.bfloat16)
    gi_r = jnp.dot(xb, wih_ref[0].astype(jnp.bfloat16),
                   preferred_element_type=jnp.float32) + bih_ref[0]             # (S, F)
    gi_z = jnp.dot(xb, wih_ref[1].astype(jnp.bfloat16),
                   preferred_element_type=jnp.float32) + bih_ref[1]
    gi_n = jnp.dot(xb, wih_ref[2].astype(jnp.bfloat16),
                   preferred_element_type=jnp.float32) + bih_ref[2]

    whh_r, whh_z, whh_n = whh_ref[0], whh_ref[1], whh_ref[2]                    # hoisted (F, F)
    bhh_r, bhh_z, bhh_n = bhh_ref[0], bhh_ref[1], bhh_ref[2]                    # hoisted (1, F)

    length = len_ref[u]                                                         # SMEM scalar
    valid = jax.lax.broadcasted_iota(jnp.int32, (S, 1), 0) < length             # (S, 1) masks

    h = jnp.zeros((1, F), jnp.float32)
    for t in range(S):                                                          # fully unrolled
        # recurrent matvecs kept f32: (1,F)@(F,F) is latency-bound, not MXU-throughput-bound
        r = jax.nn.sigmoid(gi_r[t:t + 1, :] +
                           jnp.dot(h, whh_r, preferred_element_type=jnp.float32) + bhh_r)
        z = jax.nn.sigmoid(gi_z[t:t + 1, :] +
                           jnp.dot(h, whh_z, preferred_element_type=jnp.float32) + bhh_z)
        n = jnp.tanh(gi_n[t:t + 1, :] +
                     r * (jnp.dot(h, whh_n, preferred_element_type=jnp.float32) + bhh_n))
        h_new = (1.0 - z) * n + z * h
        h = jnp.where(valid[t:t + 1, :], h_new, h)   # pack_padded_sequence last-state semantics
    user_rep = h                                                                # (1, F)

    # sorce_j = <cand_rep_j, user_rep>  — MXU NT matvec, lane-dense (1, SN) result
    scores = jnp.dot(user_rep, cand_rep.T, preferred_element_type=jnp.float32)  # (1, SN)
    out_ref[...] = scores.reshape(1, 1, SN)


# ----------------------------- full forward (GRU.forward) -----------------------------
@jax.jit
def gru_model_forward(params, cand_emb, clicked_emb, clicked_len):
    U, SN, T, D = cand_emb.shape
    _, S, _, _ = clicked_emb.shape
    F = NUM_FILTERS
    Q = QUERY_DIM
    WD = WIN * D

    cand_xcol = im2col(cand_emb.reshape(U * SN, T, D), WIN).reshape(U, SN * T, WD)
    clk_xcol = im2col(clicked_emb.reshape(U * S, T, D), WIN).reshape(U, S * T, WD)

    ce, ue, gp = params["cand_enc"], params["user_enc"], params["gru"]
    stack2 = lambda k: jnp.stack([ce[k], ue[k]], axis=0)            # (2,...) encoder selector
    split3 = lambda w: jnp.stack([w[:, :F], w[:, F:2 * F], w[:, 2 * F:]], axis=0)  # [r,z,n]

    lens = jnp.minimum(clicked_len.astype(jnp.int32), S)            # pre-clamp (see notes)

    out = pl.pallas_call(
        functools.partial(_fused_kernel, T),
        out_shape=jax.ShapeDtypeStruct((U, 1, SN), jnp.float32),
        grid_spec=pltpu.PrefetchScalarGridSpec(
            num_scalar_prefetch=1,                                  # clicked_len -> SMEM
            grid=(U,),
            in_specs=[
                pl.BlockSpec((1, SN * T, WD), lambda u, ln: (u, 0, 0)),
                pl.BlockSpec((1, S * T, WD), lambda u, ln: (u, 0, 0)),
                pl.BlockSpec((2, WD, F), lambda u, ln: (0, 0, 0)),
                pl.BlockSpec((2, 1, F), lambda u, ln: (0, 0, 0)),
                pl.BlockSpec((2, F, Q), lambda u, ln: (0, 0, 0)),
                pl.BlockSpec((2, 1, Q), lambda u, ln: (0, 0, 0)),
                pl.BlockSpec((2, 1, Q), lambda u, ln: (0, 0, 0)),
                pl.BlockSpec((2, 1, F), lambda u, ln: (0, 0, 0)),
                pl.BlockSpec((2, 1, F), lambda u, ln: (0, 0, 0)),
                pl.BlockSpec((3, F, F), lambda u, ln: (0, 0, 0)),
                pl.BlockSpec((3, 1, F), lambda u, ln: (0, 0, 0)),
                pl.BlockSpec((3, F, F), lambda u, ln: (0, 0, 0)),
                pl.BlockSpec((3, 1, F), lambda u, ln: (0, 0, 0)),
            ],
            out_specs=pl.BlockSpec((1, 1, SN), lambda u, ln: (u, 0, 0)),
        ),
        compiler_params=pltpu.CompilerParams(dimension_semantics=("parallel",)),
    )(lens, cand_xcol, clk_xcol,
      stack2("wc"), stack2("bc"), stack2("wa"), stack2("ba"), stack2("qv"),
      stack2("gamma"), stack2("beta"),
      split3(gp["wih"]), split3(gp["bih"]), split3(gp["whh"]), split3(gp["bhh"]))
    return out.reshape(U, SN)


# ----------------------------- parameter init (deterministic, synthetic) -----------------------------
def init_encoder_params(key):
    ks = jax.random.split(key, 5)
    wd = WIN * WORD_DIM
    return {
        "wc": 0.1 * jax.random.normal(ks[0], (wd, NUM_FILTERS), jnp.float32),
        "bc": 0.1 * jax.random.normal(ks[1], (1, NUM_FILTERS), jnp.float32),
        "wa": 0.1 * jax.random.normal(ks[2], (NUM_FILTERS, QUERY_DIM), jnp.float32),
        "ba": 0.1 * jax.random.normal(ks[3], (1, QUERY_DIM), jnp.float32),
        "qv": 0.1 * jax.random.normal(ks[4], (1, QUERY_DIM), jnp.float32),
        "gamma": jnp.ones((1, NUM_FILTERS), jnp.float32),
        "beta": jnp.zeros((1, NUM_FILTERS), jnp.float32),
    }


def init_gru_params(key):
    ks = jax.random.split(key, 4)
    F = NUM_FILTERS
    return {  # gate order [r, z, n] concatenated on the lane axis; stored transposed: x @ W
        "wih": 0.1 * jax.random.normal(ks[0], (F, 3 * F), jnp.float32),
        "whh": 0.1 * jax.random.normal(ks[1], (F, 3 * F), jnp.float32),
        "bih": 0.1 * jax.random.normal(ks[2], (1, 3 * F), jnp.float32),
        "bhh": 0.1 * jax.random.normal(ks[3], (1, 3 * F), jnp.float32),
    }


# ----------------------------- pure-JAX reference for checking -----------------------------
def encoder_ref(x, p):
    xcol = im2col(x, WIN)
    conv = jnp.maximum(jnp.einsum("ntk,kf->ntf", xcol, p["wc"]) + p["bc"][0], 0.0)
    att = jnp.tanh(jnp.einsum("ntf,fq->ntq", conv, p["wa"]) + p["ba"][0])
    s = jnp.einsum("ntq,q->nt", att, p["qv"][0])
    w = jax.nn.softmax(s, axis=1)
    pooled = jnp.einsum("ntf,nt->nf", conv, w)
    mean = pooled.mean(-1, keepdims=True)
    var = ((pooled - mean) ** 2).mean(-1, keepdims=True)
    return (pooled - mean) / jnp.sqrt(var + 1e-5) * p["gamma"][0] + p["beta"][0]


def gru_ref(seq, length, p):
    F = seq.shape[-1]
    h = jnp.zeros((F,), jnp.float32)
    for t in range(seq.shape[0]):
        x = seq[t]
        gi = x @ p["wih"] + p["bih"][0]
        gh = h @ p["whh"] + p["bhh"][0]
        r = jax.nn.sigmoid(gi[:F] + gh[:F])
        z = jax.nn.sigmoid(gi[F:2 * F] + gh[F:2 * F])
        n = jnp.tanh(gi[2 * F:] + r * gh[2 * F:])
        h_new = (1.0 - z) * n + z * h
        h = jnp.where(t < length, h_new, h)
    return h


def forward_ref(params, cand_emb, clicked_emb, clicked_len):
    B, SN, T, D = cand_emb.shape
    U, S, _, _ = clicked_emb.shape
    new_rep = encoder_ref(cand_emb.reshape(B * SN, T, D), params["cand_enc"]).reshape(B, SN, -1)
    clicked_rep = encoder_ref(clicked_emb.reshape(U * S, T, D), params["user_enc"]).reshape(U, S, -1)
    user_rep = jnp.stack([gru_ref(clicked_rep[i], clicked_len[i], params["gru"]) for i in range(U)])
    return jnp.sum(new_rep * user_rep[:, None, :], axis=2)


# ----------------------------- main -----------------------------
if __name__ == "__main__":
    key = jax.random.PRNGKey(0)
    k_ce, k_ue, k_g, k_c, k_u = jax.random.split(key, 5)

    params = {
        "cand_enc": init_encoder_params(k_ce),
        "user_enc": init_encoder_params(k_ue),
        "gru": init_gru_params(k_g),
    }

    cand_emb = jax.random.normal(
        k_c, (USER_CLICKED_NUM, SAMPLE_NUM, TITLE_LEN, WORD_DIM), jnp.float32)
    clicked_emb = jax.random.normal(
        k_u, (USER_CLICKED_NUM, CLICKED_PER_USER, TITLE_LEN, WORD_DIM), jnp.float32)
    clicked_len = jnp.array([CLICKED_PER_USER, 5], jnp.int32)

    out = gru_model_forward(params, cand_emb, clicked_emb, clicked_len)
    out = jax.block_until_ready(out)

    ref = forward_ref(params, cand_emb, clicked_emb, clicked_len)
    # bf16 MXU operands (encoder + hoisted GRU x-projection) vs. f32 reference -> looser tol.
    np.testing.assert_allclose(np.asarray(out), np.asarray(ref), rtol=2e-2, atol=2e-2)

    print("KERNEL_OK")
</pallas_src>

<mosaic_0001>
module attributes {stable_mosaic.version = 11 : i64} {
  func.func @_fused_kernel(%arg0: i32, %arg1: memref<2xi32, #tpu.memory_space<smem>>, %arg2: memref<1x64x48xf32, #tpu.memory_space<vmem>>, %arg3: memref<1x128x48xf32, #tpu.memory_space<vmem>>, %arg4: memref<2x48x32xf32, #tpu.memory_space<vmem>>, %arg5: memref<2x1x32xf32, #tpu.memory_space<vmem>>, %arg6: memref<2x32x32xf32, #tpu.memory_space<vmem>>, %arg7: memref<2x1x32xf32, #tpu.memory_space<vmem>>, %arg8: memref<2x1x32xf32, #tpu.memory_space<vmem>>, %arg9: memref<2x1x32xf32, #tpu.memory_space<vmem>>, %arg10: memref<2x1x32xf32, #tpu.memory_space<vmem>>, %arg11: memref<3x32x32xf32, #tpu.memory_space<vmem>>, %arg12: memref<3x1x32xf32, #tpu.memory_space<vmem>>, %arg13: memref<3x32x32xf32, #tpu.memory_space<vmem>>, %arg14: memref<3x1x32xf32, #tpu.memory_space<vmem>>, %arg15: memref<1x1x4xf32, #tpu.memory_space<vmem>>) attributes {dimension_semantics = [#tpu.dimension_semantics<parallel>], iteration_bounds = array<i64: 2>, scalar_prefetch = 1 : i64, scratch_operands = 0 : i64, tpu.core_type = #tpu.core_type<tc>, window_params = [{transform_indices = @transform_0, window_bounds = array<i64: 1, 64, 48>}, {transform_indices = @transform_1, window_bounds = array<i64: 1, 128, 48>}, {pipeline_mode = #tpu.pipeline_mode<synchronous>, transform_indices = @transform_2, window_bounds = array<i64: 2, 48, 32>}, {pipeline_mode = #tpu.pipeline_mode<synchronous>, transform_indices = @transform_3, window_bounds = array<i64: 2, 1, 32>}, {pipeline_mode = #tpu.pipeline_mode<synchronous>, transform_indices = @transform_4, window_bounds = array<i64: 2, 32, 32>}, {pipeline_mode = #tpu.pipeline_mode<synchronous>, transform_indices = @transform_5, window_bounds = array<i64: 2, 1, 32>}, {pipeline_mode = #tpu.pipeline_mode<synchronous>, transform_indices = @transform_6, window_bounds = array<i64: 2, 1, 32>}, {pipeline_mode = #tpu.pipeline_mode<synchronous>, transform_indices = @transform_7, window_bounds = array<i64: 2, 1, 32>}, {pipeline_mode = #tpu.pipeline_mode<synchronous>, transform_indices = @transform_8, window_bounds = array<i64: 2, 1, 32>}, {pipeline_mode = #tpu.pipeline_mode<synchronous>, transform_indices = @transform_9, window_bounds = array<i64: 3, 32, 32>}, {pipeline_mode = #tpu.pipeline_mode<synchronous>, transform_indices = @transform_10, window_bounds = array<i64: 3, 1, 32>}, {pipeline_mode = #tpu.pipeline_mode<synchronous>, transform_indices = @transform_11, window_bounds = array<i64: 3, 32, 32>}, {pipeline_mode = #tpu.pipeline_mode<synchronous>, transform_indices = @transform_12, window_bounds = array<i64: 3, 1, 32>}, {transform_indices = @transform_13, window_bounds = array<i64: 1, 1, 4>}]} {
    %c0 = arith.constant 0 : index
    %c0_0 = arith.constant 0 : index
    %c0_1 = arith.constant 0 : index
    %0 = vector.load %arg2[%c0, %c0_0, %c0_1] : memref<1x64x48xf32, #tpu.memory_space<vmem>>, vector<1x64x48xf32>
    %1 = vector.shape_cast %0 : vector<1x64x48xf32> to vector<64x48xf32>
    %2 = arith.truncf %1 : vector<64x48xf32> to vector<64x48xbf16>
    %c0_2 = arith.constant 0 : index
    %c0_3 = arith.constant 0 : index
    %c0_4 = arith.constant 0 : index
    %3 = vector.load %arg4[%c0_2, %c0_3, %c0_4] : memref<2x48x32xf32, #tpu.memory_space<vmem>>, vector<1x48x32xf32>
    %4 = vector.shape_cast %3 : vector<1x48x32xf32> to vector<48x32xf32>
    %5 = arith.truncf %4 : vector<48x32xf32> to vector<48x32xbf16>
    %cst = arith.constant dense<0.000000e+00> : vector<64x32xf32>
    %6 = tpu.matmul %2, %5, %cst {dimension_numbers = #tpu.dot_dimension_numbers<[1], [0], [0], [1], [0, 0, 1, 1], [], []>} : vector<64x48xbf16>, vector<48x32xbf16>, vector<64x32xf32> -> vector<64x32xf32>
    %c0_5 = arith.constant 0 : index
    %c0_6 = arith.constant 0 : index
    %c0_7 = arith.constant 0 : index
    %7 = vector.load %arg5[%c0_5, %c0_6, %c0_7] : memref<2x1x32xf32, #tpu.memory_space<vmem>>, vector<1x1x32xf32>
    %8 = vector.shape_cast %7 : vector<1x1x32xf32> to vector<1x32xf32>
    %9 = vector.broadcast %8 : vector<1x32xf32> to vector<64x32xf32>
    %10 = arith.addf %6, %9 : vector<64x32xf32>
    %cst_8 = arith.constant 0.000000e+00 : f32
    %11 = vector.broadcast %cst_8 : f32 to vector<64x32xf32>
    %12 = arith.maximumf %10, %11 : vector<64x32xf32>
    %13 = arith.truncf %12 : vector<64x32xf32> to vector<64x32xbf16>
    %c0_9 = arith.constant 0 : index
    %c0_10 = arith.constant 0 : index
    %c0_11 = arith.constant 0 : index
    %14 = vector.load %arg6[%c0_9, %c0_10, %c0_11] : memref<2x32x32xf32, #tpu.memory_space<vmem>>, vector<1x32x32xf32>
    %15 = vector.shape_cast %14 : vector<1x32x32xf32> to vector<32x32xf32>
    %16 = arith.truncf %15 : vector<32x32xf32> to vector<32x32xbf16>
    %cst_12 = arith.constant dense<0.000000e+00> : vector<64x32xf32>
    %17 = tpu.matmul %13, %16, %cst_12 {dimension_numbers = #tpu.dot_dimension_numbers<[1], [0], [0], [1], [0, 0, 1, 1], [], []>} : vector<64x32xbf16>, vector<32x32xbf16>, vector<64x32xf32> -> vector<64x32xf32>
    %c0_13 = arith.constant 0 : index
    %c0_14 = arith.constant 0 : index
    %c0_15 = arith.constant 0 : index
    %18 = vector.load %arg7[%c0_13, %c0_14, %c0_15] : memref<2x1x32xf32, #tpu.memory_space<vmem>>, vector<1x1x32xf32>
    %19 = vector.shape_cast %18 : vector<1x1x32xf32> to vector<1x32xf32>
    %20 = vector.broadcast %19 : vector<1x32xf32> to vector<64x32xf32>
    %21 = arith.addf %17, %20 : vector<64x32xf32>
    %22 = math.tanh %21 : vector<64x32xf32>
    %23 = vector.shape_cast %22 : vector<64x32xf32> to vector<4x16x32xf32>
    %c0_16 = arith.constant 0 : index
    %c0_17 = arith.constant 0 : index
    %c0_18 = arith.constant 0 : index
    %24 = vector.load %arg8[%c0_16, %c0_17, %c0_18] : memref<2x1x32xf32, #tpu.memory_space<vmem>>, vector<1x1x32xf32>
    %25 = vector.shape_cast %24 : vector<1x1x32xf32> to vector<1x32xf32>
    %26 = vector.shape_cast %25 : vector<1x32xf32> to vector<1x1x32xf32>
    %27 = vector.broadcast %26 : vector<1x1x32xf32> to vector<4x16x32xf32>
    %28 = arith.mulf %23, %27 : vector<4x16x32xf32>
    %cst_19 = arith.constant dense<0.000000e+00> : vector<4x16xf32>
    %29 = vector.multi_reduction <add>, %28, %cst_19 [2] : vector<4x16x32xf32> to vector<4x16xf32>
    %cst_20 = arith.constant dense<0xFF800000> : vector<4xf32>
    %30 = vector.multi_reduction <maximumf>, %29, %cst_20 [1] : vector<4x16xf32> to vector<4xf32>
    %31 = vector.shape_cast %30 : vector<4xf32> to vector<4x1xf32>
    %32 = vector.broadcast %31 : vector<4x1xf32> to vector<4x16xf32>
    %33 = arith.subf %29, %32 : vector<4x16xf32>
    %34 = math.exp %33 : vector<4x16xf32>
    %cst_21 = arith.constant dense<0.000000e+00> : vector<4xf32>
    %35 = vector.multi_reduction <add>, %34, %cst_21 [1] : vector<4x16xf32> to vector<4xf32>
    %36 = vector.shape_cast %35 : vector<4xf32> to vector<4x1xf32>
    %37 = tpu.reciprocal %36 {approx = true} : vector<4x1xf32> -> vector<4x1xf32>
    %38 = vector.broadcast %37 : vector<4x1xf32> to vector<4x16xf32>
    %39 = arith.mulf %34, %38 : vector<4x16xf32>
    %40 = vector.shape_cast %12 : vector<64x32xf32> to vector<4x16x32xf32>
    %41 = vector.shape_cast %39 : vector<4x16xf32> to vector<4x16x1xf32>
    %42 = vector.broadcast %41 : vector<4x16x1xf32> to vector<4x16x32xf32>
    %43 = arith.mulf %40, %42 : vector<4x16x32xf32>
    %cst_22 = arith.constant dense<0.000000e+00> : vector<4x32xf32>
    %44 = vector.multi_reduction <add>, %43, %cst_22 [1] : vector<4x16x32xf32> to vector<4x32xf32>
    %cst_23 = arith.constant dense<0.000000e+00> : vector<4xf32>
    %45 = vector.multi_reduction <add>, %44, %cst_23 [1] : vector<4x32xf32> to vector<4xf32>
    %46 = vector.shape_cast %45 : vector<4xf32> to vector<4x1xf32>
    %cst_24 = arith.constant 3.200000e+01 : f32
    %47 = vector.broadcast %cst_24 : f32 to vector<4x1xf32>
    %48 = arith.divf %46, %47 : vector<4x1xf32>
    %49 = vector.broadcast %48 : vector<4x1xf32> to vector<4x32xf32>
    %50 = arith.subf %44, %49 : vector<4x32xf32>
    %51 = arith.mulf %50, %50 : vector<4x32xf32>
    %cst_25 = arith.constant dense<0.000000e+00> : vector<4xf32>
    %52 = vector.multi_reduction <add>, %51, %cst_25 [1] : vector<4x32xf32> to vector<4xf32>
    %53 = vector.shape_cast %52 : vector<4xf32> to vector<4x1xf32>
    %cst_26 = arith.constant 3.200000e+01 : f32
    %54 = vector.broadcast %cst_26 : f32 to vector<4x1xf32>
    %55 = arith.divf %53, %54 : vector<4x1xf32>
    %56 = vector.broadcast %48 : vector<4x1xf32> to vector<4x32xf32>
    %57 = arith.subf %44, %56 : vector<4x32xf32>
    %cst_27 = arith.constant 9.99999974E-6 : f32
    %58 = vector.broadcast %cst_27 : f32 to vector<4x1xf32>
    %59 = arith.addf %55, %58 : vector<4x1xf32>
    %60 = math.rsqrt %59 : vector<4x1xf32>
    %61 = vector.broadcast %60 : vector<4x1xf32> to vector<4x32xf32>
    %62 = arith.mulf %57, %61 : vector<4x32xf32>
    %c0_28 = arith.constant 0 : index
    %c0_29 = arith.constant 0 : index
    %c0_30 = arith.constant 0 : index
    %63 = vector.load %arg9[%c0_28, %c0_29, %c0_30] : memref<2x1x32xf32, #tpu.memory_space<vmem>>, vector<1x1x32xf32>
    %64 = vector.shape_cast %63 : vector<1x1x32xf32> to vector<1x32xf32>
    %65 = vector.broadcast %64 : vector<1x32xf32> to vector<4x32xf32>
    %66 = arith.mulf %62, %65 : vector<4x32xf32>
    %c0_31 = arith.constant 0 : index
    %c0_32 = arith.constant 0 : index
    %c0_33 = arith.constant 0 : index
    %67 = vector.load %arg10[%c0_31, %c0_32, %c0_33] : memref<2x1x32xf32, #tpu.memory_space<vmem>>, vector<1x1x32xf32>
    %68 = vector.shape_cast %67 : vector<1x1x32xf32> to vector<1x32xf32>
    %69 = vector.broadcast %68 : vector<1x32xf32> to vector<4x32xf32>
    %70 = arith.addf %66, %69 : vector<4x32xf32>
    %c0_34 = arith.constant 0 : index
    %c0_35 = arith.constant 0 : index
    %c0_36 = arith.constant 0 : index
    %71 = vector.load %arg3[%c0_34, %c0_35, %c0_36] : memref<1x128x48xf32, #tpu.memory_space<vmem>>, vector<1x128x48xf32>
    %72 = vector.shape_cast %71 : vector<1x128x48xf32> to vector<128x48xf32>
    %73 = arith.truncf %72 : vector<128x48xf32> to vector<128x48xbf16>
    %c1 = arith.constant 1 : index
    %c0_37 = arith.constant 0 : index
    %c0_38 = arith.constant 0 : index
    %74 = vector.load %arg4[%c1, %c0_37, %c0_38] : memref<2x48x32xf32, #tpu.memory_space<vmem>>, vector<1x48x32xf32>
    %75 = vector.shape_cast %74 : vector<1x48x32xf32> to vector<48x32xf32>
    %76 = arith.truncf %75 : vector<48x32xf32> to vector<48x32xbf16>
    %cst_39 = arith.constant dense<0.000000e+00> : vector<128x32xf32>
    %77 = tpu.matmul %73, %76, %cst_39 {dimension_numbers = #tpu.dot_dimension_numbers<[1], [0], [0], [1], [0, 0, 1, 1], [], []>} : vector<128x48xbf16>, vector<48x32xbf16>, vector<128x32xf32> -> vector<128x32xf32>
    %c1_40 = arith.constant 1 : index
    %c0_41 = arith.constant 0 : index
    %c0_42 = arith.constant 0 : index
    %78 = vector.load %arg5[%c1_40, %c0_41, %c0_42] : memref<2x1x32xf32, #tpu.memory_space<vmem>>, vector<1x1x32xf32>
    %79 = vector.shape_cast %78 : vector<1x1x32xf32> to vector<1x32xf32>
    %80 = vector.broadcast %79 : vector<1x32xf32> to vector<128x32xf32>
    %81 = arith.addf %77, %80 : vector<128x32xf32>
    %cst_43 = arith.constant 0.000000e+00 : f32
    %82 = vector.broadcast %cst_43 : f32 to vector<128x32xf32>
    %83 = arith.maximumf %81, %82 : vector<128x32xf32>
    %84 = arith.truncf %83 : vector<128x32xf32> to vector<128x32xbf16>
    %c1_44 = arith.constant 1 : index
    %c0_45 = arith.constant 0 : index
    %c0_46 = arith.constant 0 : index
    %85 = vector.load %arg6[%c1_44, %c0_45, %c0_46] : memref<2x32x32xf32, #tpu.memory_space<vmem>>, vector<1x32x32xf32>
    %86 = vector.shape_cast %85 : vector<1x32x32xf32> to vector<32x32xf32>
    %87 = arith.truncf %86 : vector<32x32xf32> to vector<32x32xbf16>
    %cst_47 = arith.constant dense<0.000000e+00> : vector<128x32xf32>
    %88 = tpu.matmul %84, %87, %cst_47 {dimension_numbers = #tpu.dot_dimension_numbers<[1], [0], [0], [1], [0, 0, 1, 1], [], []>} : vector<128x32xbf16>, vector<32x32xbf16>, vector<128x32xf32> -> vector<128x32xf32>
    %c1_48 = arith.constant 1 : index
    %c0_49 = arith.constant 0 : index
    %c0_50 = arith.constant 0 : index
    %89 = vector.load %arg7[%c1_48, %c0_49, %c0_50] : memref<2x1x32xf32, #tpu.memory_space<vmem>>, vector<1x1x32xf32>
    %90 = vector.shape_cast %89 : vector<1x1x32xf32> to vector<1x32xf32>
    %91 = vector.broadcast %90 : vector<1x32xf32> to vector<128x32xf32>
    %92 = arith.addf %88, %91 : vector<128x32xf32>
    %93 = math.tanh %92 : vector<128x32xf32>
    %94 = vector.shape_cast %93 : vector<128x32xf32> to vector<8x16x32xf32>
    %c1_51 = arith.constant 1 : index
    %c0_52 = arith.constant 0 : index
    %c0_53 = arith.constant 0 : index
    %95 = vector.load %arg8[%c1_51, %c0_52, %c0_53] : memref<2x1x32xf32, #tpu.memory_space<vmem>>, vector<1x1x32xf32>
    %96 = vector.shape_cast %95 : vector<1x1x32xf32> to vector<1x32xf32>
    %97 = vector.shape_cast %96 : vector<1x32xf32> to vector<1x1x32xf32>
    %98 = vector.broadcast %97 : vector<1x1x32xf32> to vector<8x16x32xf32>
    %99 = arith.mulf %94, %98 : vector<8x16x32xf32>
    %cst_54 = arith.constant dense<0.000000e+00> : vector<8x16xf32>
    %100 = vector.multi_reduction <add>, %99, %cst_54 [2] : vector<8x16x32xf32> to vector<8x16xf32>
    %cst_55 = arith.constant dense<0xFF800000> : vector<8xf32>
    %101 = vector.multi_reduction <maximumf>, %100, %cst_55 [1] : vector<8x16xf32> to vector<8xf32>
    %102 = vector.shape_cast %101 : vector<8xf32> to vector<8x1xf32>
    %103 = vector.broadcast %102 : vector<8x1xf32> to vector<8x16xf32>
    %104 = arith.subf %100, %103 : vector<8x16xf32>
    %105 = math.exp %104 : vector<8x16xf32>
    %cst_56 = arith.constant dense<0.000000e+00> : vector<8xf32>
    %106 = vector.multi_reduction <add>, %105, %cst_56 [1] : vector<8x16xf32> to vector<8xf32>
    %107 = vector.shape_cast %106 : vector<8xf32> to vector<8x1xf32>
    %108 = tpu.reciprocal %107 {approx = true} : vector<8x1xf32> -> vector<8x1xf32>
    %109 = vector.broadcast %108 : vector<8x1xf32> to vector<8x16xf32>
    %110 = arith.mulf %105, %109 : vector<8x16xf32>
    %111 = vector.shape_cast %83 : vector<128x32xf32> to vector<8x16x32xf32>
    %112 = vector.shape_cast %110 : vector<8x16xf32> to vector<8x16x1xf32>
    %113 = vector.broadcast %112 : vector<8x16x1xf32> to vector<8x16x32xf32>
    %114 = arith.mulf %111, %113 : vector<8x16x32xf32>
    %cst_57 = arith.constant dense<0.000000e+00> : vector<8x32xf32>
    %115 = vector.multi_reduction <add>, %114, %cst_57 [1] : vector<8x16x32xf32> to vector<8x32xf32>
    %cst_58 = arith.constant dense<0.000000e+00> : vector<8xf32>
    %116 = vector.multi_reduction <add>, %115, %cst_58 [1] : vector<8x32xf32> to vector<8xf32>
    %117 = vector.shape_cast %116 : vector<8xf32> to vector<8x1xf32>
    %cst_59 = arith.constant 3.200000e+01 : f32
    %118 = vector.broadcast %cst_59 : f32 to vector<8x1xf32>
    %119 = arith.divf %117, %118 : vector<8x1xf32>
    %120 = vector.broadcast %119 : vector<8x1xf32> to vector<8x32xf32>
    %121 = arith.subf %115, %120 : vector<8x32xf32>
    %122 = arith.mulf %121, %121 : vector<8x32xf32>
    %cst_60 = arith.constant dense<0.000000e+00> : vector<8xf32>
    %123 = vector.multi_reduction <add>, %122, %cst_60 [1] : vector<8x32xf32> to vector<8xf32>
    %124 = vector.shape_cast %123 : vector<8xf32> to vector<8x1xf32>
    %cst_61 = arith.constant 3.200000e+01 : f32
    %125 = vector.broadcast %cst_61 : f32 to vector<8x1xf32>
    %126 = arith.divf %124, %125 : vector<8x1xf32>
    %127 = vector.broadcast %119 : vector<8x1xf32> to vector<8x32xf32>
    %128 = arith.subf %115, %127 : vector<8x32xf32>
    %cst_62 = arith.constant 9.99999974E-6 : f32
    %129 = vector.broadcast %cst_62 : f32 to vector<8x1xf32>
    %130 = arith.addf %126, %129 : vector<8x1xf32>
    %131 = math.rsqrt %130 : vector<8x1xf32>
    %132 = vector.broadcast %131 : vector<8x1xf32> to vector<8x32xf32>
    %133 = arith.mulf %128, %132 : vector<8x32xf32>
    %c1_63 = arith.constant 1 : index
    %c0_64 = arith.constant 0 : index
    %c0_65 = arith.constant 0 : index
    %134 = vector.load %arg9[%c1_63, %c0_64, %c0_65] : memref<2x1x32xf32, #tpu.memory_space<vmem>>, vector<1x1x32xf32>
    %135 = vector.shape_cast %134 : vector<1x1x32xf32> to vector<1x32xf32>
    %136 = vector.broadcast %135 : vector<1x32xf32> to vector<8x32xf32>
    %137 = arith.mulf %133, %136 : vector<8x32xf32>
    %c1_66 = arith.constant 1 : index
    %c0_67 = arith.constant 0 : index
    %c0_68 = arith.constant 0 : index
    %138 = vector.load %arg10[%c1_66, %c0_67, %c0_68] : memref<2x1x32xf32, #tpu.memory_space<vmem>>, vector<1x1x32xf32>
    %139 = vector.shape_cast %138 : vector<1x1x32xf32> to vector<1x32xf32>
    %140 = vector.broadcast %139 : vector<1x32xf32> to vector<8x32xf32>
    %141 = arith.addf %137, %140 : vector<8x32xf32>
    %142 = arith.truncf %141 : vector<8x32xf32> to vector<8x32xbf16>
    %c0_69 = arith.constant 0 : index
    %c0_70 = arith.constant 0 : index
    %c0_71 = arith.constant 0 : index
    %143 = vector.load %arg11[%c0_69, %c0_70, %c0_71] : memref<3x32x32xf32, #tpu.memory_space<vmem>>, vector<1x32x32xf32>
    %144 = vector.shape_cast %143 : vector<1x32x32xf32> to vector<32x32xf32>
    %145 = arith.truncf %144 : vector<32x32xf32> to vector<32x32xbf16>
    %cst_72 = arith.constant dense<0.000000e+00> : vector<8x32xf32>
    %146 = tpu.matmul %142, %145, %cst_72 {dimension_numbers = #tpu.dot_dimension_numbers<[1], [0], [0], [1], [0, 0, 1, 1], [], []>} : vector<8x32xbf16>, vector<32x32xbf16>, vector<8x32xf32> -> vector<8x32xf32>
    %c0_73 = arith.constant 0 : index
    %c0_74 = arith.constant 0 : index
    %c0_75 = arith.constant 0 : index
    %147 = vector.load %arg12[%c0_73, %c0_74, %c0_75] : memref<3x1x32xf32, #tpu.memory_space<vmem>>, vector<1x1x32xf32>
    %148 = vector.shape_cast %147 : vector<1x1x32xf32> to vector<1x32xf32>
    %149 = vector.broadcast %148 : vector<1x32xf32> to vector<8x32xf32>
    %150 = arith.addf %146, %149 : vector<8x32xf32>
    %c1_76 = arith.constant 1 : index
    %c0_77 = arith.constant 0 : index
    %c0_78 = arith.constant 0 : index
    %151 = vector.load %arg11[%c1_76, %c0_77, %c0_78] : memref<3x32x32xf32, #tpu.memory_space<vmem>>, vector<1x32x32xf32>
    %152 = vector.shape_cast %151 : vector<1x32x32xf32> to vector<32x32xf32>
    %153 = arith.truncf %152 : vector<32x32xf32> to vector<32x32xbf16>
    %cst_79 = arith.constant dense<0.000000e+00> : vector<8x32xf32>
    %154 = tpu.matmul %142, %153, %cst_79 {dimension_numbers = #tpu.dot_dimension_numbers<[1], [0], [0], [1], [0, 0, 1, 1], [], []>} : vector<8x32xbf16>, vector<32x32xbf16>, vector<8x32xf32> -> vector<8x32xf32>
    %c1_80 = arith.constant 1 : index
    %c0_81 = arith.constant 0 : index
    %c0_82 = arith.constant 0 : index
    %155 = vector.load %arg12[%c1_80, %c0_81, %c0_82] : memref<3x1x32xf32, #tpu.memory_space<vmem>>, vector<1x1x32xf32>
    %156 = vector.shape_cast %155 : vector<1x1x32xf32> to vector<1x32xf32>
    %157 = vector.broadcast %156 : vector<1x32xf32> to vector<8x32xf32>
    %158 = arith.addf %154, %157 : vector<8x32xf32>
    %c2 = arith.constant 2 : index
    %c0_83 = arith.constant 0 : index
    %c0_84 = arith.constant 0 : index
    %159 = vector.load %arg11[%c2, %c0_83, %c0_84] : memref<3x32x32xf32, #tpu.memory_space<vmem>>, vector<1x32x32xf32>
    %160 = vector.shape_cast %159 : vector<1x32x32xf32> to vector<32x32xf32>
    %161 = arith.truncf %160 : vector<32x32xf32> to vector<32x32xbf16>
    %cst_85 = arith.constant dense<0.000000e+00> : vector<8x32xf32>
    %162 = tpu.matmul %142, %161, %cst_85 {dimension_numbers = #tpu.dot_dimension_numbers<[1], [0], [0], [1], [0, 0, 1, 1], [], []>} : vector<8x32xbf16>, vector<32x32xbf16>, vector<8x32xf32> -> vector<8x32xf32>
    %c2_86 = arith.constant 2 : index
    %c0_87 = arith.constant 0 : index
    %c0_88 = arith.constant 0 : index
    %163 = vector.load %arg12[%c2_86, %c0_87, %c0_88] : memref<3x1x32xf32, #tpu.memory_space<vmem>>, vector<1x1x32xf32>
    %164 = vector.shape_cast %163 : vector<1x1x32xf32> to vector<1x32xf32>
    %165 = vector.broadcast %164 : vector<1x32xf32> to vector<8x32xf32>
    %166 = arith.addf %162, %165 : vector<8x32xf32>
    %c0_89 = arith.constant 0 : index
    %c0_90 = arith.constant 0 : index
    %c0_91 = arith.constant 0 : index
    %167 = vector.load %arg13[%c0_89, %c0_90, %c0_91] : memref<3x32x32xf32, #tpu.memory_space<vmem>>, vector<1x32x32xf32>
    %168 = vector.shape_cast %167 : vector<1x32x32xf32> to vector<32x32xf32>
    %c1_92 = arith.constant 1 : index
    %c0_93 = arith.constant 0 : index
    %c0_94 = arith.constant 0 : index
    %169 = vector.load %arg13[%c1_92, %c0_93, %c0_94] : memref<3x32x32xf32, #tpu.memory_space<vmem>>, vector<1x32x32xf32>
    %170 = vector.shape_cast %169 : vector<1x32x32xf32> to vector<32x32xf32>
    %c2_95 = arith.constant 2 : index
    %c0_96 = arith.constant 0 : index
    %c0_97 = arith.constant 0 : index
    %171 = vector.load %arg13[%c2_95, %c0_96, %c0_97] : memref<3x32x32xf32, #tpu.memory_space<vmem>>, vector<1x32x32xf32>
    %172 = vector.shape_cast %171 : vector<1x32x32xf32> to vector<32x32xf32>
    %c0_98 = arith.constant 0 : index
    %c0_99 = arith.constant 0 : index
    %c0_100 = arith.constant 0 : index
    %173 = vector.load %arg14[%c0_98, %c0_99, %c0_100] : memref<3x1x32xf32, #tpu.memory_space<vmem>>, vector<1x1x32xf32>
    %174 = vector.shape_cast %173 : vector<1x1x32xf32> to vector<1x32xf32>
    %c1_101 = arith.constant 1 : index
    %c0_102 = arith.constant 0 : index
    %c0_103 = arith.constant 0 : index
    %175 = vector.load %arg14[%c1_101, %c0_102, %c0_103] : memref<3x1x32xf32, #tpu.memory_space<vmem>>, vector<1x1x32xf32>
    %176 = vector.shape_cast %175 : vector<1x1x32xf32> to vector<1x32xf32>
    %c2_104 = arith.constant 2 : index
    %c0_105 = arith.constant 0 : index
    %c0_106 = arith.constant 0 : index
    %177 = vector.load %arg14[%c2_104, %c0_105, %c0_106] : memref<3x1x32xf32, #tpu.memory_space<vmem>>, vector<1x1x32xf32>
    %178 = vector.shape_cast %177 : vector<1x1x32xf32> to vector<1x32xf32>
    %179 = arith.index_cast %arg0 : i32 to index
    %180 = memref.load %arg1[%179] : memref<2xi32, #tpu.memory_space<smem>>
    %181 = tpu.iota {dimensions = array<i32: 0>} : vector<8x1xi32>
    %182 = vector.broadcast %180 : i32 to vector<8x1xi32>
    %183 = arith.cmpi slt, %181, %182 : vector<8x1xi32>
    %cst_107 = arith.constant 0.000000e+00 : f32
    %184 = vector.broadcast %cst_107 : f32 to vector<1x32xf32>
    %185 = vector.extract_strided_slice %150 {offsets = [0, 0], sizes = [1, 32], strides = [1, 1]} : vector<8x32xf32> to vector<1x32xf32>
    %cst_108 = arith.constant dense<0.000000e+00> : vector<1x32xf32>
    %186 = tpu.matmul %184, %168, %cst_108 {dimension_numbers = #tpu.dot_dimension_numbers<[1], [0], [0], [1], [0, 0, 1, 1], [], []>} : vector<1x32xf32>, vector<32x32xf32>, vector<1x32xf32> -> vector<1x32xf32>
    %187 = arith.addf %185, %186 : vector<1x32xf32>
    %188 = arith.addf %187, %174 : vector<1x32xf32>
    %189 = arith.negf %188 : vector<1x32xf32>
    %190 = math.exp %189 : vector<1x32xf32>
    %cst_109 = arith.constant 1.000000e+00 : f32
    %191 = vector.broadcast %cst_109 : f32 to vector<1x32xf32>
    %192 = arith.addf %191, %190 : vector<1x32xf32>
    %193 = arith.divf %191, %192 : vector<1x32xf32>
    %194 = vector.extract_strided_slice %158 {offsets = [0, 0], sizes = [1, 32], strides = [1, 1]} : vector<8x32xf32> to vector<1x32xf32>
    %cst_110 = arith.constant dense<0.000000e+00> : vector<1x32xf32>
    %195 = tpu.matmul %184, %170, %cst_110 {dimension_numbers = #tpu.dot_dimension_numbers<[1], [0], [0], [1], [0, 0, 1, 1], [], []>} : vector<1x32xf32>, vector<32x32xf32>, vector<1x32xf32> -> vector<1x32xf32>
    %196 = arith.addf %194, %195 : vector<1x32xf32>
    %197 = arith.addf %196, %176 : vector<1x32xf32>
    %198 = arith.negf %197 : vector<1x32xf32>
    %199 = math.exp %198 : vector<1x32xf32>
    %cst_111 = arith.constant 1.000000e+00 : f32
    %200 = vector.broadcast %cst_111 : f32 to vector<1x32xf32>
    %201 = arith.addf %200, %199 : vector<1x32xf32>
    %202 = arith.divf %200, %201 : vector<1x32xf32>
    %203 = vector.extract_strided_slice %166 {offsets = [0, 0], sizes = [1, 32], strides = [1, 1]} : vector<8x32xf32> to vector<1x32xf32>
    %cst_112 = arith.constant dense<0.000000e+00> : vector<1x32xf32>
    %204 = tpu.matmul %184, %172, %cst_112 {dimension_numbers = #tpu.dot_dimension_numbers<[1], [0], [0], [1], [0, 0, 1, 1], [], []>} : vector<1x32xf32>, vector<32x32xf32>, vector<1x32xf32> -> vector<1x32xf32>
    %205 = arith.addf %204, %178 : vector<1x32xf32>
    %206 = arith.mulf %193, %205 : vector<1x32xf32>
    %207 = arith.addf %203, %206 : vector<1x32xf32>
    %208 = math.tanh %207 : vector<1x32xf32>
    %cst_113 = arith.constant 1.000000e+00 : f32
    %209 = vector.broadcast %cst_113 : f32 to vector<1x32xf32>
    %210 = arith.subf %209, %202 : vector<1x32xf32>
    %211 = arith.mulf %210, %208 : vector<1x32xf32>
    %212 = arith.mulf %202, %184 : vector<1x32xf32>
    %213 = arith.addf %211, %212 : vector<1x32xf32>
    %214 = vector.extract_strided_slice %183 {offsets = [0, 0], sizes = [1, 1], strides = [1, 1]} : vector<8x1xi1> to vector<1x1xi1>
    %215 = vector.shape_cast %214 : vector<1x1xi1> to vector<1x1xi1>
    %216 = vector.broadcast %215 : vector<1x1xi1> to vector<1x32xi1>
    %217 = arith.select %216, %213, %184 : vector<1x32xi1>, vector<1x32xf32>
    %218 = vector.extract_strided_slice %150 {offsets = [1, 0], sizes = [1, 32], strides = [1, 1]} : vector<8x32xf32> to vector<1x32xf32>
    %cst_114 = arith.constant dense<0.000000e+00> : vector<1x32xf32>
    %219 = tpu.matmul %217, %168, %cst_114 {dimension_numbers = #tpu.dot_dimension_numbers<[1], [0], [0], [1], [0, 0, 1, 1], [], []>} : vector<1x32xf32>, vector<32x32xf32>, vector<1x32xf32> -> vector<1x32xf32>
    %220 = arith.addf %218, %219 : vector<1x32xf32>
    %221 = arith.addf %220, %174 : vector<1x32xf32>
    %222 = arith.negf %221 : vector<1x32xf32>
    %223 = math.exp %222 : vector<1x32xf32>
    %cst_115 = arith.constant 1.000000e+00 : f32
    %224 = vector.broadcast %cst_115 : f32 to vector<1x32xf32>
    %225 = arith.addf %224, %223 : vector<1x32xf32>
    %226 = arith.divf %224, %225 : vector<1x32xf32>
    %227 = vector.extract_strided_slice %158 {offsets = [1, 0], sizes = [1, 32], strides = [1, 1]} : vector<8x32xf32> to vector<1x32xf32>
    %cst_116 = arith.constant dense<0.000000e+00> : vector<1x32xf32>
    %228 = tpu.matmul %217, %170, %cst_116 {dimension_numbers = #tpu.dot_dimension_numbers<[1], [0], [0], [1], [0, 0, 1, 1], [], []>} : vector<1x32xf32>, vector<32x32xf32>, vector<1x32xf32> -> vector<1x32xf32>
    %229 = arith.addf %227, %228 : vector<1x32xf32>
    %230 = arith.addf %229, %176 : vector<1x32xf32>
    %231 = arith.negf %230 : vector<1x32xf32>
    %232 = math.exp %231 : vector<1x32xf32>
    %cst_117 = arith.constant 1.000000e+00 : f32
    %233 = vector.broadcast %cst_117 : f32 to vector<1x32xf32>
    %234 = arith.addf %233, %232 : vector<1x32xf32>
    %235 = arith.divf %233, %234 : vector<1x32xf32>
    %236 = vector.extract_strided_slice %166 {offsets = [1, 0], sizes = [1, 32], strides = [1, 1]} : vector<8x32xf32> to vector<1x32xf32>
    %cst_118 = arith.constant dense<0.000000e+00> : vector<1x32xf32>
    %237 = tpu.matmul %217, %172, %cst_118 {dimension_numbers = #tpu.dot_dimension_numbers<[1], [0], [0], [1], [0, 0, 1, 1], [], []>} : vector<1x32xf32>, vector<32x32xf32>, vector<1x32xf32> -> vector<1x32xf32>
    %238 = arith.addf %237, %178 : vector<1x32xf32>
    %239 = arith.mulf %226, %238 : vector<1x32xf32>
    %240 = arith.addf %236, %239 : vector<1x32xf32>
    %241 = math.tanh %240 : vector<1x32xf32>
    %cst_119 = arith.constant 1.000000e+00 : f32
    %242 = vector.broadcast %cst_119 : f32 to vector<1x32xf32>
    %243 = arith.subf %242, %235 : vector<1x32xf32>
    %244 = arith.mulf %243, %241 : vector<1x32xf32>
    %245 = arith.mulf %235, %217 : vector<1x32xf32>
    %246 = arith.addf %244, %245 : vector<1x32xf32>
    %247 = vector.extract_strided_slice %183 {offsets = [1, 0], sizes = [1, 1], strides = [1, 1]} : vector<8x1xi1> to vector<1x1xi1>
    %248 = vector.shape_cast %247 : vector<1x1xi1> to vector<1x1xi1>
    %249 = vector.broadcast %248 : vector<1x1xi1> to vector<1x32xi1>
    %250 = arith.select %249, %246, %217 : vector<1x32xi1>, vector<1x32xf32>
    %251 = vector.extract_strided_slice %150 {offsets = [2, 0], sizes = [1, 32], strides = [1, 1]} : vector<8x32xf32> to vector<1x32xf32>
    %cst_120 = arith.constant dense<0.000000e+00> : vector<1x32xf32>
    %252 = tpu.matmul %250, %168, %cst_120 {dimension_numbers = #tpu.dot_dimension_numbers<[1], [0], [0], [1], [0, 0, 1, 1], [], []>} : vector<1x32xf32>, vector<32x32xf32>, vector<1x32xf32> -> vector<1x32xf32>
    %253 = arith.addf %251, %252 : vector<1x32xf32>
    %254 = arith.addf %253, %174 : vector<1x32xf32>
    %255 = arith.negf %254 : vector<1x32xf32>
    %256 = math.exp %255 : vector<1x32xf32>
    %cst_121 = arith.constant 1.000000e+00 : f32
    %257 = vector.broadcast %cst_121 : f32 to vector<1x32xf32>
    %258 = arith.addf %257, %256 : vector<1x32xf32>
    %259 = arith.divf %257, %258 : vector<1x32xf32>
    %260 = vector.extract_strided_slice %158 {offsets = [2, 0], sizes = [1, 32], strides = [1, 1]} : vector<8x32xf32> to vector<1x32xf32>
    %cst_122 = arith.constant dense<0.000000e+00> : vector<1x32xf32>
    %261 = tpu.matmul %250, %170, %cst_122 {dimension_numbers = #tpu.dot_dimension_numbers<[1], [0], [0], [1], [0, 0, 1, 1], [], []>} : vector<1x32xf32>, vector<32x32xf32>, vector<1x32xf32> -> vector<1x32xf32>
    %262 = arith.addf %260, %261 : vector<1x32xf32>
    %263 = arith.addf %262, %176 : vector<1x32xf32>
    %264 = arith.negf %263 : vector<1x32xf32>
    %265 = math.exp %264 : vector<1x32xf32>
    %cst_123 = arith.constant 1.000000e+00 : f32
    %266 = vector.broadcast %cst_123 : f32 to vector<1x32xf32>
    %267 = arith.addf %266, %265 : vector<1x32xf32>
    %268 = arith.divf %266, %267 : vector<1x32xf32>
    %269 = vector.extract_strided_slice %166 {offsets = [2, 0], sizes = [1, 32], strides = [1, 1]} : vector<8x32xf32> to vector<1x32xf32>
    %cst_124 = arith.constant dense<0.000000e+00> : vector<1x32xf32>
    %270 = tpu.matmul %250, %172, %cst_124 {dimension_numbers = #tpu.dot_dimension_numbers<[1], [0], [0], [1], [0, 0, 1, 1], [], []>} : vector<1x32xf32>, vector<32x32xf32>, vector<1x32xf32> -> vector<1x32xf32>
    %271 = arith.addf %270, %178 : vector<1x32xf32>
    %272 = arith.mulf %259, %271 : vector<1x32xf32>
    %273 = arith.addf %269, %272 : vector<1x32xf32>
    %274 = math.tanh %273 : vector<1x32xf32>
    %cst_125 = arith.constant 1.000000e+00 : f32
    %275 = vector.broadcast %cst_125 : f32 to vector<1x32xf32>
    %276 = arith.subf %275, %268 : vector<1x32xf32>
    %277 = arith.mulf %276, %274 : vector<1x32xf32>
    %278 = arith.mulf %268, %250 : vector<1x32xf32>
    %279 = arith.addf %277, %278 : vector<1x32xf32>
    %280 = vector.extract_strided_slice %183 {offsets = [2, 0], sizes = [1, 1], strides = [1, 1]} : vector<8x1xi1> to vector<1x1xi1>
    %281 = vector.shape_cast %280 : vector<1x1xi1> to vector<1x1xi1>
    %282 = vector.broadcast %281 : vector<1x1xi1> to vector<1x32xi1>
    %283 = arith.select %282, %279, %250 : vector<1x32xi1>, vector<1x32xf32>
    %284 = vector.extract_strided_slice %150 {offsets = [3, 0], sizes = [1, 32], strides = [1, 1]} : vector<8x32xf32> to vector<1x32xf32>
    %cst_126 = arith.constant dense<0.000000e+00> : vector<1x32xf32>
    %285 = tpu.matmul %283, %168, %cst_126 {dimension_numbers = #tpu.dot_dimension_numbers<[1], [0], [0], [1], [0, 0, 1, 1], [], []>} : vector<1x32xf32>, vector<32x32xf32>, vector<1x32xf32> -> vector<1x32xf32>
    %286 = arith.addf %284, %285 : vector<1x32xf32>
    %287 = arith.addf %286, %174 : vector<1x32xf32>
    %288 = arith.negf %287 : vector<1x32xf32>
    %289 = math.exp %288 : vector<1x32xf32>
    %cst_127 = arith.constant 1.000000e+00 : f32
    %290 = vector.broadcast %cst_127 : f32 to vector<1x32xf32>
    %291 = arith.addf %290, %289 : vector<1x32xf32>
    %292 = arith.divf %290, %291 : vector<1x32xf32>
    %293 = vector.extract_strided_slice %158 {offsets = [3, 0], sizes = [1, 32], strides = [1, 1]} : vector<8x32xf32> to vector<1x32xf32>
    %cst_128 = arith.constant dense<0.000000e+00> : vector<1x32xf32>
    %294 = tpu.matmul %283, %170, %cst_128 {dimension_numbers = #tpu.dot_dimension_numbers<[1], [0], [0], [1], [0, 0, 1, 1], [], []>} : vector<1x32xf32>, vector<32x32xf32>, vector<1x32xf32> -> vector<1x32xf32>
    %295 = arith.addf %293, %294 : vector<1x32xf32>
    %296 = arith.addf %295, %176 : vector<1x32xf32>
    %297 = arith.negf %296 : vector<1x32xf32>
    %298 = math.exp %297 : vector<1x32xf32>
    %cst_129 = arith.constant 1.000000e+00 : f32
    %299 = vector.broadcast %cst_129 : f32 to vector<1x32xf32>
    %300 = arith.addf %299, %298 : vector<1x32xf32>
    %301 = arith.divf %299, %300 : vector<1x32xf32>
    %302 = vector.extract_strided_slice %166 {offsets = [3, 0], sizes = [1, 32], strides = [1, 1]} : vector<8x32xf32> to vector<1x32xf32>
    %cst_130 = arith.constant dense<0.000000e+00> : vector<1x32xf32>
    %303 = tpu.matmul %283, %172, %cst_130 {dimension_numbers = #tpu.dot_dimension_numbers<[1], [0], [0], [1], [0, 0, 1, 1], [], []>} : vector<1x32xf32>, vector<32x32xf32>, vector<1x32xf32> -> vector<1x32xf32>
    %304 = arith.addf %303, %178 : vector<1x32xf32>
    %305 = arith.mulf %292, %304 : vector<1x32xf32>
    %306 = arith.addf %302, %305 : vector<1x32xf32>
    %307 = math.tanh %306 : vector<1x32xf32>
    %cst_131 = arith.constant 1.000000e+00 : f32
    %308 = vector.broadcast %cst_131 : f32 to vector<1x32xf32>
    %309 = arith.subf %308, %301 : vector<1x32xf32>
    %310 = arith.mulf %309, %307 : vector<1x32xf32>
    %311 = arith.mulf %301, %283 : vector<1x32xf32>
    %312 = arith.addf %310, %311 : vector<1x32xf32>
    %313 = vector.extract_strided_slice %183 {offsets = [3, 0], sizes = [1, 1], strides = [1, 1]} : vector<8x1xi1> to vector<1x1xi1>
    %314 = vector.shape_cast %313 : vector<1x1xi1> to vector<1x1xi1>
    %315 = vector.broadcast %314 : vector<1x1xi1> to vector<1x32xi1>
    %316 = arith.select %315, %312, %283 : vector<1x32xi1>, vector<1x32xf32>
    %317 = vector.extract_strided_slice %150 {offsets = [4, 0], sizes = [1, 32], strides = [1, 1]} : vector<8x32xf32> to vector<1x32xf32>
    %cst_132 = arith.constant dense<0.000000e+00> : vector<1x32xf32>
    %318 = tpu.matmul %316, %168, %cst_132 {dimension_numbers = #tpu.dot_dimension_numbers<[1], [0], [0], [1], [0, 0, 1, 1], [], []>} : vector<1x32xf32>, vector<32x32xf32>, vector<1x32xf32> -> vector<1x32xf32>
    %319 = arith.addf %317, %318 : vector<1x32xf32>
    %320 = arith.addf %319, %174 : vector<1x32xf32>
    %321 = arith.negf %320 : vector<1x32xf32>
    %322 = math.exp %321 : vector<1x32xf32>
    %cst_133 = arith.constant 1.000000e+00 : f32
    %323 = vector.broadcast %cst_133 : f32 to vector<1x32xf32>
    %324 = arith.addf %323, %322 : vector<1x32xf32>
    %325 = arith.divf %323, %324 : vector<1x32xf32>
    %326 = vector.extract_strided_slice %158 {offsets = [4, 0], sizes = [1, 32], strides = [1, 1]} : vector<8x32xf32> to vector<1x32xf32>
    %cst_134 = arith.constant dense<0.000000e+00> : vector<1x32xf32>
    %327 = tpu.matmul %316, %170, %cst_134 {dimension_numbers = #tpu.dot_dimension_numbers<[1], [0], [0], [1], [0, 0, 1, 1], [], []>} : vector<1x32xf32>, vector<32x32xf32>, vector<1x32xf32> -> vector<1x32xf32>
    %328 = arith.addf %326, %327 : vector<1x32xf32>
    %329 = arith.addf %328, %176 : vector<1x32xf32>
    %330 = arith.negf %329 : vector<1x32xf32>
    %331 = math.exp %330 : vector<1x32xf32>
    %cst_135 = arith.constant 1.000000e+00 : f32
    %332 = vector.broadcast %cst_135 : f32 to vector<1x32xf32>
    %333 = arith.addf %332, %331 : vector<1x32xf32>
    %334 = arith.divf %332, %333 : vector<1x32xf32>
    %335 = vector.extract_strided_slice %166 {offsets = [4, 0], sizes = [1, 32], strides = [1, 1]} : vector<8x32xf32> to vector<1x32xf32>
    %cst_136 = arith.constant dense<0.000000e+00> : vector<1x32xf32>
    %336 = tpu.matmul %316, %172, %cst_136 {dimension_numbers = #tpu.dot_dimension_numbers<[1], [0], [0], [1], [0, 0, 1, 1], [], []>} : vector<1x32xf32>, vector<32x32xf32>, vector<1x32xf32> -> vector<1x32xf32>
    %337 = arith.addf %336, %178 : vector<1x32xf32>
    %338 = arith.mulf %325, %337 : vector<1x32xf32>
    %339 = arith.addf %335, %338 : vector<1x32xf32>
    %340 = math.tanh %339 : vector<1x32xf32>
    %cst_137 = arith.constant 1.000000e+00 : f32
    %341 = vector.broadcast %cst_137 : f32 to vector<1x32xf32>
    %342 = arith.subf %341, %334 : vector<1x32xf32>
    %343 = arith.mulf %342, %340 : vector<1x32xf32>
    %344 = arith.mulf %334, %316 : vector<1x32xf32>
    %345 = arith.addf %343, %344 : vector<1x32xf32>
    %346 = vector.extract_strided_slice %183 {offsets = [4, 0], sizes = [1, 1], strides = [1, 1]} : vector<8x1xi1> to vector<1x1xi1>
    %347 = vector.shape_cast %346 : vector<1x1xi1> to vector<1x1xi1>
    %348 = vector.broadcast %347 : vector<1x1xi1> to vector<1x32xi1>
    %349 = arith.select %348, %345, %316 : vector<1x32xi1>, vector<1x32xf32>
    %350 = vector.extract_strided_slice %150 {offsets = [5, 0], sizes = [1, 32], strides = [1, 1]} : vector<8x32xf32> to vector<1x32xf32>
    %cst_138 = arith.constant dense<0.000000e+00> : vector<1x32xf32>
    %351 = tpu.matmul %349, %168, %cst_138 {dimension_numbers = #tpu.dot_dimension_numbers<[1], [0], [0], [1], [0, 0, 1, 1], [], []>} : vector<1x32xf32>, vector<32x32xf32>, vector<1x32xf32> -> vector<1x32xf32>
    %352 = arith.addf %350, %351 : vector<1x32xf32>
    %353 = arith.addf %352, %174 : vector<1x32xf32>
    %354 = arith.negf %353 : vector<1x32xf32>
    %355 = math.exp %354 : vector<1x32xf32>
    %cst_139 = arith.constant 1.000000e+00 : f32
    %356 = vector.broadcast %cst_139 : f32 to vector<1x32xf32>
    %357 = arith.addf %356, %355 : vector<1x32xf32>
    %358 = arith.divf %356, %357 : vector<1x32xf32>
    %359 = vector.extract_strided_slice %158 {offsets = [5, 0], sizes = [1, 32], strides = [1, 1]} : vector<8x32xf32> to vector<1x32xf32>
    %cst_140 = arith.constant dense<0.000000e+00> : vector<1x32xf32>
    %360 = tpu.matmul %349, %170, %cst_140 {dimension_numbers = #tpu.dot_dimension_numbers<[1], [0], [0], [1], [0, 0, 1, 1], [], []>} : vector<1x32xf32>, vector<32x32xf32>, vector<1x32xf32> -> vector<1x32xf32>
    %361 = arith.addf %359, %360 : vector<1x32xf32>
    %362 = arith.addf %361, %176 : vector<1x32xf32>
    %363 = arith.negf %362 : vector<1x32xf32>
    %364 = math.exp %363 : vector<1x32xf32>
    %cst_141 = arith.constant 1.000000e+00 : f32
    %365 = vector.broadcast %cst_141 : f32 to vector<1x32xf32>
    %366 = arith.addf %365, %364 : vector<1x32xf32>
    %367 = arith.divf %365, %366 : vector<1x32xf32>
    %368 = vector.extract_strided_slice %166 {offsets = [5, 0], sizes = [1, 32], strides = [1, 1]} : vector<8x32xf32> to vector<1x32xf32>
    %cst_142 = arith.constant dense<0.000000e+00> : vector<1x32xf32>
    %369 = tpu.matmul %349, %172, %cst_142 {dimension_numbers = #tpu.dot_dimension_numbers<[1], [0], [0], [1], [0, 0, 1, 1], [], []>} : vector<1x32xf32>, vector<32x32xf32>, vector<1x32xf32> -> vector<1x32xf32>
    %370 = arith.addf %369, %178 : vector<1x32xf32>
    %371 = arith.mulf %358, %370 : vector<1x32xf32>
    %372 = arith.addf %368, %371 : vector<1x32xf32>
    %373 = math.tanh %372 : vector<1x32xf32>
    %cst_143 = arith.constant 1.000000e+00 : f32
    %374 = vector.broadcast %cst_143 : f32 to vector<1x32xf32>
    %375 = arith.subf %374, %367 : vector<1x32xf32>
    %376 = arith.mulf %375, %373 : vector<1x32xf32>
    %377 = arith.mulf %367, %349 : vector<1x32xf32>
    %378 = arith.addf %376, %377 : vector<1x32xf32>
    %379 = vector.extract_strided_slice %183 {offsets = [5, 0], sizes = [1, 1], strides = [1, 1]} : vector<8x1xi1> to vector<1x1xi1>
    %380 = vector.shape_cast %379 : vector<1x1xi1> to vector<1x1xi1>
    %381 = vector.broadcast %380 : vector<1x1xi1> to vector<1x32xi1>
    %382 = arith.select %381, %378, %349 : vector<1x32xi1>, vector<1x32xf32>
    %383 = vector.extract_strided_slice %150 {offsets = [6, 0], sizes = [1, 32], strides = [1, 1]} : vector<8x32xf32> to vector<1x32xf32>
    %cst_144 = arith.constant dense<0.000000e+00> : vector<1x32xf32>
    %384 = tpu.matmul %382, %168, %cst_144 {dimension_numbers = #tpu.dot_dimension_numbers<[1], [0], [0], [1], [0, 0, 1, 1], [], []>} : vector<1x32xf32>, vector<32x32xf32>, vector<1x32xf32> -> vector<1x32xf32>
    %385 = arith.addf %383, %384 : vector<1x32xf32>
    %386 = arith.addf %385, %174 : vector<1x32xf32>
    %387 = arith.negf %386 : vector<1x32xf32>
    %388 = math.exp %387 : vector<1x32xf32>
    %cst_145 = arith.constant 1.000000e+00 : f32
    %389 = vector.broadcast %cst_145 : f32 to vector<1x32xf32>
    %390 = arith.addf %389, %388 : vector<1x32xf32>
    %391 = arith.divf %389, %390 : vector<1x32xf32>
    %392 = vector.extract_strided_slice %158 {offsets = [6, 0], sizes = [1, 32], strides = [1, 1]} : vector<8x32xf32> to vector<1x32xf32>
    %cst_146 = arith.constant dense<0.000000e+00> : vector<1x32xf32>
    %393 = tpu.matmul %382, %170, %cst_146 {dimension_numbers = #tpu.dot_dimension_numbers<[1], [0], [0], [1], [0, 0, 1, 1], [], []>} : vector<1x32xf32>, vector<32x32xf32>, vector<1x32xf32> -> vector<1x32xf32>
    %394 = arith.addf %392, %393 : vector<1x32xf32>
    %395 = arith.addf %394, %176 : vector<1x32xf32>
    %396 = arith.negf %395 : vector<1x32xf32>
    %397 = math.exp %396 : vector<1x32xf32>
    %cst_147 = arith.constant 1.000000e+00 : f32
    %398 = vector.broadcast %cst_147 : f32 to vector<1x32xf32>
    %399 = arith.addf %398, %397 : vector<1x32xf32>
    %400 = arith.divf %398, %399 : vector<1x32xf32>
    %401 = vector.extract_strided_slice %166 {offsets = [6, 0], sizes = [1, 32], strides = [1, 1]} : vector<8x32xf32> to vector<1x32xf32>
    %cst_148 = arith.constant dense<0.000000e+00> : vector<1x32xf32>
    %402 = tpu.matmul %382, %172, %cst_148 {dimension_numbers = #tpu.dot_dimension_numbers<[1], [0], [0], [1], [0, 0, 1, 1], [], []>} : vector<1x32xf32>, vector<32x32xf32>, vector<1x32xf32> -> vector<1x32xf32>
    %403 = arith.addf %402, %178 : vector<1x32xf32>
    %404 = arith.mulf %391, %403 : vector<1x32xf32>
    %405 = arith.addf %401, %404 : vector<1x32xf32>
    %406 = math.tanh %405 : vector<1x32xf32>
    %cst_149 = arith.constant 1.000000e+00 : f32
    %407 = vector.broadcast %cst_149 : f32 to vector<1x32xf32>
    %408 = arith.subf %407, %400 : vector<1x32xf32>
    %409 = arith.mulf %408, %406 : vector<1x32xf32>
    %410 = arith.mulf %400, %382 : vector<1x32xf32>
    %411 = arith.addf %409, %410 : vector<1x32xf32>
    %412 = vector.extract_strided_slice %183 {offsets = [6, 0], sizes = [1, 1], strides = [1, 1]} : vector<8x1xi1> to vector<1x1xi1>
    %413 = vector.shape_cast %412 : vector<1x1xi1> to vector<1x1xi1>
    %414 = vector.broadcast %413 : vector<1x1xi1> to vector<1x32xi1>
    %415 = arith.select %414, %411, %382 : vector<1x32xi1>, vector<1x32xf32>
    %416 = vector.extract_strided_slice %150 {offsets = [7, 0], sizes = [1, 32], strides = [1, 1]} : vector<8x32xf32> to vector<1x32xf32>
    %cst_150 = arith.constant dense<0.000000e+00> : vector<1x32xf32>
    %417 = tpu.matmul %415, %168, %cst_150 {dimension_numbers = #tpu.dot_dimension_numbers<[1], [0], [0], [1], [0, 0, 1, 1], [], []>} : vector<1x32xf32>, vector<32x32xf32>, vector<1x32xf32> -> vector<1x32xf32>
    %418 = arith.addf %416, %417 : vector<1x32xf32>
    %419 = arith.addf %418, %174 : vector<1x32xf32>
    %420 = arith.negf %419 : vector<1x32xf32>
    %421 = math.exp %420 : vector<1x32xf32>
    %cst_151 = arith.constant 1.000000e+00 : f32
    %422 = vector.broadcast %cst_151 : f32 to vector<1x32xf32>
    %423 = arith.addf %422, %421 : vector<1x32xf32>
    %424 = arith.divf %422, %423 : vector<1x32xf32>
    %425 = vector.extract_strided_slice %158 {offsets = [7, 0], sizes = [1, 32], strides = [1, 1]} : vector<8x32xf32> to vector<1x32xf32>
    %cst_152 = arith.constant dense<0.000000e+00> : vector<1x32xf32>
    %426 = tpu.matmul %415, %170, %cst_152 {dimension_numbers = #tpu.dot_dimension_numbers<[1], [0], [0], [1], [0, 0, 1, 1], [], []>} : vector<1x32xf32>, vector<32x32xf32>, vector<1x32xf32> -> vector<1x32xf32>
    %427 = arith.addf %425, %426 : vector<1x32xf32>
    %428 = arith.addf %427, %176 : vector<1x32xf32>
    %429 = arith.negf %428 : vector<1x32xf32>
    %430 = math.exp %429 : vector<1x32xf32>
    %cst_153 = arith.constant 1.000000e+00 : f32
    %431 = vector.broadcast %cst_153 : f32 to vector<1x32xf32>
    %432 = arith.addf %431, %430 : vector<1x32xf32>
    %433 = arith.divf %431, %432 : vector<1x32xf32>
    %434 = vector.extract_strided_slice %166 {offsets = [7, 0], sizes = [1, 32], strides = [1, 1]} : vector<8x32xf32> to vector<1x32xf32>
    %cst_154 = arith.constant dense<0.000000e+00> : vector<1x32xf32>
    %435 = tpu.matmul %415, %172, %cst_154 {dimension_numbers = #tpu.dot_dimension_numbers<[1], [0], [0], [1], [0, 0, 1, 1], [], []>} : vector<1x32xf32>, vector<32x32xf32>, vector<1x32xf32> -> vector<1x32xf32>
    %436 = arith.addf %435, %178 : vector<1x32xf32>
    %437 = arith.mulf %424, %436 : vector<1x32xf32>
    %438 = arith.addf %434, %437 : vector<1x32xf32>
    %439 = math.tanh %438 : vector<1x32xf32>
    %cst_155 = arith.constant 1.000000e+00 : f32
    %440 = vector.broadcast %cst_155 : f32 to vector<1x32xf32>
    %441 = arith.subf %440, %433 : vector<1x32xf32>
    %442 = arith.mulf %441, %439 : vector<1x32xf32>
    %443 = arith.mulf %433, %415 : vector<1x32xf32>
    %444 = arith.addf %442, %443 : vector<1x32xf32>
    %445 = vector.extract_strided_slice %183 {offsets = [7, 0], sizes = [1, 1], strides = [1, 1]} : vector<8x1xi1> to vector<1x1xi1>
    %446 = vector.shape_cast %445 : vector<1x1xi1> to vector<1x1xi1>
    %447 = vector.broadcast %446 : vector<1x1xi1> to vector<1x32xi1>
    %448 = arith.select %447, %444, %415 : vector<1x32xi1>, vector<1x32xf32>
    %449 = tpu.transpose %70, [1, 0] : vector<4x32xf32> -> vector<32x4xf32>
    %cst_156 = arith.constant dense<0.000000e+00> : vector<1x4xf32>
    %450 = tpu.matmul %448, %449, %cst_156 {dimension_numbers = #tpu.dot_dimension_numbers<[1], [0], [0], [1], [0, 0, 1, 1], [], []>} : vector<1x32xf32>, vector<32x4xf32>, vector<1x4xf32> -> vector<1x4xf32>
    %451 = vector.shape_cast %450 : vector<1x4xf32> to vector<1x1x4xf32>
    %c0_157 = arith.constant 0 : index
    %c0_158 = arith.constant 0 : index
    %c0_159 = arith.constant 0 : index
    %452 = vector.load %arg15[%c0_157, %c0_158, %c0_159] : memref<1x1x4xf32, #tpu.memory_space<vmem>>, vector<1x1x4xf32>
    tpu.vector_store %arg15[%c0_157, %c0_158, %c0_159], %451 {strides = array<i32>} : memref<1x1x4xf32, #tpu.memory_space<vmem>>, vector<1x1x4xf32>,
    return
  }
  func.func @transform_0(%arg0: i32, %arg1: memref<2xi32, #tpu.memory_space<smem>>) -> (i32, i32, i32) {
    %c0_i32 = arith.constant 0 : i32
    %c0_i32_0 = arith.constant 0 : i32
    %c0_i32_1 = arith.constant 0 : i32
    return %arg0, %c0_i32, %c0_i32_0 : i32, i32, i32
  }
  func.func @transform_1(%arg0: i32, %arg1: memref<2xi32, #tpu.memory_space<smem>>) -> (i32, i32, i32) {
    %c0_i32 = arith.constant 0 : i32
    %c0_i32_0 = arith.constant 0 : i32
    %c0_i32_1 = arith.constant 0 : i32
    return %arg0, %c0_i32, %c0_i32_0 : i32, i32, i32
  }
  func.func @transform_2(%arg0: i32, %arg1: memref<2xi32, #tpu.memory_space<smem>>) -> (i32, i32, i32) {
    %c0_i32 = arith.constant 0 : i32
    %c0_i32_0 = arith.constant 0 : i32
    %c0_i32_1 = arith.constant 0 : i32
    %c0_i32_2 = arith.constant 0 : i32
    return %c0_i32, %c0_i32_0, %c0_i32_1 : i32, i32, i32
  }
  func.func @transform_3(%arg0: i32, %arg1: memref<2xi32, #tpu.memory_space<smem>>) -> (i32, i32, i32) {
    %c0_i32 = arith.constant 0 : i32
    %c0_i32_0 = arith.constant 0 : i32
    %c0_i32_1 = arith.constant 0 : i32
    %c0_i32_2 = arith.constant 0 : i32
    return %c0_i32, %c0_i32_0, %c0_i32_1 : i32, i32, i32
  }
  func.func @transform_4(%arg0: i32, %arg1: memref<2xi32, #tpu.memory_space<smem>>) -> (i32, i32, i32) {
    %c0_i32 = arith.constant 0 : i32
    %c0_i32_0 = arith.constant 0 : i32
    %c0_i32_1 = arith.constant 0 : i32
    %c0_i32_2 = arith.constant 0 : i32
    return %c0_i32, %c0_i32_0, %c0_i32_1 : i32, i32, i32
  }
  func.func @transform_5(%arg0: i32, %arg1: memref<2xi32, #tpu.memory_space<smem>>) -> (i32, i32, i32) {
    %c0_i32 = arith.constant 0 : i32
    %c0_i32_0 = arith.constant 0 : i32
    %c0_i32_1 = arith.constant 0 : i32
    %c0_i32_2 = arith.constant 0 : i32
    return %c0_i32, %c0_i32_0, %c0_i32_1 : i32, i32, i32
  }
  func.func @transform_6(%arg0: i32, %arg1: memref<2xi32, #tpu.memory_space<smem>>) -> (i32, i32, i32) {
    %c0_i32 = arith.constant 0 : i32
    %c0_i32_0 = arith.constant 0 : i32
    %c0_i32_1 = arith.constant 0 : i32
    %c0_i32_2 = arith.constant 0 : i32
    return %c0_i32, %c0_i32_0, %c0_i32_1 : i32, i32, i32
  }
  func.func @transform_7(%arg0: i32, %arg1: memref<2xi32, #tpu.memory_space<smem>>) -> (i32, i32, i32) {
    %c0_i32 = arith.constant 0 : i32
    %c0_i32_0 = arith.constant 0 : i32
    %c0_i32_1 = arith.constant 0 : i32
    %c0_i32_2 = arith.constant 0 : i32
    return %c0_i32, %c0_i32_0, %c0_i32_1 : i32, i32, i32
  }
  func.func @transform_8(%arg0: i32, %arg1: memref<2xi32, #tpu.memory_space<smem>>) -> (i32, i32, i32) {
    %c0_i32 = arith.constant 0 : i32
    %c0_i32_0 = arith.constant 0 : i32
    %c0_i32_1 = arith.constant 0 : i32
    %c0_i32_2 = arith.constant 0 : i32
    return %c0_i32, %c0_i32_0, %c0_i32_1 : i32, i32, i32
  }
  func.func @transform_9(%arg0: i32, %arg1: memref<2xi32, #tpu.memory_space<smem>>) -> (i32, i32, i32) {
    %c0_i32 = arith.constant 0 : i32
    %c0_i32_0 = arith.constant 0 : i32
    %c0_i32_1 = arith.constant 0 : i32
    %c0_i32_2 = arith.constant 0 : i32
    return %c0_i32, %c0_i32_0, %c0_i32_1 : i32, i32, i32
  }
  func.func @transform_10(%arg0: i32, %arg1: memref<2xi32, #tpu.memory_space<smem>>) -> (i32, i32, i32) {
    %c0_i32 = arith.constant 0 : i32
    %c0_i32_0 = arith.constant 0 : i32
    %c0_i32_1 = arith.constant 0 : i32
    %c0_i32_2 = arith.constant 0 : i32
    return %c0_i32, %c0_i32_0, %c0_i32_1 : i32, i32, i32
  }
  func.func @transform_11(%arg0: i32, %arg1: memref<2xi32, #tpu.memory_space<smem>>) -> (i32, i32, i32) {
    %c0_i32 = arith.constant 0 : i32
    %c0_i32_0 = arith.constant 0 : i32
    %c0_i32_1 = arith.constant 0 : i32
    %c0_i32_2 = arith.constant 0 : i32
    return %c0_i32, %c0_i32_0, %c0_i32_1 : i32, i32, i32
  }
  func.func @transform_12(%arg0: i32, %arg1: memref<2xi32, #tpu.memory_space<smem>>) -> (i32, i32, i32) {
    %c0_i32 = arith.constant 0 : i32
    %c0_i32_0 = arith.constant 0 : i32
    %c0_i32_1 = arith.constant 0 : i32
    %c0_i32_2 = arith.constant 0 : i32
    return %c0_i32, %c0_i32_0, %c0_i32_1 : i32, i32, i32
  }
  func.func @transform_13(%arg0: i32, %arg1: memref<2xi32, #tpu.memory_space<smem>>) -> (i32, i32, i32) {
    %c0_i32 = arith.constant 0 : i32
    %c0_i32_0 = arith.constant 0 : i32
    %c0_i32_1 = arith.constant 0 : i32
    return %arg0, %c0_i32, %c0_i32_0 : i32, i32, i32
  }
}

</mosaic_0001>

<llo_original>
// kernel: gru_model_forward.1
$region0: #{gru_model_forward.1}
  #allocation0 [shape = 'u32[]', space=smem, size = 0x4, offset = 0x4, fixed_abs, tag = 'smem constant byte address 0x4 - core index']
  #allocation1 [shape = 'u32[144,128]{1,0:T(1,128)}', space=vmem, size = 0x12000, scoped, tag = 'internal scratch']
  #allocation2 [shape = 's32[1]{0}', space=sflag, size = 0x4, scoped, tag = 'scoped memory for gru_model_forward.1']
  #allocation3 [shape = 'u8[512]{0}', space=smem, size = 0x200, scoped, tag = 'prefetched SMEM operand 0']
  %s0 = inlined_call_operand.vmem [shape: s32[2], index: 0, kind: input, shape index: {}]
  %s1 = inlined_call_operand.vmem [shape: f32[2,64,48], index: 1, kind: input, shape index: {}]
  %s2 = inlined_call_operand.vmem [shape: f32[2,128,48], index: 2, kind: input, shape index: {}]
  %s3 = inlined_call_operand.vmem [shape: f32[2,48,32], index: 3, kind: input, shape index: {}]
  %s4 = inlined_call_operand.vmem [shape: f32[2,1,32], index: 4, kind: input, shape index: {}]
  %s5 = inlined_call_operand.vmem [shape: f32[2,32,32], index: 5, kind: input, shape index: {}]
  %s6 = inlined_call_operand.vmem [shape: f32[2,1,32], index: 6, kind: input, shape index: {}]
  %s7 = inlined_call_operand.vmem [shape: f32[2,1,32], index: 7, kind: input, shape index: {}]
  %s8 = inlined_call_operand.vmem [shape: f32[2,1,32], index: 8, kind: input, shape index: {}]
  %s9 = inlined_call_operand.vmem [shape: f32[2,1,32], index: 9, kind: input, shape index: {}]
  %s10 = inlined_call_operand.vmem [shape: f32[3,32,32], index: 10, kind: input, shape index: {}]
  %s11 = inlined_call_operand.vmem [shape: f32[3,1,32], index: 11, kind: input, shape index: {}]
  %s12 = inlined_call_operand.vmem [shape: f32[3,32,32], index: 12, kind: input, shape index: {}]
  %s13 = inlined_call_operand.vmem [shape: f32[3,1,32], index: 13, kind: input, shape index: {}]
  %s14 = inlined_call_operand.hbm [shape: f32[2,1,4], index: 14, kind: output, shape index: {}]
  %s15 = sld [smem:[#allocation0]]
  $region85: #{gru_model_forward.1} parent=0
    _
  %s17 = ssub.s32 1, %s15
  %s18 = scalar_select 0, %s17, %s15
  %s19 = sshll.u32 %s0, 4
  %s20 = int_to_ptr.vmem [resolvable:$true] %s19
  %22 = dma.vmem_to_smem %s20, 16, [#allocation3], [#allocation2]
  %23 = dma.done [#allocation2], 16
  %24 = sfence
  $region1: #{gru_model_forward.1} parent=0
    #allocation4 [shape = 'u8[1024]{0}', space=vmem, size = 0x400, scoped, tag = 'output window, operand 0']
    #allocation5 [shape = 's32[2]{0}', space=sflag, size = 0x8, scoped, tag = 'scoped memory for gru_model_forward.1']
    %25 = vsyncpa [#allocation5], 0
    %s26 = scalar_lea.sflag [#allocation5], 1
    %27 = vsyncpa %s26, 0
    loop: start=0, step=1, limit=4
    $region2: #{gru_model_forward.1} parent=1 // loop_pre_header
      _
    $region3: #{gru_model_forward.1} parent=1 // loop_header
      %s29 = sphi 0, %s33
      %p30 = scmp.ge.s32.totalorder %s29, 4
      %s39 = sphi 0, %s41
      %s42 = sphi 0, %s39
      %s43 = sphi 0, %s42
      %s59 = sphi 0, %s43
      %s65 = sphi 0, %s67
      %s68 = sphi 0, %s65
      %s69 = sphi 0, %s68
      %s85 = sphi 0, %s69
      %s89 = sphi 0, %s89
      %s91 = sphi 0, %s89
      %s92 = sphi 0, %s91
      %s106 = sphi 0, %s92
      %s110 = sphi 0, %s110
      %s112 = sphi 0, %s110
      %s113 = sphi 0, %s112
      %s127 = sphi 0, %s113
      %s131 = sphi 0, %s131
      %s133 = sphi 0, %s131
      %s134 = sphi 0, %s133
      %s148 = sphi 0, %s134
      %s152 = sphi 0, %s152
      %s154 = sphi 0, %s152
      %s155 = sphi 0, %s154
      %s169 = sphi 0, %s155
      %s173 = sphi 0, %s173
      %s175 = sphi 0, %s173
      %s176 = sphi 0, %s175
      %s190 = sphi 0, %s176
      %s194 = sphi 0, %s194
      %s196 = sphi 0, %s194
      %s197 = sphi 0, %s196
      %s211 = sphi 0, %s197
      %s215 = sphi 0, %s215
      %s217 = sphi 0, %s215
      %s218 = sphi 0, %s217
      %s232 = sphi 0, %s218
      %s236 = sphi 0, %s236
      %s238 = sphi 0, %s236
      %s239 = sphi 0, %s238
      %s253 = sphi 0, %s239
      %s257 = sphi 0, %s257
      %s259 = sphi 0, %s257
      %s260 = sphi 0, %s259
      %s274 = sphi 0, %s260
      %s278 = sphi 0, %s278
      %s280 = sphi 0, %s278
      %s281 = sphi 0, %s280
      %s295 = sphi 0, %s281
      %s299 = sphi 0, %s299
      %s301 = sphi 0, %s299
      %s302 = sphi 0, %s301
      %s316 = sphi 0, %s302
      %s322 = sphi 0, %s324
      %s325 = sphi 0, %s322
      %s326 = sphi 0, %s325
      %s342 = sphi 0, %s326
    $region4: #{gru_model_forward.1} parent=1 // loop_header_branch
      %32 = sbr.rel (%p30) target = $region8
    $region5: #{gru_model_forward.1} parent=1 // loop_body
      %s34 = ssub.s32 %s29, 1
      %s35 = ssub.s32 %s29, 2
      %s36 = sadd.s32 %s29, 1
      %s37 = ssub.s32 %s29, %s36
      %p38 = scmp.eq.s32.totalorder %s37, 0
      %s40 = sadd.s32 %s39, 1
      %s41 = scalar_select %p38, %s39, %s40
      %p44 = pneg %p38
      %p45 = scmp.eq.s32.totalorder %s29, 1
      %p46 = por %p44, %p45
      %p47 = scmp.ne.s32.totalorder %s39, %s42
      %p48 = scmp.eq.s32.totalorder %s29, 0
      %p49 = por %p47, %p48
      %p50 = scmp.ne.s32.totalorder %s39, %s42
      %p51 = scmp.eq.s32.totalorder %s34, 1
      %p52 = por %p50, %p51
      %p53 = scmp.ne.s32.totalorder %s42, %s43
      %p54 = scmp.eq.s32.totalorder %s34, 0
      %p55 = por %p53, %p54
      %p56 = scmp.ne.s32.totalorder %s42, %s43
      %p57 = scmp.eq.s32.totalorder %s35, 1
      %p58 = por %p56, %p57
      %p60 = scmp.ne.s32.totalorder %s43, %s59
      %p61 = scmp.eq.s32.totalorder %s35, 0
      %p62 = por %p60, %p61
      %s63 = ssub.s32 %s29, %s36
      %p64 = scmp.eq.s32.totalorder %s63, 0
      %s66 = sadd.s32 %s65, 1
      %s67 = scalar_select %p64, %s65, %s66
      %p70 = pneg %p64
      %p71 = scmp.eq.s32.totalorder %s29, 1
      %p72 = por %p70, %p71
      %p73 = scmp.ne.s32.totalorder %s65, %s68
      %p74 = scmp.eq.s32.totalorder %s29, 0
      %p75 = por %p73, %p74
      %p76 = scmp.ne.s32.totalorder %s65, %s68
      %p77 = scmp.eq.s32.totalorder %s34, 1
      %p78 = por %p76, %p77
      %p79 = scmp.ne.s32.totalorder %s68, %s69
      %p80 = scmp.eq.s32.totalorder %s34, 0
      %p81 = por %p79, %p80
      %p82 = scmp.ne.s32.totalorder %s68, %s69
      %p83 = scmp.eq.s32.totalorder %s35, 1
      %p84 = por %p82, %p83
      %p86 = scmp.ne.s32.totalorder %s69, %s85
      %p87 = scmp.eq.s32.totalorder %s35, 0
      %p88 = por %p86, %p87
      %s90 = sadd.s32 %s89, 1
      %p93 = scmp.eq.s32.totalorder %s29, 1
      %p94 = scmp.ne.s32.totalorder %s89, %s91
      %p95 = scmp.eq.s32.totalorder %s29, 0
      %p96 = por %p94, %p95
      %p97 = scmp.ne.s32.totalorder %s89, %s91
      %p98 = scmp.eq.s32.totalorder %s34, 1
      %p99 = por %p97, %p98
      %p100 = scmp.ne.s32.totalorder %s91, %s92
      %p101 = scmp.eq.s32.totalorder %s34, 0
      %p102 = por %p100, %p101
      %p103 = scmp.ne.s32.totalorder %s91, %s92
      %p104 = scmp.eq.s32.totalorder %s35, 1
      %p105 = por %p103, %p104
      %p107 = scmp.ne.s32.totalorder %s92, %s106
      %p108 = scmp.eq.s32.totalorder %s35, 0
      %p109 = por %p107, %p108
      %s111 = sadd.s32 %s110, 1
      %p114 = scmp.eq.s32.totalorder %s29, 1
      %p115 = scmp.ne.s32.totalorder %s110, %s112
      %p116 = scmp.eq.s32.totalorder %s29, 0
      %p117 = por %p115, %p116
      %p118 = scmp.ne.s32.totalorder %s110, %s112
      %p119 = scmp.eq.s32.totalorder %s34, 1
      %p120 = por %p118, %p119
      %p121 = scmp.ne.s32.totalorder %s112, %s113
      %p122 = scmp.eq.s32.totalorder %s34, 0
      %p123 = por %p121, %p122
      %p124 = scmp.ne.s32.totalorder %s112, %s113
      %p125 = scmp.eq.s32.totalorder %s35, 1
      %p126 = por %p124, %p125
      %p128 = scmp.ne.s32.totalorder %s113, %s127
      %p129 = scmp.eq.s32.totalorder %s35, 0
      %p130 = por %p128, %p129
      %s132 = sadd.s32 %s131, 1
      %p135 = scmp.eq.s32.totalorder %s29, 1
      %p136 = scmp.ne.s32.totalorder %s131, %s133
      %p137 = scmp.eq.s32.totalorder %s29, 0
      %p138 = por %p136, %p137
      %p139 = scmp.ne.s32.totalorder %s131, %s133
      %p140 = scmp.eq.s32.totalorder %s34, 1
      %p141 = por %p139, %p140
      %p142 = scmp.ne.s32.totalorder %s133, %s134
      %p143 = scmp.eq.s32.totalorder %s34, 0
      %p144 = por %p142, %p143
      %p145 = scmp.ne.s32.totalorder %s133, %s134
      %p146 = scmp.eq.s32.totalorder %s35, 1
      %p147 = por %p145, %p146
      %p149 = scmp.ne.s32.totalorder %s134, %s148
      %p150 = scmp.eq.s32.totalorder %s35, 0
      %p151 = por %p149, %p150
      %s153 = sadd.s32 %s152, 1
      %p156 = scmp.eq.s32.totalorder %s29, 1
      %p157 = scmp.ne.s32.totalorder %s152, %s154
      %p158 = scmp.eq.s32.totalorder %s29, 0
      %p159 = por %p157, %p158
      %p160 = scmp.ne.s32.totalorder %s152, %s154
      %p161 = scmp.eq.s32.totalorder %s34, 1
      %p162 = por %p160, %p161
      %p163 = scmp.ne.s32.totalorder %s154, %s155
      %p164 = scmp.eq.s32.totalorder %s34, 0
      %p165 = por %p163, %p164
      %p166 = scmp.ne.s32.totalorder %s154, %s155
      %p167 = scmp.eq.s32.totalorder %s35, 1
      %p168 = por %p166, %p167
      %p170 = scmp.ne.s32.totalorder %s155, %s169
      %p171 = scmp.eq.s32.totalorder %s35, 0
      %p172 = por %p170, %p171
      %s174 = sadd.s32 %s173, 1
      %p177 = scmp.eq.s32.totalorder %s29, 1
      %p178 = scmp.ne.s32.totalorder %s173, %s175
      %p179 = scmp.eq.s32.totalorder %s29, 0
      %p180 = por %p178, %p179
      %p181 = scmp.ne.s32.totalorder %s173, %s175
      %p182 = scmp.eq.s32.totalorder %s34, 1
      %p183 = por %p181, %p182
      %p184 = scmp.ne.s32.totalorder %s175, %s176
      %p185 = scmp.eq.s32.totalorder %s34, 0
      %p186 = por %p184, %p185
      %p187 = scmp.ne.s32.totalorder %s175, %s176
      %p188 = scmp.eq.s32.totalorder %s35, 1
      %p189 = por %p187, %p188
      %p191 = scmp.ne.s32.totalorder %s176, %s190
      %p192 = scmp.eq.s32.totalorder %s35, 0
      %p193 = por %p191, %p192
      %s195 = sadd.s32 %s194, 1
      %p198 = scmp.eq.s32.totalorder %s29, 1
      %p199 = scmp.ne.s32.totalorder %s194, %s196
      %p200 = scmp.eq.s32.totalorder %s29, 0
      %p201 = por %p199, %p200
      %p202 = scmp.ne.s32.totalorder %s194, %s196
      %p203 = scmp.eq.s32.totalorder %s34, 1
      %p204 = por %p202, %p203
      %p205 = scmp.ne.s32.totalorder %s196, %s197
      %p206 = scmp.eq.s32.totalorder %s34, 0
      %p207 = por %p205, %p206
      %p208 = scmp.ne.s32.totalorder %s196, %s197
      %p209 = scmp.eq.s32.totalorder %s35, 1
      %p210 = por %p208, %p209
      %p212 = scmp.ne.s32.totalorder %s197, %s211
      %p213 = scmp.eq.s32.totalorder %s35, 0
      %p214 = por %p212, %p213
      %s216 = sadd.s32 %s215, 1
      %p219 = scmp.eq.s32.totalorder %s29, 1
      %p220 = scmp.ne.s32.totalorder %s215, %s217
      %p221 = scmp.eq.s32.totalorder %s29, 0
      %p222 = por %p220, %p221
      %p223 = scmp.ne.s32.totalorder %s215, %s217
      %p224 = scmp.eq.s32.totalorder %s34, 1
      %p225 = por %p223, %p224
      %p226 = scmp.ne.s32.totalorder %s217, %s218
      %p227 = scmp.eq.s32.totalorder %s34, 0
      %p228 = por %p226, %p227
      %p229 = scmp.ne.s32.totalorder %s217, %s218
      %p230 = scmp.eq.s32.totalorder %s35, 1
      %p231 = por %p229, %p230
      %p233 = scmp.ne.s32.totalorder %s218, %s232
      %p234 = scmp.eq.s32.totalorder %s35, 0
      %p235 = por %p233, %p234
      %s237 = sadd.s32 %s236, 1
      %p240 = scmp.eq.s32.totalorder %s29, 1
      %p241 = scmp.ne.s32.totalorder %s236, %s238
      %p242 = scmp.eq.s32.totalorder %s29, 0
      %p243 = por %p241, %p242
      %p244 = scmp.ne.s32.totalorder %s236, %s238
      %p245 = scmp.eq.s32.totalorder %s34, 1
      %p246 = por %p244, %p245
      %p247 = scmp.ne.s32.totalorder %s238, %s239
      %p248 = scmp.eq.s32.totalorder %s34, 0
      %p249 = por %p247, %p248
      %p250 = scmp.ne.s32.totalorder %s238, %s239
      %p251 = scmp.eq.s32.totalorder %s35, 1
      %p252 = por %p250, %p251
      %p254 = scmp.ne.s32.totalorder %s239, %s253
      %p255 = scmp.eq.s32.totalorder %s35, 0
      %p256 = por %p254, %p255
      %s258 = sadd.s32 %s257, 1
      %p261 = scmp.eq.s32.totalorder %s29, 1
      %p262 = scmp.ne.s32.totalorder %s257, %s259
      %p263 = scmp.eq.s32.totalorder %s29, 0
      %p264 = por %p262, %p263
      %p265 = scmp.ne.s32.totalorder %s257, %s259
      %p266 = scmp.eq.s32.totalorder %s34, 1
      %p267 = por %p265, %p266
      %p268 = scmp.ne.s32.totalorder %s259, %s260
      %p269 = scmp.eq.s32.totalorder %s34, 0
      %p270 = por %p268, %p269
      %p271 = scmp.ne.s32.totalorder %s259, %s260
      %p272 = scmp.eq.s32.totalorder %s35, 1
      %p273 = por %p271, %p272
      %p275 = scmp.ne.s32.totalorder %s260, %s274
      %p276 = scmp.eq.s32.totalorder %s35, 0
      %p277 = por %p275, %p276
      %s279 = sadd.s32 %s278, 1
      %p282 = scmp.eq.s32.totalorder %s29, 1
      %p283 = scmp.ne.s32.totalorder %s278, %s280
      %p284 = scmp.eq.s32.totalorder %s29, 0
      %p285 = por %p283, %p284
      %p286 = scmp.ne.s32.totalorder %s278, %s280
      %p287 = scmp.eq.s32.totalorder %s34, 1
      %p288 = por %p286, %p287
      %p289 = scmp.ne.s32.totalorder %s280, %s281
      %p290 = scmp.eq.s32.totalorder %s34, 0
      %p291 = por %p289, %p290
      %p292 = scmp.ne.s32.totalorder %s280, %s281
      %p293 = scmp.eq.s32.totalorder %s35, 1
      %p294 = por %p292, %p293
      %p296 = scmp.ne.s32.totalorder %s281, %s295
      %p297 = scmp.eq.s32.totalorder %s35, 0
      %p298 = por %p296, %p297
      %s300 = sadd.s32 %s299, 1
      %p303 = scmp.eq.s32.totalorder %s29, 1
      %p304 = scmp.ne.s32.totalorder %s299, %s301
      %p305 = scmp.eq.s32.totalorder %s29, 0
      %p306 = por %p304, %p305
      %p307 = scmp.ne.s32.totalorder %s299, %s301
      %p308 = scmp.eq.s32.totalorder %s34, 1
      %p309 = por %p307, %p308
      %p310 = scmp.ne.s32.totalorder %s301, %s302
      %p311 = scmp.eq.s32.totalorder %s34, 0
      %p312 = por %p310, %p311
      %p313 = scmp.ne.s32.totalorder %s301, %s302
      %p314 = scmp.eq.s32.totalorder %s35, 1
      %p315 = por %p313, %p314
      %p317 = scmp.ne.s32.totalorder %s302, %s316
      %p318 = scmp.eq.s32.totalorder %s35, 0
      %p319 = por %p317, %p318
      %s320 = ssub.s32 %s29, %s36
      %p321 = scmp.eq.s32.totalorder %s320, 0
      %s323 = sadd.s32 %s322, 1
      %s324 = scalar_select %p321, %s322, %s323
      %p327 = pneg %p321
      %p328 = scmp.eq.s32.totalorder %s29, 1
      %p329 = por %p327, %p328
      %p330 = scmp.ne.s32.totalorder %s322, %s325
      %p331 = scmp.eq.s32.totalorder %s29, 0
      %p332 = por %p330, %p331
      %p333 = scmp.ne.s32.totalorder %s322, %s325
      %p334 = scmp.eq.s32.totalorder %s34, 1
      %p335 = por %p333, %p334
      %p336 = scmp.ne.s32.totalorder %s325, %s326
      %p337 = scmp.eq.s32.totalorder %s34, 0
      %p338 = por %p336, %p337
      %p339 = scmp.ne.s32.totalorder %s325, %s326
      %p340 = scmp.eq.s32.totalorder %s35, 1
      %p341 = por %p339, %p340
      %p343 = scmp.ne.s32.totalorder %s326, %s342
      %p344 = scmp.eq.s32.totalorder %s35, 0
      %p345 = por %p343, %p344
      %p346 = scmp.le.s32.totalorder 1, %s29
      %p347 = scmp.lt.s32.totalorder %s29, 3
      %p348 = pnand %p346, %p347
      %p349 = pneg %p348
      // Predicated region
      $region9: #{gru_model_forward.1} parent=5 // pred_check
        _
      $region10: #{gru_model_forward.1} parent=5 // pred_check_branch
        %351 = sbr.rel (%p348) target = $region12
      $region11: #{gru_model_forward.1} parent=5 // pred_region
        %s352 = ssub.s32 %s29, 1
        // Predicated region
        $region13: #{gru_model_forward.1} parent=11 // pred_check
          %p353 = pneg %p102
        $region14: #{gru_model_forward.1} parent=11 // pred_check_branch
          %355 = sbr.rel (%p353) target = $region16
        $region15: #{gru_model_forward.1} parent=11 // pred_region
          _
        $region16: #{gru_model_forward.1} parent=11 // pred_fallthru
          _
        // Predicated region
        $region17: #{gru_model_forward.1} parent=11 // pred_check
          %p356 = pneg %p123
        $region18: #{gru_model_forward.1} parent=11 // pred_check_branch
          %358 = sbr.rel (%p356) target = $region20
        $region19: #{gru_model_forward.1} parent=11 // pred_region
          _
        $region20: #{gru_model_forward.1} parent=11 // pred_fallthru
          _
        // Predicated region
        $region21: #{gru_model_forward.1} parent=11 // pred_check
          %p359 = pneg %p144
        $region22: #{gru_model_forward.1} parent=11 // pred_check_branch
          %361 = sbr.rel (%p359) target = $region24
        $region23: #{gru_model_forward.1} parent=11 // pred_region
          _
        $region24: #{gru_model_forward.1} parent=11 // pred_fallthru
          _
        // Predicated region
        $region25: #{gru_model_forward.1} parent=11 // pred_check
          %p362 = pneg %p165
        $region26: #{gru_model_forward.1} parent=11 // pred_check_branch
          %364 = sbr.rel (%p362) target = $region28
        $region27: #{gru_model_forward.1} parent=11 // pred_region
          _
        $region28: #{gru_model_forward.1} parent=11 // pred_fallthru
          _
        // Predicated region
        $region29: #{gru_model_forward.1} parent=11 // pred_check
          %p365 = pneg %p186
        $region30: #{gru_model_forward.1} parent=11 // pred_check_branch
          %367 = sbr.rel (%p365) target = $region32
        $region31: #{gru_model_forward.1} parent=11 // pred_region
          _
        $region32: #{gru_model_forward.1} parent=11 // pred_fallthru
          _
        // Predicated region
        $region33: #{gru_model_forward.1} parent=11 // pred_check
          %p368 = pneg %p207
        $region34: #{gru_model_forward.1} parent=11 // pred_check_branch
          %370 = sbr.rel (%p368) target = $region36
        $region35: #{gru_model_forward.1} parent=11 // pred_region
          _
        $region36: #{gru_model_forward.1} parent=11 // pred_fallthru
          _
        // Predicated region
        $region37: #{gru_model_forward.1} parent=11 // pred_check
          %p371 = pneg %p228
        $region38: #{gru_model_forward.1} parent=11 // pred_check_branch
          %373 = sbr.rel (%p371) target = $region40
        $region39: #{gru_model_forward.1} parent=11 // pred_region
          _
        $region40: #{gru_model_forward.1} parent=11 // pred_fallthru
          _
        // Predicated region
        $region41: #{gru_model_forward.1} parent=11 // pred_check
          %p374 = pneg %p249
        $region42: #{gru_model_forward.1} parent=11 // pred_check_branch
          %376 = sbr.rel (%p374) target = $region44
        $region43: #{gru_model_forward.1} parent=11 // pred_region
          _
        $region44: #{gru_model_forward.1} parent=11 // pred_fallthru
          _
        // Predicated region
        $region45: #{gru_model_forward.1} parent=11 // pred_check
          %p377 = pneg %p270
        $region46: #{gru_model_forward.1} parent=11 // pred_check_branch
          %379 = sbr.rel (%p377) target = $region48
        $region47: #{gru_model_forward.1} parent=11 // pred_region
          _
        $region48: #{gru_model_forward.1} parent=11 // pred_fallthru
          _
        // Predicated region
        $region49: #{gru_model_forward.1} parent=11 // pred_check
          %p380 = pneg %p291
        $region50: #{gru_model_forward.1} parent=11 // pred_check_branch
          %382 = sbr.rel (%p380) target = $region52
        $region51: #{gru_model_forward.1} parent=11 // pred_region
          _
        $region52: #{gru_model_forward.1} parent=11 // pred_fallthru
          _
        // Predicated region
        $region53: #{gru_model_forward.1} parent=11 // pred_check
          %p383 = pneg %p312
        $region54: #{gru_model_forward.1} parent=11 // pred_check_branch
          %385 = sbr.rel (%p383) target = $region56
        $region55: #{gru_model_forward.1} parent=11 // pred_region
          _
        $region56: #{gru_model_forward.1} parent=11 // pred_fallthru
          _
      $region12: #{gru_model_forward.1} parent=5 // pred_fallthru
        _
      %p386 = scmp.lt.s32.totalorder %s29, 2
      // Predicated region
      $region57: #{gru_model_forward.1} parent=5 // pred_check
        %p387 = pneg %p386
      $region58: #{gru_model_forward.1} parent=5 // pred_check_branch
        %389 = sbr.rel (%p387) target = $region60
      $region59: #{gru_model_forward.1} parent=5 // pred_region
        // Predicated region
        $region61: #{gru_model_forward.1} parent=59 // pred_check
          %p390 = pneg %p49
        $region62: #{gru_model_forward.1} parent=59 // pred_check_branch
          %392 = sbr.rel (%p390) target = $region64
        $region63: #{gru_model_forward.1} parent=59 // pred_region
          %p393 = scmp.lt.s32.totalorder %s29, 1
          %s394 = scalar_select %p393, %s29, 1
          %s395 = smul.addr %s394, 8
          %s396 = smul.addr %s395, 8
          %s397 = scalar_lea.vmem %s1, %s396
        $region64: #{gru_model_forward.1} parent=59 // pred_fallthru
          _
        // Predicated region
        $region65: #{gru_model_forward.1} parent=59 // pred_check
          %p398 = pneg %p75
        $region66: #{gru_model_forward.1} parent=59 // pred_check_branch
          %400 = sbr.rel (%p398) target = $region68
        $region67: #{gru_model_forward.1} parent=59 // pred_region
          %p401 = scmp.lt.s32.totalorder %s29, 1
          %s402 = scalar_select %p401, %s29, 1
          %s403 = smul.addr %s402, 16
          %s404 = smul.addr %s403, 8
          %s405 = scalar_lea.vmem %s2, %s404
        $region68: #{gru_model_forward.1} parent=59 // pred_fallthru
          _
      $region60: #{gru_model_forward.1} parent=5 // pred_fallthru
        _
      %p406 = scmp.le.s32.totalorder 1, %s29
      %p407 = scmp.lt.s32.totalorder %s29, 3
      %p408 = pnand %p406, %p407
      %p409 = pneg %p408
      // Predicated region
      $region69: #{gru_model_forward.1} parent=5 // pred_check
        _
      $region70: #{gru_model_forward.1} parent=5 // pred_check_branch
        %411 = sbr.rel (%p408) target = $region72
      $region71: #{gru_model_forward.1} parent=5 // pred_region
        %s412 = ssub.s32 %s29, 1
        %p413 = scmp.lt.s32.totalorder %s34, 1
        %s414 = scalar_select %p413, %s34, 1
        %s415 = smul.addr %s414, 8
        %s416 = smul.addr %s415, 8
        %s417 = scalar_lea.vmem %s1, %s416
        %p418 = pneg %p55
        %p419 = pneg %p52
        %p420 = scmp.lt.s32.totalorder %s34, 1
        %s421 = scalar_select %p420, %s34, 1
        %s422 = smul.addr %s421, 16
        %s423 = smul.addr %s422, 8
        %s424 = scalar_lea.vmem %s2, %s423
        %p425 = pneg %p81
        %p426 = pneg %p78
        %p427 = pneg %p102
        %p428 = pneg %p99
        %p429 = pneg %p123
        %p430 = pneg %p120
        %p431 = pneg %p144
        %p432 = pneg %p141
        %p433 = pneg %p165
        %p434 = pneg %p162
        %p435 = pneg %p186
        %p436 = pneg %p183
        %p437 = pneg %p207
        %p438 = pneg %p204
        %p439 = pneg %p228
        %p440 = pneg %p225
        %p441 = pneg %p249
        %p442 = pneg %p246
        %p443 = pneg %p270
        %p444 = pneg %p267
        %p445 = pneg %p291
        %p446 = pneg %p288
        %p447 = pneg %p312
        %p448 = pneg %p309
        %p449 = pneg %p338
        %p450 = pneg %p335
        %s451 = sand.u32 %s325, 1
        %s452 = scalar_lea.sflag [#allocation5], %s451
        %s453 = sand.u32 %s325, 1
        %s454 = scalar_lea.vmem [#allocation4], %s453
        %p455 = scmp.lt.s32.totalorder %s34, 1
        %s456 = scalar_select %p455, %s34, 1
        %s457 = smul.addr %s456, 8
        %s458 = smul.addr %s457, 8
        %s459 = scalar_lea.vmem %s1, %s458
        %p460 = scmp.lt.s32.totalorder %s34, 1
        %s461 = scalar_select %p460, %s34, 1
        %s462 = smul.addr %s461, 16
        %s463 = smul.addr %s462, 8
        %s464 = scalar_lea.vmem %s2, %s463
        %v466 = vld [vmem:[%s459] sm:$0xff]
        %v467 = vld [vmem:[%s459 + $0x8] sm:$0xff]
        %v468 = vld [vmem:[%s459 + $0x10] sm:$0xff]
        %v469 = vld [vmem:[%s459 + $0x18] sm:$0xff]
        %v470 = vld [vmem:[%s459 + $0x20] sm:$0xff]
        %v471 = vld [vmem:[%s459 + $0x28] sm:$0xff]
        %v472 = vld [vmem:[%s459 + $0x30] sm:$0xff]
        %v473 = vld [vmem:[%s459 + $0x38] sm:$0xff]
        %v474 = vpack.c.bf16 %v467, %v466
        %v475 = vpack.c.bf16 %v469, %v468
        %v476 = vpack.c.bf16 %v471, %v470
        %v477 = vpack.c.bf16 %v473, %v472
        %v478 = vld [vmem:[%s3] sm:$0xff]
        %v479 = vld [vmem:[%s3 + $0x8] sm:$0xff]
        %v480 = vld [vmem:[%s3 + $0x10] sm:$0xff]
        %v481 = vld [vmem:[%s3 + $0x18] sm:$0xff]
        %v482 = vld [vmem:[%s3 + $0x20] sm:$0xff]
        %v483 = vld [vmem:[%s3 + $0x28] sm:$0xff]
        %v484 = vpack.c.bf16 %v479, %v478
        %v485 = vpack.c.bf16 %v481, %v480
        %v486 = vpack.c.bf16 %v483, %v482
        %v487 = vld [vmem:[%s4] sm:$0x1]
        %v489 = vlaneseq
        %v490 = vshrl.u32 %v489, 7
        %v491 = vsub.s32 0, %v490
        %v492 = vrot.slane %v487, %v491
        %vm494 = vcmask 392192
        %v496 = vsel %vm494, %v474, 0
        %v499 = vsel %vm494, %v475, 0
        %v502 = vsel %vm494, %v476, 0
        %v505 = vsel %vm494, %v477, 0
        %507 = vmatprep.subr.bf16.mxu0 0
        %508 = vmatpush1.bf16.msra.mxu0 %v484
        %509 = vmatprep.subr.bf16.mxu0 0
        %510 = vmatpush1.bf16.msra.mxu0 %v485
        %511 = vmatprep.subr.bf16.mxu0 0
        %512 = vmatpush1.bf16.msra.mxu0 %v486
        %513 = vmatprep.subr.bf16.mxu0 0
        %514 = vmatpush1.bf16.msra.mxu0 0
        %515 = vmatprep.subr.bf16.mxu0 0
        %516 = vmatpush1.bf16.msra.mxu0 0
        %517 = vmatprep.subr.bf16.mxu0 0
        %518 = vmatpush1.bf16.msra.mxu0 0
        %519 = vmatprep.subr.bf16.mxu0 0
        %520 = vmatpush1.bf16.msra.mxu0 0
        %521 = vmatprep.subr.bf16.mxu0 0
        %522 = vmatpush1.bf16.msra.mxu0 0
        %523 = vmatprep.subr.bf16.mxu0 0
        %524 = vmatpush1.bf16.msra.mxu0 0
        %525 = vmatprep.subr.bf16.mxu0 0
        %526 = vmatpush1.bf16.msra.mxu0 0
        %527 = vmatprep.subr.bf16.mxu0 0
        %528 = vmatpush1.bf16.msra.mxu0 0
        %529 = vmatprep.subr.bf16.mxu0 0
        %530 = vmatpush1.bf16.msra.mxu0 0
        %531 = vmatprep.subr.bf16.mxu0 0
        %532 = vmatpush1.bf16.msra.mxu0 0
        %533 = vmatprep.subr.bf16.mxu0 0
        %534 = vmatpush1.bf16.msra.mxu0 0
        %535 = vmatprep.subr.bf16.mxu0 0
        %536 = vmatpush1.bf16.msra.mxu0 0
        %537 = vmatprep.subr.bf16.mxu0 0
        %538 = vmatpush1.bf16.msra.mxu0 0
        %539 = vmatprep.mubr.bf16.mxu0 0
        %540 = vmatmul.mubr.bf16.gmra.mrb[0].mxu0 %v496
        %v541 = vpop.f32.mrb[0].mxu0
        %v542 = vadd.f32 %v492, %v541
        %v543 = vpop.f32.mrb[0].mxu0
        %v544 = vpop.f32.mrb[0].mxu0
        %v545 = vadd.f32 %v492, %v544
        %v546 = vpop.f32.mrb[0].mxu0
        %547 = vmatprep.mubr.bf16.mxu0 0
        %548 = vmatmul.mubr.bf16.gmra.mrb[0].mxu0 %v499
        %v549 = vpop.f32.mrb[0].mxu0
        %v550 = vadd.f32 %v492, %v549
        %v551 = vpop.f32.mrb[0].mxu0
        %v552 = vpop.f32.mrb[0].mxu0
        %v553 = vadd.f32 %v492, %v552
        %v554 = vpop.f32.mrb[0].mxu0
        %555 = vmatprep.mubr.bf16.mxu0 0
        %556 = vmatmul.mubr.bf16.gmra.mrb[0].mxu0 %v502
        %v557 = vpop.f32.mrb[0].mxu0
        %v558 = vadd.f32 %v492, %v557
        %v559 = vpop.f32.mrb[0].mxu0
        %v560 = vpop.f32.mrb[0].mxu0
        %v561 = vadd.f32 %v492, %v560
        %v562 = vpop.f32.mrb[0].mxu0
        %563 = vmatprep.mubr.bf16.mxu0 0
        %564 = vmatmul.mubr.bf16.gmra.mrb[0].mxu0 %v505
        %v565 = vpop.f32.mrb[0].mxu0
        %v566 = vadd.f32 %v492, %v565
        %v567 = vpop.f32.mrb[0].mxu0
        %v568 = vpop.f32.mrb[0].mxu0
        %v569 = vadd.f32 %v492, %v568
        %v570 = vpop.f32.mrb[0].mxu0
        %571 = vdwg.mxu0
        %v572 = vmax.f32 %v542, 0.0
        %v573 = vmax.f32 %v545, 0.0
        %v574 = vmax.f32 %v550, 0.0
        %v575 = vmax.f32 %v553, 0.0
        %v576 = vmax.f32 %v558, 0.0
        %v577 = vmax.f32 %v561, 0.0
        %v578 = vmax.f32 %v566, 0.0
        %v579 = vmax.f32 %v569, 0.0
        %v580 = vpack.c.bf16 %v573, %v572
        %v581 = vpack.c.bf16 %v575, %v574
        %v582 = vpack.c.bf16 %v577, %v576
        %v583 = vpack.c.bf16 %v579, %v578
        %v584 = vld [vmem:[%s5] sm:$0xff]
        %v585 = vld [vmem:[%s5 + $0x8] sm:$0xff]
        %v586 = vld [vmem:[%s5 + $0x10] sm:$0xff]
        %v587 = vld [vmem:[%s5 + $0x18] sm:$0xff]
        %v588 = vpack.c.bf16 %v585, %v584
        %v589 = vpack.c.bf16 %v587, %v586
        %v590 = vld [vmem:[%s6] sm:$0x1]
        %v592 = vlaneseq
        %v593 = vshrl.u32 %v592, 7
        %v594 = vsub.s32 0, %v593
        %v595 = vrot.slane %v590, %v594
        %vm597 = vcmask 261120
        %v599 = vsel %vm597, %v580, 0
        %v602 = vsel %vm597, %v581, 0
        %v605 = vsel %vm597, %v582, 0
        %v608 = vsel %vm597, %v583, 0
        %610 = vmatprep.subr.bf16.mxu0 0
        %611 = vmatpush1.bf16.msra.mxu0 %v588
        %612 = vmatprep.subr.bf16.mxu0 0
        %613 = vmatpush1.bf16.msra.mxu0 %v589
        %614 = vmatprep.subr.bf16.mxu0 0
        %615 = vmatpush1.bf16.msra.mxu0 0
        %616 = vmatprep.subr.bf16.mxu0 0
        %617 = vmatpush1.bf16.msra.mxu0 0
        %618 = vmatprep.subr.bf16.mxu0 0
        %619 = vmatpush1.bf16.msra.mxu0 0
        %620 = vmatprep.subr.bf16.mxu0 0
        %621 = vmatpush1.bf16.msra.mxu0 0
        %622 = vmatprep.subr.bf16.mxu0 0
        %623 = vmatpush1.bf16.msra.mxu0 0
        %624 = vmatprep.subr.bf16.mxu0 0
        %625 = vmatpush1.bf16.msra.mxu0 0
        %626 = vmatprep.subr.bf16.mxu0 0
        %627 = vmatpush1.bf16.msra.mxu0 0
        %628 = vmatprep.subr.bf16.mxu0 0
        %629 = vmatpush1.bf16.msra.mxu0 0
        %630 = vmatprep.subr.bf16.mxu0 0
        %631 = vmatpush1.bf16.msra.mxu0 0
        %632 = vmatprep.subr.bf16.mxu0 0
        %633 = vmatpush1.bf16.msra.mxu0 0
        %634 = vmatprep.subr.bf16.mxu0 0
        %635 = vmatpush1.bf16.msra.mxu0 0
        %636 = vmatprep.subr.bf16.mxu0 0
        %637 = vmatpush1.bf16.msra.mxu0 0
        %638 = vmatprep.subr.bf16.mxu0 0
        %639 = vmatpush1.bf16.msra.mxu0 0
        %640 = vmatprep.subr.bf16.mxu0 0
        %641 = vmatpush1.bf16.msra.mxu0 0
        %642 = vmatprep.mubr.bf16.mxu0 0
        %643 = vmatmul.mubr.bf16.gmra.mrb[0].mxu0 %v599
        %v644 = vpop.f32.mrb[0].mxu0
        %v645 = vadd.f32 %v595, %v644
        %v646 = vpop.f32.mrb[0].mxu0
        %v647 = vpop.f32.mrb[0].mxu0
        %v648 = vadd.f32 %v595, %v647
        %v649 = vpop.f32.mrb[0].mxu0
        %650 = vmatprep.mubr.bf16.mxu0 0
        %651 = vmatmul.mubr.bf16.gmra.mrb[0].mxu0 %v602
        %v652 = vpop.f32.mrb[0].mxu0
        %v653 = vadd.f32 %v595, %v652
        %v654 = vpop.f32.mrb[0].mxu0
        %v655 = vpop.f32.mrb[0].mxu0
        %v656 = vadd.f32 %v595, %v655
        %v657 = vpop.f32.mrb[0].mxu0
        %658 = vmatprep.mubr.bf16.mxu0 0
        %659 = vmatmul.mubr.bf16.gmra.mrb[0].mxu0 %v605
        %v660 = vpop.f32.mrb[0].mxu0
        %v661 = vadd.f32 %v595, %v660
        %v662 = vpop.f32.mrb[0].mxu0
        %v663 = vpop.f32.mrb[0].mxu0
        %v664 = vadd.f32 %v595, %v663
        %v665 = vpop.f32.mrb[0].mxu0
        %666 = vmatprep.mubr.bf16.mxu0 0
        %667 = vmatmul.mubr.bf16.gmra.mrb[0].mxu0 %v608
        %v668 = vpop.f32.mrb[0].mxu0
        %v669 = vadd.f32 %v595, %v668
        %v670 = vpop.f32.mrb[0].mxu0
        %v671 = vpop.f32.mrb[0].mxu0
        %v672 = vadd.f32 %v595, %v671
        %v673 = vpop.f32.mrb[0].mxu0
        %674 = vdwg.mxu0
        %v675 = vtanh.pop %v645
        %v676 = vtanh.pop %v648
        %v677 = vtanh.pop %v653
        %v678 = vtanh.pop %v656
        %v679 = vtanh.pop %v661
        %v680 = vtanh.pop %v664
        %v681 = vtanh.pop %v669
        %v682 = vtanh.pop %v672
        %v683 = vld [vmem:[%s7] sm:$0x1]
        %v685 = vlaneseq
        %v686 = vshrl.u32 %v685, 7
        %v687 = vsub.s32 0, %v686
        %v688 = vrot.slane %v683, %v687
        %v690 = vmul.f32 %v675, %v688
        %v691 = vmul.f32 %v676, %v688
        %v692 = vmul.f32 %v677, %v688
        %v693 = vmul.f32 %v678, %v688
        %v694 = vmul.f32 %v679, %v688
        %v695 = vmul.f32 %v680, %v688
        %v696 = vmul.f32 %v681, %v688
        %v697 = vmul.f32 %v682, %v688
        %v698 = vsel %vm597, %v690, 0.0
        %699 = vadd.xlane.f32.xlu0 %v698
        %v700 = vpop.xlane.xlu0 %699
        %v701 = vsel %vm597, %v691, 0.0
        %702 = vadd.xlane.f32.xlu0 %v701
        %v703 = vpop.xlane.xlu0 %702
        %v704 = vsel %vm597, %v692, 0.0
        %705 = vadd.xlane.f32.xlu0 %v704
        %v706 = vpop.xlane.xlu0 %705
        %v707 = vsel %vm597, %v693, 0.0
        %708 = vadd.xlane.f32.xlu0 %v707
        %v709 = vpop.xlane.xlu0 %708
        %v710 = vsel %vm597, %v694, 0.0
        %711 = vadd.xlane.f32.xlu0 %v710
        %v712 = vpop.xlane.xlu0 %711
        %v713 = vsel %vm597, %v695, 0.0
        %714 = vadd.xlane.f32.xlu0 %v713
        %v715 = vpop.xlane.xlu0 %714
        %v716 = vsel %vm597, %v696, 0.0
        %717 = vadd.xlane.f32.xlu0 %v716
        %v718 = vpop.xlane.xlu0 %717
        %v719 = vsel %vm597, %v697, 0.0
        %720 = vadd.xlane.f32.xlu0 %v719
        %v721 = vpop.xlane.xlu0 %720
        %v730 = vlaneseq
        %v731 = vand.u32 %v730, 127
        %v732 = vlaneseq
        %v733 = vshrl.u32 %v732, 7
        %v734 = vsub.s32 %v731, %v733
        %v735 = vrot.slane %v700, %v734
        %v736 = vadd.s32 %v731, 4294967288
        %v737 = vlaneseq
        %v738 = vshrl.u32 %v737, 7
        %v739 = vsub.s32 %v736, %v738
        %v740 = vrot.slane %v703, %v739
        %vm741 = vcmask 130112
        %v742 = vsel %vm741, %v740, %v735
        %v743 = vlaneseq
        %v744 = vshrl.u32 %v743, 7
        %v745 = vsub.s32 %v731, %v744
        %v746 = vrot.slane %v706, %v745
        %v747 = vlaneseq
        %v748 = vshrl.u32 %v747, 7
        %v749 = vsub.s32 %v736, %v748
        %v750 = vrot.slane %v709, %v749
        %v751 = vsel %vm741, %v750, %v746
        %v752 = vlaneseq
        %v753 = vshrl.u32 %v752, 7
        %v754 = vsub.s32 %v731, %v753
        %v755 = vrot.slane %v712, %v754
        %v756 = vlaneseq
        %v757 = vshrl.u32 %v756, 7
        %v758 = vsub.s32 %v736, %v757
        %v759 = vrot.slane %v715, %v758
        %v760 = vsel %vm741, %v759, %v755
        %v761 = vlaneseq
        %v762 = vshrl.u32 %v761, 7
        %v763 = vsub.s32 %v731, %v762
        %v764 = vrot.slane %v718, %v763
        %v765 = vlaneseq
        %v766 = vshrl.u32 %v765, 7
        %v767 = vsub.s32 %v736, %v766
        %v768 = vrot.slane %v721, %v767
        %v769 = vsel %vm741, %v768, %v764
        %vm770 = vcmask 1041409
        %v771 = vsel %vm770, %v751, %v742
        %vm772 = vcmask 1042434
        %v773 = vsel %vm772, %v760, %v771
        %vm774 = vcmask 1043459
        %v775 = vsel %vm774, %v769, %v773
        %vm777 = vcmask 125952
        %v778 = vsel %vm777, %v775, -inf
        %779 = vmax.xlane.f32.xlu0 %v778
        %v780 = vpop.xlane.xlu0 %779
        %v782 = vlaneseq
        %v783 = vshrl.u32 %v782, 7
        %v784 = vsub.s32 0, %v783
        %v785 = vrot.slane %v780, %v784
        %v786 = vlaneseq
        %v787 = vshrl.u32 %v786, 7
        %v788 = vsub.s32 1, %v787
        %v789 = vrot.slane %v780, %v788
        %v790 = vlaneseq
        %v791 = vshrl.u32 %v790, 7
        %v792 = vsub.s32 2, %v791
        %v793 = vrot.slane %v780, %v792
        %v794 = vlaneseq
        %v795 = vshrl.u32 %v794, 7
        %v796 = vsub.s32 3, %v795
        %v797 = vrot.slane %v780, %v796
        %v802 = vsub.f32 %v700, %v785
        %v803 = vsub.f32 %v703, %v785
        %v804 = vsub.f32 %v706, %v789
        %v805 = vsub.f32 %v709, %v789
        %v806 = vsub.f32 %v712, %v793
        %v807 = vsub.f32 %v715, %v793
        %v808 = vsub.f32 %v718, %v797
        %v809 = vsub.f32 %v721, %v797
        %v810 = vmul.f32 %v802, 1.442695
        %v811 = vpow.pop %v810
        %v812 = vmul.f32 %v803, 1.442695
        %v813 = vpow.pop %v812
        %v814 = vmul.f32 %v804, 1.442695
        %v815 = vpow.pop %v814
        %v816 = vmul.f32 %v805, 1.442695
        %v817 = vpow.pop %v816
        %v818 = vmul.f32 %v806, 1.442695
        %v819 = vpow.pop %v818
        %v820 = vmul.f32 %v807, 1.442695
        %v821 = vpow.pop %v820
        %v822 = vmul.f32 %v808, 1.442695
        %v823 = vpow.pop %v822
        %v824 = vmul.f32 %v809, 1.442695
        %v825 = vpow.pop %v824
        %834 = vset.pattern.permute.xlu0 0
        %835 = vperm.xlu0 %834, %v811
        %v836 = vpop.permute.xlu0 %835
        %837 = vset.pattern.permute.xlu0 0
        %838 = vperm.xlu0 %837, %v813
        %v839 = vpop.permute.xlu0 %838
        %840 = vset.pattern.permute.xlu0 0
        %841 = vperm.xlu0 %840, %v815
        %v842 = vpop.permute.xlu0 %841
        %843 = vset.pattern.permute.xlu0 0
        %844 = vperm.xlu0 %843, %v817
        %v845 = vpop.permute.xlu0 %844
        %846 = vset.pattern.permute.xlu0 0
        %847 = vperm.xlu0 %846, %v819
        %v848 = vpop.permute.xlu0 %847
        %849 = vset.pattern.permute.xlu0 0
        %850 = vperm.xlu0 %849, %v821
        %v851 = vpop.permute.xlu0 %850
        %852 = vset.pattern.permute.xlu0 0
        %853 = vperm.xlu0 %852, %v823
        %v854 = vpop.permute.xlu0 %853
        %855 = vset.pattern.permute.xlu0 0
        %856 = vperm.xlu0 %855, %v825
        %v857 = vpop.permute.xlu0 %856
        %v858 = vlaneseq
        %v859 = vshrl.u32 %v858, 7
        %v860 = vsub.s32 %v731, %v859
        %v861 = vrot.slane %v836, %v860
        %v862 = vlaneseq
        %v863 = vshrl.u32 %v862, 7
        %v864 = vsub.s32 %v736, %v863
        %v865 = vrot.slane %v839, %v864
        %v866 = vsel %vm741, %v865, %v861
        %v867 = vlaneseq
        %v868 = vshrl.u32 %v867, 7
        %v869 = vsub.s32 %v731, %v868
        %v870 = vrot.slane %v842, %v869
        %v871 = vlaneseq
        %v872 = vshrl.u32 %v871, 7
        %v873 = vsub.s32 %v736, %v872
        %v874 = vrot.slane %v845, %v873
        %v875 = vsel %vm741, %v874, %v870
        %v876 = vlaneseq
        %v877 = vshrl.u32 %v876, 7
        %v878 = vsub.s32 %v731, %v877
        %v879 = vrot.slane %v848, %v878
        %v880 = vlaneseq
        %v881 = vshrl.u32 %v880, 7
        %v882 = vsub.s32 %v736, %v881
        %v883 = vrot.slane %v851, %v882
        %v884 = vsel %vm741, %v883, %v879
        %v885 = vlaneseq
        %v886 = vshrl.u32 %v885, 7
        %v887 = vsub.s32 %v731, %v886
        %v888 = vrot.slane %v854, %v887
        %v889 = vlaneseq
        %v890 = vshrl.u32 %v889, 7
        %v891 = vsub.s32 %v736, %v890
        %v892 = vrot.slane %v857, %v891
        %v893 = vsel %vm741, %v892, %v888
        %v894 = vsel %vm770, %v875, %v866
        %v895 = vsel %vm772, %v884, %v894
        %v896 = vsel %vm774, %v893, %v895
        %v898 = vsel %vm777, %v896, 0.0
        %899 = vadd.xlane.f32.xlu0 %v898
        %v900 = vpop.xlane.xlu0 %899
        %v901 = vrcp.pop %v900
        %v903 = vlaneseq
        %v904 = vshrl.u32 %v903, 7
        %v905 = vsub.s32 0, %v904
        %v906 = vrot.slane %v901, %v905
        %v907 = vlaneseq
        %v908 = vshrl.u32 %v907, 7
        %v909 = vsub.s32 1, %v908
        %v910 = vrot.slane %v901, %v909
        %v911 = vlaneseq
        %v912 = vshrl.u32 %v911, 7
        %v913 = vsub.s32 2, %v912
        %v914 = vrot.slane %v901, %v913
        %v915 = vlaneseq
        %v916 = vshrl.u32 %v915, 7
        %v917 = vsub.s32 3, %v916
        %v918 = vrot.slane %v901, %v917
        %v923 = vmul.f32 %v811, %v906
        %v924 = vmul.f32 %v813, %v906
        %v925 = vmul.f32 %v815, %v910
        %v926 = vmul.f32 %v817, %v910
        %v927 = vmul.f32 %v819, %v914
        %v928 = vmul.f32 %v821, %v914
        %v929 = vmul.f32 %v823, %v918
        %v930 = vmul.f32 %v825, %v918
        %932 = vset.pattern.permute.xlu0 0
        %933 = vperm.xlu0 %932, %v923
        %v934 = vpop.permute.xlu0 %933
        %937 = vset.pattern.permute.xlu0 0
        %938 = vperm.xlu0 %937, %v924
        %v939 = vpop.permute.xlu0 %938
        %942 = vset.pattern.permute.xlu0 0
        %943 = vperm.xlu0 %942, %v925
        %v944 = vpop.permute.xlu0 %943
        %947 = vset.pattern.permute.xlu0 0
        %948 = vperm.xlu0 %947, %v926
        %v949 = vpop.permute.xlu0 %948
        %952 = vset.pattern.permute.xlu0 0
        %953 = vperm.xlu0 %952, %v927
        %v954 = vpop.permute.xlu0 %953
        %957 = vset.pattern.permute.xlu0 0
        %958 = vperm.xlu0 %957, %v928
        %v959 = vpop.permute.xlu0 %958
        %962 = vset.pattern.permute.xlu0 0
        %963 = vperm.xlu0 %962, %v929
        %v964 = vpop.permute.xlu0 %963
        %967 = vset.pattern.permute.xlu0 0
        %968 = vperm.xlu0 %967, %v930
        %v969 = vpop.permute.xlu0 %968
        %v971 = vmul.f32 %v572, %v934
        %v972 = vmul.f32 %v573, %v939
        %v973 = vmul.f32 %v574, %v944
        %v974 = vmul.f32 %v575, %v949
        %v975 = vmul.f32 %v576, %v954
        %v976 = vmul.f32 %v577, %v959
        %v977 = vmul.f32 %v578, %v964
        %v978 = vmul.f32 %v579, %v969
        %v979 = vsel %vm597, %v971, 0.0
        %v980 = vsel %vm597, %v972, 0.0
        %v981 = vadd.f32 %v979, %v980
        %v982 = vrot.slane %v981, 4
        %v983 = vadd.f32 %v981, %v982
        %v984 = vrot.slane %v983, 2
        %v985 = vadd.f32 %v983, %v984
        %v986 = vrot.slane %v985, 1
        %v987 = vadd.f32 %v985, %v986
        %v988 = vsel %vm597, %v973, 0.0
        %v989 = vsel %vm597, %v974, 0.0
        %v990 = vadd.f32 %v988, %v989
        %v991 = vrot.slane %v990, 4
        %v992 = vadd.f32 %v990, %v991
        %v993 = vrot.slane %v992, 2
        %v994 = vadd.f32 %v992, %v993
        %v995 = vrot.slane %v994, 1
        %v996 = vadd.f32 %v994, %v995
        %v997 = vsel %vm597, %v975, 0.0
        %v998 = vsel %vm597, %v976, 0.0
        %v999 = vadd.f32 %v997, %v998
        %v1000 = vrot.slane %v999, 4
        %v1001 = vadd.f32 %v999, %v1000
        %v1002 = vrot.slane %v1001, 2
        %v1003 = vadd.f32 %v1001, %v1002
        %v1004 = vrot.slane %v1003, 1
        %v1005 = vadd.f32 %v1003, %v1004
        %v1006 = vsel %vm597, %v977, 0.0
        %v1007 = vsel %vm597, %v978, 0.0
        %v1008 = vadd.f32 %v1006, %v1007
        %v1009 = vrot.slane %v1008, 4
        %v1010 = vadd.f32 %v1008, %v1009
        %v1011 = vrot.slane %v1010, 2
        %v1012 = vadd.f32 %v1010, %v1011
        %v1013 = vrot.slane %v1012, 1
        %v1014 = vadd.f32 %v1012, %v1013
        %v1019 = vsel %vm770, %v996, %v987
        %v1020 = vsel %vm772, %v1005, %v1019
        %v1021 = vsel %vm774, %v1014, %v1020
        %vm1023 = vcmask 257024
        %v1024 = vsel %vm1023, %v1021, 0.0
        %1025 = vadd.xlane.f32.xlu0 %v1024
        %v1026 = vpop.xlane.xlu0 %1025
        %v1027 = vrcp.pop 32.0
        %v1028 = vmul.f32 %v1026, %v1027
        %v1030 = vrot.slane %v1028, 1
        %v1031 = vrot.slane %v1028, 2
        %v1032 = vrot.slane %v1028, 3
        %v1037 = vsub.f32 %v987, %v1028
        %v1038 = vsub.f32 %v996, %v1030
        %v1039 = vsub.f32 %v1005, %v1031
        %v1040 = vsub.f32 %v1014, %v1032
        %v1041 = vmul.f32 %v1037, %v1037
        %v1042 = vmul.f32 %v1038, %v1038
        %v1043 = vmul.f32 %v1039, %v1039
        %v1044 = vmul.f32 %v1040, %v1040
        %v1049 = vrot.slane %v1042, 7
        %v1050 = vsel %vm770, %v1049, %v1041
        %v1051 = vrot.slane %v1043, 6
        %v1052 = vsel %vm772, %v1051, %v1050
        %v1053 = vrot.slane %v1044, 5
        %v1054 = vsel %vm774, %v1053, %v1052
        %v1056 = vsel %vm1023, %v1054, 0.0
        %1057 = vadd.xlane.f32.xlu0 %v1056
        %v1058 = vpop.xlane.xlu0 %1057
        %v1059 = vmul.f32 %v1058, %v1027
        %v1060 = vadd.f32 %v1059, 1e-05
        %v1061 = vrsqrt.pop %v1060
        %v1063 = vrot.slane %v1061, 1
        %v1064 = vrot.slane %v1061, 2
        %v1065 = vrot.slane %v1061, 3
        %v1070 = vmul.f32 %v1037, %v1061
        %v1071 = vmul.f32 %v1038, %v1063
        %v1072 = vmul.f32 %v1039, %v1064
        %v1073 = vmul.f32 %v1040, %v1065
        %v1074 = vld [vmem:[%s8] sm:$0x1]
        %v1076 = vlaneseq
        %v1077 = vshrl.u32 %v1076, 7
        %v1078 = vsub.s32 0, %v1077
        %v1079 = vrot.slane %v1074, %v1078
        %v1081 = vmul.f32 %v1070, %v1079
        %v1082 = vmul.f32 %v1071, %v1079
        %v1083 = vmul.f32 %v1072, %v1079
        %v1084 = vmul.f32 %v1073, %v1079
        %v1085 = vld [vmem:[%s9] sm:$0x1]
        %v1087 = vlaneseq
        %v1088 = vshrl.u32 %v1087, 7
        %v1089 = vsub.s32 0, %v1088
        %v1090 = vrot.slane %v1085, %v1089
        %v1092 = vadd.f32 %v1081, %v1090
        %v1093 = vadd.f32 %v1082, %v1090
        %v1094 = vadd.f32 %v1083, %v1090
        %v1095 = vadd.f32 %v1084, %v1090
        %v1096 = vld [vmem:[%s464] sm:$0xff]
        %v1097 = vld [vmem:[%s464 + $0x8] sm:$0xff]
        %v1098 = vld [vmem:[%s464 + $0x10] sm:$0xff]
        %v1099 = vld [vmem:[%s464 + $0x18] sm:$0xff]
        %v1100 = vld [vmem:[%s464 + $0x20] sm:$0xff]
        %v1101 = vld [vmem:[%s464 + $0x28] sm:$0xff]
        %v1102 = vld [vmem:[%s464 + $0x30] sm:$0xff]
        %v1103 = vld [vmem:[%s464 + $0x38] sm:$0xff]
        %v1104 = vld [vmem:[%s464 + $0x40] sm:$0xff]
        %v1105 = vld [vmem:[%s464 + $0x48] sm:$0xff]
        %v1106 = vld [vmem:[%s464 + $0x50] sm:$0xff]
        %v1107 = vld [vmem:[%s464 + $0x58] sm:$0xff]
        %v1108 = vld [vmem:[%s464 + $0x60] sm:$0xff]
        %v1109 = vld [vmem:[%s464 + $0x68] sm:$0xff]
        %v1110 = vld [vmem:[%s464 + $0x70] sm:$0xff]
        %v1111 = vld [vmem:[%s464 + $0x78] sm:$0xff]
        %v1112 = vpack.c.bf16 %v1097, %v1096
        %v1113 = vpack.c.bf16 %v1099, %v1098
        %v1114 = vpack.c.bf16 %v1101, %v1100
        %v1115 = vpack.c.bf16 %v1103, %v1102
        %v1116 = vpack.c.bf16 %v1105, %v1104
        %v1117 = vpack.c.bf16 %v1107, %v1106
        %v1118 = vpack.c.bf16 %v1109, %v1108
        %v1119 = vpack.c.bf16 %v1111, %v1110
        %s1120 = scalar_lea.vmem %s3, 48
        %v1121 = vld [vmem:[%s1120] sm:$0xff]
        %v1122 = vld [vmem:[%s1120 + $0x8] sm:$0xff]
        %v1123 = vld [vmem:[%s1120 + $0x10] sm:$0xff]
        %v1124 = vld [vmem:[%s1120 + $0x18] sm:$0xff]
        %v1125 = vld [vmem:[%s1120 + $0x20] sm:$0xff]
        %v1126 = vld [vmem:[%s1120 + $0x28] sm:$0xff]
        %v1127 = vpack.c.bf16 %v1122, %v1121
        %v1128 = vpack.c.bf16 %v1124, %v1123
        %v1129 = vpack.c.bf16 %v1126, %v1125
        %s1130 = scalar_lea.vmem %s4, 1
        %v1131 = vld [vmem:[%s1130] sm:$0x1]
        %v1133 = vlaneseq
        %v1134 = vshrl.u32 %v1133, 7
        %v1135 = vsub.s32 0, %v1134
        %v1136 = vrot.slane %v1131, %v1135
        %v1139 = vsel %vm494, %v1112, 0
        %v1142 = vsel %vm494, %v1113, 0
        %v1145 = vsel %vm494, %v1114, 0
        %v1148 = vsel %vm494, %v1115, 0
        %v1151 = vsel %vm494, %v1116, 0
        %v1154 = vsel %vm494, %v1117, 0
        %v1157 = vsel %vm494, %v1118, 0
        %v1160 = vsel %vm494, %v1119, 0
        %1162 = vmatprep.subr.bf16.mxu0 0
        %1163 = vmatpush1.bf16.msra.mxu0 %v1127
        %1164 = vmatprep.subr.bf16.mxu0 0
        %1165 = vmatpush1.bf16.msra.mxu0 %v1128
        %1166 = vmatprep.subr.bf16.mxu0 0
        %1167 = vmatpush1.bf16.msra.mxu0 %v1129
        %1168 = vmatprep.subr.bf16.mxu0 0
        %1169 = vmatpush1.bf16.msra.mxu0 0
        %1170 = vmatprep.subr.bf16.mxu0 0
        %1171 = vmatpush1.bf16.msra.mxu0 0
        %1172 = vmatprep.subr.bf16.mxu0 0
        %1173 = vmatpush1.bf16.msra.mxu0 0
        %1174 = vmatprep.subr.bf16.mxu0 0
        %1175 = vmatpush1.bf16.msra.mxu0 0
        %1176 = vmatprep.subr.bf16.mxu0 0
        %1177 = vmatpush1.bf16.msra.mxu0 0
        %1178 = vmatprep.subr.bf16.mxu0 0
        %1179 = vmatpush1.bf16.msra.mxu0 0
        %1180 = vmatprep.subr.bf16.mxu0 0
        %1181 = vmatpush1.bf16.msra.mxu0 0
        %1182 = vmatprep.subr.bf16.mxu0 0
        %1183 = vmatpush1.bf16.msra.mxu0 0
        %1184 = vmatprep.subr.bf16.mxu0 0
        %1185 = vmatpush1.bf16.msra.mxu0 0
        %1186 = vmatprep.subr.bf16.mxu0 0
        %1187 = vmatpush1.bf16.msra.mxu0 0
        %1188 = vmatprep.subr.bf16.mxu0 0
        %1189 = vmatpush1.bf16.msra.mxu0 0
        %1190 = vmatprep.subr.bf16.mxu0 0
        %1191 = vmatpush1.bf16.msra.mxu0 0
        %1192 = vmatprep.subr.bf16.mxu0 0
        %1193 = vmatpush1.bf16.msra.mxu0 0
        %1194 = vmatprep.mubr.bf16.mxu0 0
        %1195 = vmatmul.mubr.bf16.gmra.mrb[0].mxu0 %v1139
        %v1196 = vpop.f32.mrb[0].mxu0
        %v1197 = vadd.f32 %v1136, %v1196
        %v1198 = vpop.f32.mrb[0].mxu0
        %v1199 = vpop.f32.mrb[0].mxu0
        %v1200 = vadd.f32 %v1136, %v1199
        %v1201 = vpop.f32.mrb[0].mxu0
        %1202 = vmatprep.mubr.bf16.mxu0 0
        %1203 = vmatmul.mubr.bf16.gmra.mrb[0].mxu0 %v1142
        %v1204 = vpop.f32.mrb[0].mxu0
        %v1205 = vadd.f32 %v1136, %v1204
        %v1206 = vpop.f32.mrb[0].mxu0
        %v1207 = vpop.f32.mrb[0].mxu0
        %v1208 = vadd.f32 %v1136, %v1207
        %v1209 = vpop.f32.mrb[0].mxu0
        %1210 = vmatprep.mubr.bf16.mxu0 0
        %1211 = vmatmul.mubr.bf16.gmra.mrb[0].mxu0 %v1145
        %v1212 = vpop.f32.mrb[0].mxu0
        %v1213 = vadd.f32 %v1136, %v1212
        %v1214 = vpop.f32.mrb[0].mxu0
        %v1215 = vpop.f32.mrb[0].mxu0
        %v1216 = vadd.f32 %v1136, %v1215
        %v1217 = vpop.f32.mrb[0].mxu0
        %1218 = vmatprep.mubr.bf16.mxu0 0
        %1219 = vmatmul.mubr.bf16.gmra.mrb[0].mxu0 %v1148
        %v1220 = vpop.f32.mrb[0].mxu0
        %v1221 = vadd.f32 %v1136, %v1220
        %v1222 = vpop.f32.mrb[0].mxu0
        %v1223 = vpop.f32.mrb[0].mxu0
        %v1224 = vadd.f32 %v1136, %v1223
        %v1225 = vpop.f32.mrb[0].mxu0
        %1226 = vmatprep.mubr.bf16.mxu0 0
        %1227 = vmatmul.mubr.bf16.gmra.mrb[0].mxu0 %v1151
        %v1228 = vpop.f32.mrb[0].mxu0
        %v1229 = vadd.f32 %v1136, %v1228
        %v1230 = vpop.f32.mrb[0].mxu0
        %v1231 = vpop.f32.mrb[0].mxu0
        %v1232 = vadd.f32 %v1136, %v1231
        %v1233 = vpop.f32.mrb[0].mxu0
        %1234 = vmatprep.mubr.bf16.mxu0 0
        %1235 = vmatmul.mubr.bf16.gmra.mrb[0].mxu0 %v1154
        %v1236 = vpop.f32.mrb[0].mxu0
        %v1237 = vadd.f32 %v1136, %v1236
        %v1238 = vpop.f32.mrb[0].mxu0
        %v1239 = vpop.f32.mrb[0].mxu0
        %v1240 = vadd.f32 %v1136, %v1239
        %v1241 = vpop.f32.mrb[0].mxu0
        %1242 = vmatprep.mubr.bf16.mxu0 0
        %1243 = vmatmul.mubr.bf16.gmra.mrb[0].mxu0 %v1157
        %v1244 = vpop.f32.mrb[0].mxu0
        %v1245 = vadd.f32 %v1136, %v1244
        %v1246 = vpop.f32.mrb[0].mxu0
        %v1247 = vpop.f32.mrb[0].mxu0
        %v1248 = vadd.f32 %v1136, %v1247
        %v1249 = vpop.f32.mrb[0].mxu0
        %1250 = vmatprep.mubr.bf16.mxu0 0
        %1251 = vmatmul.mubr.bf16.gmra.mrb[0].mxu0 %v1160
        %v1252 = vpop.f32.mrb[0].mxu0
        %v1253 = vadd.f32 %v1136, %v1252
        %v1254 = vpop.f32.mrb[0].mxu0
        %v1255 = vpop.f32.mrb[0].mxu0
        %v1256 = vadd.f32 %v1136, %v1255
        %v1257 = vpop.f32.mrb[0].mxu0
        %1258 = vdwg.mxu0
        %v1259 = vmax.f32 %v1197, 0.0
        %v1260 = vmax.f32 %v1200, 0.0
        %v1261 = vmax.f32 %v1205, 0.0
        %v1262 = vmax.f32 %v1208, 0.0
        %v1263 = vmax.f32 %v1213, 0.0
        %v1264 = vmax.f32 %v1216, 0.0
        %v1265 = vmax.f32 %v1221, 0.0
        %v1266 = vmax.f32 %v1224, 0.0
        %v1267 = vmax.f32 %v1229, 0.0
        %v1268 = vmax.f32 %v1232, 0.0
        %v1269 = vmax.f32 %v1237, 0.0
        %v1270 = vmax.f32 %v1240, 0.0
        %v1271 = vmax.f32 %v1245, 0.0
        %v1272 = vmax.f32 %v1248, 0.0
        %v1273 = vmax.f32 %v1253, 0.0
        %v1274 = vmax.f32 %v1256, 0.0
        %v1275 = vpack.c.bf16 %v1260, %v1259
        %v1276 = vpack.c.bf16 %v1262, %v1261
        %v1277 = vpack.c.bf16 %v1264, %v1263
        %v1278 = vpack.c.bf16 %v1266, %v1265
        %v1279 = vpack.c.bf16 %v1268, %v1267
        %v1280 = vpack.c.bf16 %v1270, %v1269
        %v1281 = vpack.c.bf16 %v1272, %v1271
        %v1282 = vpack.c.bf16 %v1274, %v1273
        %s1283 = scalar_lea.vmem %s5, 32
        %v1284 = vld [vmem:[%s1283] sm:$0xff]
        %v1285 = vld [vmem:[%s1283 + $0x8] sm:$0xff]
        %v1286 = vld [vmem:[%s1283 + $0x10] sm:$0xff]
        %v1287 = vld [vmem:[%s1283 + $0x18] sm:$0xff]
        %v1288 = vpack.c.bf16 %v1285, %v1284
        %v1289 = vpack.c.bf16 %v1287, %v1286
        %s1290 = scalar_lea.vmem %s6, 1
        %v1291 = vld [vmem:[%s1290] sm:$0x1]
        %v1293 = vlaneseq
        %v1294 = vshrl.u32 %v1293, 7
        %v1295 = vsub.s32 0, %v1294
        %v1296 = vrot.slane %v1291, %v1295
        %v1299 = vsel %vm597, %v1275, 0
        %v1302 = vsel %vm597, %v1276, 0
        %v1305 = vsel %vm597, %v1277, 0
        %v1308 = vsel %vm597, %v1278, 0
        %v1311 = vsel %vm597, %v1279, 0
        %v1314 = vsel %vm597, %v1280, 0
        %v1317 = vsel %vm597, %v1281, 0
        %v1320 = vsel %vm597, %v1282, 0
        %1322 = vmatprep.subr.bf16.mxu0 0
        %1323 = vmatpush1.bf16.msra.mxu0 %v1288
        %1324 = vmatprep.subr.bf16.mxu0 0
        %1325 = vmatpush1.bf16.msra.mxu0 %v1289
        %1326 = vmatprep.subr.bf16.mxu0 0
        %1327 = vmatpush1.bf16.msra.mxu0 0
        %1328 = vmatprep.subr.bf16.mxu0 0
        %1329 = vmatpush1.bf16.msra.mxu0 0
        %1330 = vmatprep.subr.bf16.mxu0 0
        %1331 = vmatpush1.bf16.msra.mxu0 0
        %1332 = vmatprep.subr.bf16.mxu0 0
        %1333 = vmatpush1.bf16.msra.mxu0 0
        %1334 = vmatprep.subr.bf16.mxu0 0
        %1335 = vmatpush1.bf16.msra.mxu0 0
        %1336 = vmatprep.subr.bf16.mxu0 0
        %1337 = vmatpush1.bf16.msra.mxu0 0
        %1338 = vmatprep.subr.bf16.mxu0 0
        %1339 = vmatpush1.bf16.msra.mxu0 0
        %1340 = vmatprep.subr.bf16.mxu0 0
        %1341 = vmatpush1.bf16.msra.mxu0 0
        %1342 = vmatprep.subr.bf16.mxu0 0
        %1343 = vmatpush1.bf16.msra.mxu0 0
        %1344 = vmatprep.subr.bf16.mxu0 0
        %1345 = vmatpush1.bf16.msra.mxu0 0
        %1346 = vmatprep.subr.bf16.mxu0 0
        %1347 = vmatpush1.bf16.msra.mxu0 0
        %1348 = vmatprep.subr.bf16.mxu0 0
        %1349 = vmatpush1.bf16.msra.mxu0 0
        %1350 = vmatprep.subr.bf16.mxu0 0
        %1351 = vmatpush1.bf16.msra.mxu0 0
        %1352 = vmatprep.subr.bf16.mxu0 0
        %1353 = vmatpush1.bf16.msra.mxu0 0
        %1354 = vmatprep.mubr.bf16.mxu0 0
        %1355 = vmatmul.mubr.bf16.gmra.mrb[0].mxu0 %v1299
        %v1356 = vpop.f32.mrb[0].mxu0
        %v1357 = vadd.f32 %v1296, %v1356
        %v1358 = vpop.f32.mrb[0].mxu0
        %v1359 = vpop.f32.mrb[0].mxu0
        %v1360 = vadd.f32 %v1296, %v1359
        %v1361 = vpop.f32.mrb[0].mxu0
        %1362 = vmatprep.mubr.bf16.mxu0 0
        %1363 = vmatmul.mubr.bf16.gmra.mrb[0].mxu0 %v1302
        %v1364 = vpop.f32.mrb[0].mxu0
        %v1365 = vadd.f32 %v1296, %v1364
        %v1366 = vpop.f32.mrb[0].mxu0
        %v1367 = vpop.f32.mrb[0].mxu0
        %v1368 = vadd.f32 %v1296, %v1367
        %v1369 = vpop.f32.mrb[0].mxu0
        %1370 = vmatprep.mubr.bf16.mxu0 0
        %1371 = vmatmul.mubr.bf16.gmra.mrb[0].mxu0 %v1305
        %v1372 = vpop.f32.mrb[0].mxu0
        %v1373 = vadd.f32 %v1296, %v1372
        %v1374 = vpop.f32.mrb[0].mxu0
        %v1375 = vpop.f32.mrb[0].mxu0
        %v1376 = vadd.f32 %v1296, %v1375
        %v1377 = vpop.f32.mrb[0].mxu0
        %1378 = vmatprep.mubr.bf16.mxu0 0
        %1379 = vmatmul.mubr.bf16.gmra.mrb[0].mxu0 %v1308
        %v1380 = vpop.f32.mrb[0].mxu0
        %v1381 = vadd.f32 %v1296, %v1380
        %v1382 = vpop.f32.mrb[0].mxu0
        %v1383 = vpop.f32.mrb[0].mxu0
        %v1384 = vadd.f32 %v1296, %v1383
        %v1385 = vpop.f32.mrb[0].mxu0
        %1386 = vmatprep.mubr.bf16.mxu0 0
        %1387 = vmatmul.mubr.bf16.gmra.mrb[0].mxu0 %v1311
        %v1388 = vpop.f32.mrb[0].mxu0
        %v1389 = vadd.f32 %v1296, %v1388
        %v1390 = vpop.f32.mrb[0].mxu0
        %v1391 = vpop.f32.mrb[0].mxu0
        %v1392 = vadd.f32 %v1296, %v1391
        %v1393 = vpop.f32.mrb[0].mxu0
        %1394 = vmatprep.mubr.bf16.mxu0 0
        %1395 = vmatmul.mubr.bf16.gmra.mrb[0].mxu0 %v1314
        %v1396 = vpop.f32.mrb[0].mxu0
        %v1397 = vadd.f32 %v1296, %v1396
        %v1398 = vpop.f32.mrb[0].mxu0
        %v1399 = vpop.f32.mrb[0].mxu0
        %v1400 = vadd.f32 %v1296, %v1399
        %v1401 = vpop.f32.mrb[0].mxu0
        %1402 = vmatprep.mubr.bf16.mxu0 0
        %1403 = vmatmul.mubr.bf16.gmra.mrb[0].mxu0 %v1317
        %v1404 = vpop.f32.mrb[0].mxu0
        %v1405 = vadd.f32 %v1296, %v1404
        %v1406 = vpop.f32.mrb[0].mxu0
        %v1407 = vpop.f32.mrb[0].mxu0
        %v1408 = vadd.f32 %v1296, %v1407
        %v1409 = vpop.f32.mrb[0].mxu0
        %1410 = vmatprep.mubr.bf16.mxu0 0
        %1411 = vmatmul.mubr.bf16.gmra.mrb[0].mxu0 %v1320
        %v1412 = vpop.f32.mrb[0].mxu0
        %v1413 = vadd.f32 %v1296, %v1412
        %v1414 = vpop.f32.mrb[0].mxu0
        %v1415 = vpop.f32.mrb[0].mxu0
        %v1416 = vadd.f32 %v1296, %v1415
        %v1417 = vpop.f32.mrb[0].mxu0
        %1418 = vdwg.mxu0
        %v1419 = vtanh.pop %v1357
        %v1420 = vtanh.pop %v1360
        %v1421 = vtanh.pop %v1365
        %v1422 = vtanh.pop %v1368
        %v1423 = vtanh.pop %v1373
        %v1424 = vtanh.pop %v1376
        %v1425 = vtanh.pop %v1381
        %v1426 = vtanh.pop %v1384
        %v1427 = vtanh.pop %v1389
        %v1428 = vtanh.pop %v1392
        %v1429 = vtanh.pop %v1397
        %v1430 = vtanh.pop %v1400
        %v1431 = vtanh.pop %v1405
        %v1432 = vtanh.pop %v1408
        %v1433 = vtanh.pop %v1413
        %v1434 = vtanh.pop %v1416
        %s1435 = scalar_lea.vmem %s7, 1
        %v1436 = vld [vmem:[%s1435] sm:$0x1]
        %v1438 = vlaneseq
        %v1439 = vshrl.u32 %v1438, 7
        %v1440 = vsub.s32 0, %v1439
        %v1441 = vrot.slane %v1436, %v1440
        %v1443 = vmul.f32 %v1419, %v1441
        %v1444 = vmul.f32 %v1420, %v1441
        %v1445 = vmul.f32 %v1421, %v1441
        %v1446 = vmul.f32 %v1422, %v1441
        %v1447 = vmul.f32 %v1423, %v1441
        %v1448 = vmul.f32 %v1424, %v1441
        %v1449 = vmul.f32 %v1425, %v1441
        %v1450 = vmul.f32 %v1426, %v1441
        %v1451 = vmul.f32 %v1427, %v1441
        %v1452 = vmul.f32 %v1428, %v1441
        %v1453 = vmul.f32 %v1429, %v1441
        %v1454 = vmul.f32 %v1430, %v1441
        %v1455 = vmul.f32 %v1431, %v1441
        %v1456 = vmul.f32 %v1432, %v1441
        %v1457 = vmul.f32 %v1433, %v1441
        %v1458 = vmul.f32 %v1434, %v1441
        %v1459 = vsel %vm597, %v1443, 0.0
        %1460 = vadd.xlane.f32.xlu0 %v1459
        %v1461 = vpop.xlane.xlu0 %1460
        %v1462 = vsel %vm597, %v1444, 0.0
        %1463 = vadd.xlane.f32.xlu0 %v1462
        %v1464 = vpop.xlane.xlu0 %1463
        %v1465 = vsel %vm597, %v1445, 0.0
        %1466 = vadd.xlane.f32.xlu0 %v1465
        %v1467 = vpop.xlane.xlu0 %1466
        %v1468 = vsel %vm597, %v1446, 0.0
        %1469 = vadd.xlane.f32.xlu0 %v1468
        %v1470 = vpop.xlane.xlu0 %1469
        %v1471 = vsel %vm597, %v1447, 0.0
        %1472 = vadd.xlane.f32.xlu0 %v1471
        %v1473 = vpop.xlane.xlu0 %1472
        %v1474 = vsel %vm597, %v1448, 0.0
        %1475 = vadd.xlane.f32.xlu0 %v1474
        %v1476 = vpop.xlane.xlu0 %1475
        %v1477 = vsel %vm597, %v1449, 0.0
        %1478 = vadd.xlane.f32.xlu0 %v1477
        %v1479 = vpop.xlane.xlu0 %1478
        %v1480 = vsel %vm597, %v1450, 0.0
        %1481 = vadd.xlane.f32.xlu0 %v1480
        %v1482 = vpop.xlane.xlu0 %1481
        %v1483 = vsel %vm597, %v1451, 0.0
        %1484 = vadd.xlane.f32.xlu0 %v1483
        %v1485 = vpop.xlane.xlu0 %1484
        %v1486 = vsel %vm597, %v1452, 0.0
        %1487 = vadd.xlane.f32.xlu0 %v1486
        %v1488 = vpop.xlane.xlu0 %1487
        %v1489 = vsel %vm597, %v1453, 0.0
        %1490 = vadd.xlane.f32.xlu0 %v1489
        %v1491 = vpop.xlane.xlu0 %1490
        %v1492 = vsel %vm597, %v1454, 0.0
        %1493 = vadd.xlane.f32.xlu0 %v1492
        %v1494 = vpop.xlane.xlu0 %1493
        %v1495 = vsel %vm597, %v1455, 0.0
        %1496 = vadd.xlane.f32.xlu0 %v1495
        %v1497 = vpop.xlane.xlu0 %1496
        %v1498 = vsel %vm597, %v1456, 0.0
        %1499 = vadd.xlane.f32.xlu0 %v1498
        %v1500 = vpop.xlane.xlu0 %1499
        %v1501 = vsel %vm597, %v1457, 0.0
        %1502 = vadd.xlane.f32.xlu0 %v1501
        %v1503 = vpop.xlane.xlu0 %1502
        %v1504 = vsel %vm597, %v1458, 0.0
        %1505 = vadd.xlane.f32.xlu0 %v1504
        %v1506 = vpop.xlane.xlu0 %1505
        %v1523 = vlaneseq
        %v1524 = vshrl.u32 %v1523, 7
        %v1525 = vsub.s32 %v731, %v1524
        %v1526 = vrot.slane %v1461, %v1525
        %v1527 = vlaneseq
        %v1528 = vshrl.u32 %v1527, 7
        %v1529 = vsub.s32 %v736, %v1528
        %v1530 = vrot.slane %v1464, %v1529
        %v1531 = vsel %vm741, %v1530, %v1526
        %v1532 = vlaneseq
        %v1533 = vshrl.u32 %v1532, 7
        %v1534 = vsub.s32 %v731, %v1533
        %v1535 = vrot.slane %v1467, %v1534
        %v1536 = vlaneseq
        %v1537 = vshrl.u32 %v1536, 7
        %v1538 = vsub.s32 %v736, %v1537
        %v1539 = vrot.slane %v1470, %v1538
        %v1540 = vsel %vm741, %v1539, %v1535
        %v1541 = vlaneseq
        %v1542 = vshrl.u32 %v1541, 7
        %v1543 = vsub.s32 %v731, %v1542
        %v1544 = vrot.slane %v1473, %v1543
        %v1545 = vlaneseq
        %v1546 = vshrl.u32 %v1545, 7
        %v1547 = vsub.s32 %v736, %v1546
        %v1548 = vrot.slane %v1476, %v1547
        %v1549 = vsel %vm741, %v1548, %v1544
        %v1550 = vlaneseq
        %v1551 = vshrl.u32 %v1550, 7
        %v1552 = vsub.s32 %v731, %v1551
        %v1553 = vrot.slane %v1479, %v1552
        %v1554 = vlaneseq
        %v1555 = vshrl.u32 %v1554, 7
        %v1556 = vsub.s32 %v736, %v1555
        %v1557 = vrot.slane %v1482, %v1556
        %v1558 = vsel %vm741, %v1557, %v1553
        %v1559 = vlaneseq
        %v1560 = vshrl.u32 %v1559, 7
        %v1561 = vsub.s32 %v731, %v1560
        %v1562 = vrot.slane %v1485, %v1561
        %v1563 = vlaneseq
        %v1564 = vshrl.u32 %v1563, 7
        %v1565 = vsub.s32 %v736, %v1564
        %v1566 = vrot.slane %v1488, %v1565
        %v1567 = vsel %vm741, %v1566, %v1562
        %v1568 = vlaneseq
        %v1569 = vshrl.u32 %v1568, 7
        %v1570 = vsub.s32 %v731, %v1569
        %v1571 = vrot.slane %v1491, %v1570
        %v1572 = vlaneseq
        %v1573 = vshrl.u32 %v1572, 7
        %v1574 = vsub.s32 %v736, %v1573
        %v1575 = vrot.slane %v1494, %v1574
        %v1576 = vsel %vm741, %v1575, %v1571
        %v1577 = vlaneseq
        %v1578 = vshrl.u32 %v1577, 7
        %v1579 = vsub.s32 %v731, %v1578
        %v1580 = vrot.slane %v1497, %v1579
        %v1581 = vlaneseq
        %v1582 = vshrl.u32 %v1581, 7
        %v1583 = vsub.s32 %v736, %v1582
        %v1584 = vrot.slane %v1500, %v1583
        %v1585 = vsel %vm741, %v1584, %v1580
        %v1586 = vlaneseq
        %v1587 = vshrl.u32 %v1586, 7
        %v1588 = vsub.s32 %v731, %v1587
        %v1589 = vrot.slane %v1503, %v1588
        %v1590 = vlaneseq
        %v1591 = vshrl.u32 %v1590, 7
        %v1592 = vsub.s32 %v736, %v1591
        %v1593 = vrot.slane %v1506, %v1592
        %v1594 = vsel %vm741, %v1593, %v1589
        %v1595 = vsel %vm770, %v1540, %v1531
        %v1596 = vsel %vm772, %v1549, %v1595
        %v1597 = vsel %vm774, %v1558, %v1596
        %vm1598 = vcmask 1044484
        %v1599 = vsel %vm1598, %v1567, %v1597
        %vm1600 = vcmask 1045509
        %v1601 = vsel %vm1600, %v1576, %v1599
        %vm1602 = vcmask 1046534
        %v1603 = vsel %vm1602, %v1585, %v1601
        %vm1604 = vcmask 1047559
        %v1605 = vsel %vm1604, %v1594, %v1603
        %vm1607 = vcmask 130048
        %v1608 = vsel %vm1607, %v1605, -inf
        %1609 = vmax.xlane.f32.xlu0 %v1608
        %v1610 = vpop.xlane.xlu0 %1609
        %v1612 = vlaneseq
        %v1613 = vshrl.u32 %v1612, 7
        %v1614 = vsub.s32 0, %v1613
        %v1615 = vrot.slane %v1610, %v1614
        %v1616 = vlaneseq
        %v1617 = vshrl.u32 %v1616, 7
        %v1618 = vsub.s32 1, %v1617
        %v1619 = vrot.slane %v1610, %v1618
        %v1620 = vlaneseq
        %v1621 = vshrl.u32 %v1620, 7
        %v1622 = vsub.s32 2, %v1621
        %v1623 = vrot.slane %v1610, %v1622
        %v1624 = vlaneseq
        %v1625 = vshrl.u32 %v1624, 7
        %v1626 = vsub.s32 3, %v1625
        %v1627 = vrot.slane %v1610, %v1626
        %v1628 = vlaneseq
        %v1629 = vshrl.u32 %v1628, 7
        %v1630 = vsub.s32 4, %v1629
        %v1631 = vrot.slane %v1610, %v1630
        %v1632 = vlaneseq
        %v1633 = vshrl.u32 %v1632, 7
        %v1634 = vsub.s32 5, %v1633
        %v1635 = vrot.slane %v1610, %v1634
        %v1636 = vlaneseq
        %v1637 = vshrl.u32 %v1636, 7
        %v1638 = vsub.s32 6, %v1637
        %v1639 = vrot.slane %v1610, %v1638
        %v1640 = vlaneseq
        %v1641 = vshrl.u32 %v1640, 7
        %v1642 = vsub.s32 7, %v1641
        %v1643 = vrot.slane %v1610, %v1642
        %v1652 = vsub.f32 %v1461, %v1615
        %v1653 = vsub.f32 %v1464, %v1615
        %v1654 = vsub.f32 %v1467, %v1619
        %v1655 = vsub.f32 %v1470, %v1619
        %v1656 = vsub.f32 %v1473, %v1623
        %v1657 = vsub.f32 %v1476, %v1623
        %v1658 = vsub.f32 %v1479, %v1627
        %v1659 = vsub.f32 %v1482, %v1627
        %v1660 = vsub.f32 %v1485, %v1631
        %v1661 = vsub.f32 %v1488, %v1631
        %v1662 = vsub.f32 %v1491, %v1635
        %v1663 = vsub.f32 %v1494, %v1635
        %v1664 = vsub.f32 %v1497, %v1639
        %v1665 = vsub.f32 %v1500, %v1639
        %v1666 = vsub.f32 %v1503, %v1643
        %v1667 = vsub.f32 %v1506, %v1643
        %v1668 = vmul.f32 %v1652, 1.442695
        %v1669 = vpow.pop %v1668
        %v1670 = vmul.f32 %v1653, 1.442695
        %v1671 = vpow.pop %v1670
        %v1672 = vmul.f32 %v1654, 1.442695
        %v1673 = vpow.pop %v1672
        %v1674 = vmul.f32 %v1655, 1.442695
        %v1675 = vpow.pop %v1674
        %v1676 = vmul.f32 %v1656, 1.442695
        %v1677 = vpow.pop %v1676
        %v1678 = vmul.f32 %v1657, 1.442695
        %v1679 = vpow.pop %v1678
        %v1680 = vmul.f32 %v1658, 1.442695
        %v1681 = vpow.pop %v1680
        %v1682 = vmul.f32 %v1659, 1.442695
        %v1683 = vpow.pop %v1682
        %v1684 = vmul.f32 %v1660, 1.442695
        %v1685 = vpow.pop %v1684
        %v1686 = vmul.f32 %v1661, 1.442695
        %v1687 = vpow.pop %v1686
        %v1688 = vmul.f32 %v1662, 1.442695
        %v1689 = vpow.pop %v1688
        %v1690 = vmul.f32 %v1663, 1.442695
        %v1691 = vpow.pop %v1690
        %v1692 = vmul.f32 %v1664, 1.442695
        %v1693 = vpow.pop %v1692
        %v1694 = vmul.f32 %v1665, 1.442695
        %v1695 = vpow.pop %v1694
        %v1696 = vmul.f32 %v1666, 1.442695
        %v1697 = vpow.pop %v1696
        %v1698 = vmul.f32 %v1667, 1.442695
        %v1699 = vpow.pop %v1698
        %1716 = vset.pattern.permute.xlu0 0
        %1717 = vperm.xlu0 %1716, %v1669
        %v1718 = vpop.permute.xlu0 %1717
        %1719 = vset.pattern.permute.xlu0 0
        %1720 = vperm.xlu0 %1719, %v1671
        %v1721 = vpop.permute.xlu0 %1720
        %1722 = vset.pattern.permute.xlu0 0
        %1723 = vperm.xlu0 %1722, %v1673
        %v1724 = vpop.permute.xlu0 %1723
        %1725 = vset.pattern.permute.xlu0 0
        %1726 = vperm.xlu0 %1725, %v1675
        %v1727 = vpop.permute.xlu0 %1726
        %1728 = vset.pattern.permute.xlu0 0
        %1729 = vperm.xlu0 %1728, %v1677
        %v1730 = vpop.permute.xlu0 %1729
        %1731 = vset.pattern.permute.xlu0 0
        %1732 = vperm.xlu0 %1731, %v1679
        %v1733 = vpop.permute.xlu0 %1732
        %1734 = vset.pattern.permute.xlu0 0
        %1735 = vperm.xlu0 %1734, %v1681
        %v1736 = vpop.permute.xlu0 %1735
        %1737 = vset.pattern.permute.xlu0 0
        %1738 = vperm.xlu0 %1737, %v1683
        %v1739 = vpop.permute.xlu0 %1738
        %1740 = vset.pattern.permute.xlu0 0
        %1741 = vperm.xlu0 %1740, %v1685
        %v1742 = vpop.permute.xlu0 %1741
        %1743 = vset.pattern.permute.xlu0 0
        %1744 = vperm.xlu0 %1743, %v1687
        %v1745 = vpop.permute.xlu0 %1744
        %1746 = vset.pattern.permute.xlu0 0
        %1747 = vperm.xlu0 %1746, %v1689
        %v1748 = vpop.permute.xlu0 %1747
        %1749 = vset.pattern.permute.xlu0 0
        %1750 = vperm.xlu0 %1749, %v1691
        %v1751 = vpop.permute.xlu0 %1750
        %1752 = vset.pattern.permute.xlu0 0
        %1753 = vperm.xlu0 %1752, %v1693
        %v1754 = vpop.permute.xlu0 %1753
        %1755 = vset.pattern.permute.xlu0 0
        %1756 = vperm.xlu0 %1755, %v1695
        %v1757 = vpop.permute.xlu0 %1756
        %1758 = vset.pattern.permute.xlu0 0
        %1759 = vperm.xlu0 %1758, %v1697
        %v1760 = vpop.permute.xlu0 %1759
        %1761 = vset.pattern.permute.xlu0 0
        %1762 = vperm.xlu0 %1761, %v1699
        %v1763 = vpop.permute.xlu0 %1762
        %v1764 = vlaneseq
        %v1765 = vshrl.u32 %v1764, 7
        %v1766 = vsub.s32 %v731, %v1765
        %v1767 = vrot.slane %v1718, %v1766
        %v1768 = vlaneseq
        %v1769 = vshrl.u32 %v1768, 7
        %v1770 = vsub.s32 %v736, %v1769
        %v1771 = vrot.slane %v1721, %v1770
        %v1772 = vsel %vm741, %v1771, %v1767
        %v1773 = vlaneseq
        %v1774 = vshrl.u32 %v1773, 7
        %v1775 = vsub.s32 %v731, %v1774
        %v1776 = vrot.slane %v1724, %v1775
        %v1777 = vlaneseq
        %v1778 = vshrl.u32 %v1777, 7
        %v1779 = vsub.s32 %v736, %v1778
        %v1780 = vrot.slane %v1727, %v1779
        %v1781 = vsel %vm741, %v1780, %v1776
        %v1782 = vlaneseq
        %v1783 = vshrl.u32 %v1782, 7
        %v1784 = vsub.s32 %v731, %v1783
        %v1785 = vrot.slane %v1730, %v1784
        %v1786 = vlaneseq
        %v1787 = vshrl.u32 %v1786, 7
        %v1788 = vsub.s32 %v736, %v1787
        %v1789 = vrot.slane %v1733, %v1788
        %v1790 = vsel %vm741, %v1789, %v1785
        %v1791 = vlaneseq
        %v1792 = vshrl.u32 %v1791, 7
        %v1793 = vsub.s32 %v731, %v1792
        %v1794 = vrot.slane %v1736, %v1793
        %v1795 = vlaneseq
        %v1796 = vshrl.u32 %v1795, 7
        %v1797 = vsub.s32 %v736, %v1796
        %v1798 = vrot.slane %v1739, %v1797
        %v1799 = vsel %vm741, %v1798, %v1794
        %v1800 = vlaneseq
        %v1801 = vshrl.u32 %v1800, 7
        %v1802 = vsub.s32 %v731, %v1801
        %v1803 = vrot.slane %v1742, %v1802
        %v1804 = vlaneseq
        %v1805 = vshrl.u32 %v1804, 7
        %v1806 = vsub.s32 %v736, %v1805
        %v1807 = vrot.slane %v1745, %v1806
        %v1808 = vsel %vm741, %v1807, %v1803
        %v1809 = vlaneseq
        %v1810 = vshrl.u32 %v1809, 7
        %v1811 = vsub.s32 %v731, %v1810
        %v1812 = vrot.slane %v1748, %v1811
        %v1813 = vlaneseq
        %v1814 = vshrl.u32 %v1813, 7
        %v1815 = vsub.s32 %v736, %v1814
        %v1816 = vrot.slane %v1751, %v1815
        %v1817 = vsel %vm741, %v1816, %v1812
        %v1818 = vlaneseq
        %v1819 = vshrl.u32 %v1818, 7
        %v1820 = vsub.s32 %v731, %v1819
        %v1821 = vrot.slane %v1754, %v1820
        %v1822 = vlaneseq
        %v1823 = vshrl.u32 %v1822, 7
        %v1824 = vsub.s32 %v736, %v1823
        %v1825 = vrot.slane %v1757, %v1824
        %v1826 = vsel %vm741, %v1825, %v1821
        %v1827 = vlaneseq
        %v1828 = vshrl.u32 %v1827, 7
        %v1829 = vsub.s32 %v731, %v1828
        %v1830 = vrot.slane %v1760, %v1829
        %v1831 = vlaneseq
        %v1832 = vshrl.u32 %v1831, 7
        %v1833 = vsub.s32 %v736, %v1832
        %v1834 = vrot.slane %v1763, %v1833
        %v1835 = vsel %vm741, %v1834, %v1830
        %v1836 = vsel %vm770, %v1781, %v1772
        %v1837 = vsel %vm772, %v1790, %v1836
        %v1838 = vsel %vm774, %v1799, %v1837
        %v1839 = vsel %vm1598, %v1808, %v1838
        %v1840 = vsel %vm1600, %v1817, %v1839
        %v1841 = vsel %vm1602, %v1826, %v1840
        %v1842 = vsel %vm1604, %v1835, %v1841
        %v1844 = vsel %vm1607, %v1842, 0.0
        %1845 = vadd.xlane.f32.xlu0 %v1844
        %v1846 = vpop.xlane.xlu0 %1845
        %v1847 = vrcp.pop %v1846
        %v1849 = vlaneseq
        %v1850 = vshrl.u32 %v1849, 7
        %v1851 = vsub.s32 0, %v1850
        %v1852 = vrot.slane %v1847, %v1851
        %v1853 = vlaneseq
        %v1854 = vshrl.u32 %v1853, 7
        %v1855 = vsub.s32 1, %v1854
        %v1856 = vrot.slane %v1847, %v1855
        %v1857 = vlaneseq
        %v1858 = vshrl.u32 %v1857, 7
        %v1859 = vsub.s32 2, %v1858
        %v1860 = vrot.slane %v1847, %v1859
        %v1861 = vlaneseq
        %v1862 = vshrl.u32 %v1861, 7
        %v1863 = vsub.s32 3, %v1862
        %v1864 = vrot.slane %v1847, %v1863
        %v1865 = vlaneseq
        %v1866 = vshrl.u32 %v1865, 7
        %v1867 = vsub.s32 4, %v1866
        %v1868 = vrot.slane %v1847, %v1867
        %v1869 = vlaneseq
        %v1870 = vshrl.u32 %v1869, 7
        %v1871 = vsub.s32 5, %v1870
        %v1872 = vrot.slane %v1847, %v1871
        %v1873 = vlaneseq
        %v1874 = vshrl.u32 %v1873, 7
        %v1875 = vsub.s32 6, %v1874
        %v1876 = vrot.slane %v1847, %v1875
        %v1877 = vlaneseq
        %v1878 = vshrl.u32 %v1877, 7
        %v1879 = vsub.s32 7, %v1878
        %v1880 = vrot.slane %v1847, %v1879
        %v1889 = vmul.f32 %v1669, %v1852
        %v1890 = vmul.f32 %v1671, %v1852
        %v1891 = vmul.f32 %v1673, %v1856
        %v1892 = vmul.f32 %v1675, %v1856
        %v1893 = vmul.f32 %v1677, %v1860
        %v1894 = vmul.f32 %v1679, %v1860
        %v1895 = vmul.f32 %v1681, %v1864
        %v1896 = vmul.f32 %v1683, %v1864
        %v1897 = vmul.f32 %v1685, %v1868
        %v1898 = vmul.f32 %v1687, %v1868
        %v1899 = vmul.f32 %v1689, %v1872
        %v1900 = vmul.f32 %v1691, %v1872
        %v1901 = vmul.f32 %v1693, %v1876
        %v1902 = vmul.f32 %v1695, %v1876
        %v1903 = vmul.f32 %v1697, %v1880
        %v1904 = vmul.f32 %v1699, %v1880
        %1906 = vset.pattern.permute.xlu0 0
        %1907 = vperm.xlu0 %1906, %v1889
        %v1908 = vpop.permute.xlu0 %1907
        %1911 = vset.pattern.permute.xlu0 0
        %1912 = vperm.xlu0 %1911, %v1890
        %v1913 = vpop.permute.xlu0 %1912
        %1916 = vset.pattern.permute.xlu0 0
        %1917 = vperm.xlu0 %1916, %v1891
        %v1918 = vpop.permute.xlu0 %1917
        %1921 = vset.pattern.permute.xlu0 0
        %1922 = vperm.xlu0 %1921, %v1892
        %v1923 = vpop.permute.xlu0 %1922
        %1926 = vset.pattern.permute.xlu0 0
        %1927 = vperm.xlu0 %1926, %v1893
        %v1928 = vpop.permute.xlu0 %1927
        %1931 = vset.pattern.permute.xlu0 0
        %1932 = vperm.xlu0 %1931, %v1894
        %v1933 = vpop.permute.xlu0 %1932
        %1936 = vset.pattern.permute.xlu0 0
        %1937 = vperm.xlu0 %1936, %v1895
        %v1938 = vpop.permute.xlu0 %1937
        %1941 = vset.pattern.permute.xlu0 0
        %1942 = vperm.xlu0 %1941, %v1896
        %v1943 = vpop.permute.xlu0 %1942
        %1946 = vset.pattern.permute.xlu0 0
        %1947 = vperm.xlu0 %1946, %v1897
        %v1948 = vpop.permute.xlu0 %1947
        %1951 = vset.pattern.permute.xlu0 0
        %1952 = vperm.xlu0 %1951, %v1898
        %v1953 = vpop.permute.xlu0 %1952
        %1956 = vset.pattern.permute.xlu0 0
        %1957 = vperm.xlu0 %1956, %v1899
        %v1958 = vpop.permute.xlu0 %1957
        %1961 = vset.pattern.permute.xlu0 0
        %1962 = vperm.xlu0 %1961, %v1900
        %v1963 = vpop.permute.xlu0 %1962
        %1966 = vset.pattern.permute.xlu0 0
        %1967 = vperm.xlu0 %1966, %v1901
        %v1968 = vpop.permute.xlu0 %1967
        %1971 = vset.pattern.permute.xlu0 0
        %1972 = vperm.xlu0 %1971, %v1902
        %v1973 = vpop.permute.xlu0 %1972
        %1976 = vset.pattern.permute.xlu0 0
        %1977 = vperm.xlu0 %1976, %v1903
        %v1978 = vpop.permute.xlu0 %1977
        %1981 = vset.pattern.permute.xlu0 0
        %1982 = vperm.xlu0 %1981, %v1904
        %v1983 = vpop.permute.xlu0 %1982
        %v1985 = vmul.f32 %v1259, %v1908
        %v1986 = vmul.f32 %v1260, %v1913
        %v1987 = vmul.f32 %v1261, %v1918
        %v1988 = vmul.f32 %v1262, %v1923
        %v1989 = vmul.f32 %v1263, %v1928
        %v1990 = vmul.f32 %v1264, %v1933
        %v1991 = vmul.f32 %v1265, %v1938
        %v1992 = vmul.f32 %v1266, %v1943
        %v1993 = vmul.f32 %v1267, %v1948
        %v1994 = vmul.f32 %v1268, %v1953
        %v1995 = vmul.f32 %v1269, %v1958
        %v1996 = vmul.f32 %v1270, %v1963
        %v1997 = vmul.f32 %v1271, %v1968
        %v1998 = vmul.f32 %v1272, %v1973
        %v1999 = vmul.f32 %v1273, %v1978
        %v2000 = vmul.f32 %v1274, %v1983
        %v2001 = vsel %vm597, %v1985, 0.0
        %v2002 = vsel %vm597, %v1986, 0.0
        %v2003 = vadd.f32 %v2001, %v2002
        %v2004 = vrot.slane %v2003, 4
        %v2005 = vadd.f32 %v2003, %v2004
        %v2006 = vrot.slane %v2005, 2
        %v2007 = vadd.f32 %v2005, %v2006
        %v2008 = vrot.slane %v2007, 1
        %v2009 = vadd.f32 %v2007, %v2008
        %v2010 = vsel %vm597, %v1987, 0.0
        %v2011 = vsel %vm597, %v1988, 0.0
        %v2012 = vadd.f32 %v2010, %v2011
        %v2013 = vrot.slane %v2012, 4
        %v2014 = vadd.f32 %v2012, %v2013
        %v2015 = vrot.slane %v2014, 2
        %v2016 = vadd.f32 %v2014, %v2015
        %v2017 = vrot.slane %v2016, 1
        %v2018 = vadd.f32 %v2016, %v2017
        %v2019 = vsel %vm597, %v1989, 0.0
        %v2020 = vsel %vm597, %v1990, 0.0
        %v2021 = vadd.f32 %v2019, %v2020
        %v2022 = vrot.slane %v2021, 4
        %v2023 = vadd.f32 %v2021, %v2022
        %v2024 = vrot.slane %v2023, 2
        %v2025 = vadd.f32 %v2023, %v2024
        %v2026 = vrot.slane %v2025, 1
        %v2027 = vadd.f32 %v2025, %v2026
        %v2028 = vsel %vm597, %v1991, 0.0
        %v2029 = vsel %vm597, %v1992, 0.0
        %v2030 = vadd.f32 %v2028, %v2029
        %v2031 = vrot.slane %v2030, 4
        %v2032 = vadd.f32 %v2030, %v2031
        %v2033 = vrot.slane %v2032, 2
        %v2034 = vadd.f32 %v2032, %v2033
        %v2035 = vrot.slane %v2034, 1
        %v2036 = vadd.f32 %v2034, %v2035
        %v2037 = vsel %vm597, %v1993, 0.0
        %v2038 = vsel %vm597, %v1994, 0.0
        %v2039 = vadd.f32 %v2037, %v2038
        %v2040 = vrot.slane %v2039, 4
        %v2041 = vadd.f32 %v2039, %v2040
        %v2042 = vrot.slane %v2041, 2
        %v2043 = vadd.f32 %v2041, %v2042
        %v2044 = vrot.slane %v2043, 1
        %v2045 = vadd.f32 %v2043, %v2044
        %v2046 = vsel %vm597, %v1995, 0.0
        %v2047 = vsel %vm597, %v1996, 0.0
        %v2048 = vadd.f32 %v2046, %v2047
        %v2049 = vrot.slane %v2048, 4
        %v2050 = vadd.f32 %v2048, %v2049
        %v2051 = vrot.slane %v2050, 2
        %v2052 = vadd.f32 %v2050, %v2051
        %v2053 = vrot.slane %v2052, 1
        %v2054 = vadd.f32 %v2052, %v2053
        %v2055 = vsel %vm597, %v1997, 0.0
        %v2056 = vsel %vm597, %v1998, 0.0
        %v2057 = vadd.f32 %v2055, %v2056
        %v2058 = vrot.slane %v2057, 4
        %v2059 = vadd.f32 %v2057, %v2058
        %v2060 = vrot.slane %v2059, 2
        %v2061 = vadd.f32 %v2059, %v2060
        %v2062 = vrot.slane %v2061, 1
        %v2063 = vadd.f32 %v2061, %v2062
        %v2064 = vsel %vm597, %v1999, 0.0
        %v2065 = vsel %vm597, %v2000, 0.0
        %v2066 = vadd.f32 %v2064, %v2065
        %v2067 = vrot.slane %v2066, 4
        %v2068 = vadd.f32 %v2066, %v2067
        %v2069 = vrot.slane %v2068, 2
        %v2070 = vadd.f32 %v2068, %v2069
        %v2071 = vrot.slane %v2070, 1
        %v2072 = vadd.f32 %v2070, %v2071
        %v2081 = vsel %vm770, %v2018, %v2009
        %v2082 = vsel %vm772, %v2027, %v2081
        %v2083 = vsel %vm774, %v2036, %v2082
        %v2084 = vsel %vm1598, %v2045, %v2083
        %v2085 = vsel %vm1600, %v2054, %v2084
        %v2086 = vsel %vm1602, %v2063, %v2085
        %v2087 = vsel %vm1604, %v2072, %v2086
        %v2089 = vsel %vm597, %v2087, 0.0
        %2090 = vadd.xlane.f32.xlu0 %v2089
        %v2091 = vpop.xlane.xlu0 %2090
        %v2092 = vmul.f32 %v2091, %v1027
        %v2094 = vrot.slane %v2092, 1
        %v2095 = vrot.slane %v2092, 2
        %v2096 = vrot.slane %v2092, 3
        %v2097 = vrot.slane %v2092, 4
        %v2098 = vrot.slane %v2092, 5
        %v2099 = vrot.slane %v2092, 6
        %v2100 = vrot.slane %v2092, 7
        %v2109 = vsub.f32 %v2009, %v2092
        %v2110 = vsub.f32 %v2018, %v2094
        %v2111 = vsub.f32 %v2027, %v2095
        %v2112 = vsub.f32 %v2036, %v2096
        %v2113 = vsub.f32 %v2045, %v2097
        %v2114 = vsub.f32 %v2054, %v2098
        %v2115 = vsub.f32 %v2063, %v2099
        %v2116 = vsub.f32 %v2072, %v2100
        %v2117 = vmul.f32 %v2109, %v2109
        %v2118 = vmul.f32 %v2110, %v2110
        %v2119 = vmul.f32 %v2111, %v2111
        %v2120 = vmul.f32 %v2112, %v2112
        %v2121 = vmul.f32 %v2113, %v2113
        %v2122 = vmul.f32 %v2114, %v2114
        %v2123 = vmul.f32 %v2115, %v2115
        %v2124 = vmul.f32 %v2116, %v2116
        %v2133 = vrot.slane %v2118, 7
        %v2134 = vsel %vm770, %v2133, %v2117
        %v2135 = vrot.slane %v2119, 6
        %v2136 = vsel %vm772, %v2135, %v2134
        %v2137 = vrot.slane %v2120, 5
        %v2138 = vsel %vm774, %v2137, %v2136
        %v2139 = vrot.slane %v2121, 4
        %v2140 = vsel %vm1598, %v2139, %v2138
        %v2141 = vrot.slane %v2122, 3
        %v2142 = vsel %vm1600, %v2141, %v2140
        %v2143 = vrot.slane %v2123, 2
        %v2144 = vsel %vm1602, %v2143, %v2142
        %v2145 = vrot.slane %v2124, 1
        %v2146 = vsel %vm1604, %v2145, %v2144
        %v2148 = vsel %vm597, %v2146, 0.0
        %2149 = vadd.xlane.f32.xlu0 %v2148
        %v2150 = vpop.xlane.xlu0 %2149
        %v2151 = vmul.f32 %v2150, %v1027
        %v2152 = vadd.f32 %v2151, 1e-05
        %v2153 = vrsqrt.pop %v2152
        %v2155 = vrot.slane %v2153, 1
        %v2156 = vrot.slane %v2153, 2
        %v2157 = vrot.slane %v2153, 3
        %v2158 = vrot.slane %v2153, 4
        %v2159 = vrot.slane %v2153, 5
        %v2160 = vrot.slane %v2153, 6
        %v2161 = vrot.slane %v2153, 7
        %v2170 = vmul.f32 %v2109, %v2153
        %v2171 = vmul.f32 %v2110, %v2155
        %v2172 = vmul.f32 %v2111, %v2156
        %v2173 = vmul.f32 %v2112, %v2157
        %v2174 = vmul.f32 %v2113, %v2158
        %v2175 = vmul.f32 %v2114, %v2159
        %v2176 = vmul.f32 %v2115, %v2160
        %v2177 = vmul.f32 %v2116, %v2161
        %s2178 = scalar_lea.vmem %s8, 1
        %v2179 = vld [vmem:[%s2178] sm:$0x1]
        %v2181 = vlaneseq
        %v2182 = vshrl.u32 %v2181, 7
        %v2183 = vsub.s32 0, %v2182
        %v2184 = vrot.slane %v2179, %v2183
        %v2186 = vmul.f32 %v2170, %v2184
        %v2187 = vmul.f32 %v2171, %v2184
        %v2188 = vmul.f32 %v2172, %v2184
        %v2189 = vmul.f32 %v2173, %v2184
        %v2190 = vmul.f32 %v2174, %v2184
        %v2191 = vmul.f32 %v2175, %v2184
        %v2192 = vmul.f32 %v2176, %v2184
        %v2193 = vmul.f32 %v2177, %v2184
        %s2194 = scalar_lea.vmem %s9, 1
        %v2195 = vld [vmem:[%s2194] sm:$0x1]
        %v2197 = vlaneseq
        %v2198 = vshrl.u32 %v2197, 7
        %v2199 = vsub.s32 0, %v2198
        %v2200 = vrot.slane %v2195, %v2199
        %v2202 = vadd.f32 %v2186, %v2200
        %v2203 = vadd.f32 %v2187, %v2200
        %v2204 = vadd.f32 %v2188, %v2200
        %v2205 = vadd.f32 %v2189, %v2200
        %v2206 = vadd.f32 %v2190, %v2200
        %v2207 = vadd.f32 %v2191, %v2200
        %v2208 = vadd.f32 %v2192, %v2200
        %v2209 = vadd.f32 %v2193, %v2200
        %v2210 = vpack.c.bf16 %v2202, %v2202
        %v2211 = vpack.c.bf16 %v2203, %v2203
        %v2212 = vpack.c.bf16 %v2204, %v2204
        %v2213 = vpack.c.bf16 %v2205, %v2205
        %v2214 = vpack.c.bf16 %v2206, %v2206
        %v2215 = vpack.c.bf16 %v2207, %v2207
        %v2216 = vpack.c.bf16 %v2208, %v2208
        %v2217 = vpack.c.bf16 %v2209, %v2209
        %v2218 = vld [vmem:[%s10] sm:$0xff]
        %v2219 = vld [vmem:[%s10 + $0x8] sm:$0xff]
        %v2220 = vld [vmem:[%s10 + $0x10] sm:$0xff]
        %v2221 = vld [vmem:[%s10 + $0x18] sm:$0xff]
        %v2222 = vpack.c.bf16 %v2219, %v2218
        %v2223 = vpack.c.bf16 %v2221, %v2220
        %v2224 = vld [vmem:[%s11] sm:$0x1]
        %v2226 = vlaneseq
        %v2227 = vshrl.u32 %v2226, 7
        %v2228 = vsub.s32 0, %v2227
        %v2229 = vrot.slane %v2224, %v2228
        %v2239 = vunpack.c.l.b16 %v2210
        %v2240 = vunpack.c.l.b16 %v2211
        %v2241 = vunpack.c.l.b16 %v2212
        %v2242 = vunpack.c.l.b16 %v2213
        %v2243 = vunpack.c.l.b16 %v2214
        %v2244 = vunpack.c.l.b16 %v2215
        %v2245 = vunpack.c.l.b16 %v2216
        %v2246 = vunpack.c.l.b16 %v2217
        %v2247 = vrot.slane %v2240, 7
        %v2248 = vsel %vm770, %v2247, %v2239
        %v2249 = vrot.slane %v2241, 6
        %v2250 = vsel %vm772, %v2249, %v2248
        %v2251 = vrot.slane %v2242, 5
        %v2252 = vsel %vm774, %v2251, %v2250
        %v2253 = vrot.slane %v2243, 4
        %v2254 = vsel %vm1598, %v2253, %v2252
        %v2255 = vrot.slane %v2244, 3
        %v2256 = vsel %vm1600, %v2255, %v2254
        %v2257 = vrot.slane %v2245, 2
        %v2258 = vsel %vm1602, %v2257, %v2256
        %v2259 = vrot.slane %v2246, 1
        %v2260 = vsel %vm1604, %v2259, %v2258
        %v2261 = vpack.c.b16 %v2260, %v2260
        %v2263 = vsel %vm597, %v2261, 0
        %2265 = vmatprep.subr.bf16.mxu0 0
        %2266 = vmatpush1.bf16.msra.mxu0 %v2222
        %2267 = vmatprep.subr.bf16.mxu0 0
        %2268 = vmatpush1.bf16.msra.mxu0 %v2223
        %2269 = vmatprep.subr.bf16.mxu0 0
        %2270 = vmatpush1.bf16.msra.mxu0 0
        %2271 = vmatprep.subr.bf16.mxu0 0
        %2272 = vmatpush1.bf16.msra.mxu0 0
        %2273 = vmatprep.subr.bf16.mxu0 0
        %2274 = vmatpush1.bf16.msra.mxu0 0
        %2275 = vmatprep.subr.bf16.mxu0 0
        %2276 = vmatpush1.bf16.msra.mxu0 0
        %2277 = vmatprep.subr.bf16.mxu0 0
        %2278 = vmatpush1.bf16.msra.mxu0 0
        %2279 = vmatprep.subr.bf16.mxu0 0
        %2280 = vmatpush1.bf16.msra.mxu0 0
        %2281 = vmatprep.subr.bf16.mxu0 0
        %2282 = vmatpush1.bf16.msra.mxu0 0
        %2283 = vmatprep.subr.bf16.mxu0 0
        %2284 = vmatpush1.bf16.msra.mxu0 0
        %2285 = vmatprep.subr.bf16.mxu0 0
        %2286 = vmatpush1.bf16.msra.mxu0 0
        %2287 = vmatprep.subr.bf16.mxu0 0
        %2288 = vmatpush1.bf16.msra.mxu0 0
        %2289 = vmatprep.subr.bf16.mxu0 0
        %2290 = vmatpush1.bf16.msra.mxu0 0
        %2291 = vmatprep.subr.bf16.mxu0 0
        %2292 = vmatpush1.bf16.msra.mxu0 0
        %2293 = vmatprep.subr.bf16.mxu0 0
        %2294 = vmatpush1.bf16.msra.mxu0 0
        %2295 = vmatprep.subr.bf16.mxu0 0
        %2296 = vmatpush1.bf16.msra.mxu0 0
        %2297 = vmatprep.mubr.bf16.mxu0 0
        %2298 = vmatmul.mubr.bf16.gmra.mrb[0].mxu0 %v2263
        %v2299 = vpop.f32.mrb[0].mxu0
        %v2300 = vadd.f32 %v2229, %v2299
        %v2301 = vpop.f32.mrb[0].mxu0
        %v2302 = vpop.f32.mrb[0].mxu0
        %v2303 = vpop.f32.mrb[0].mxu0
        %2304 = vdwg.mxu0
        %s2305 = scalar_lea.vmem %s10, 32
        %v2306 = vld [vmem:[%s2305] sm:$0xff]
        %v2307 = vld [vmem:[%s2305 + $0x8] sm:$0xff]
        %v2308 = vld [vmem:[%s2305 + $0x10] sm:$0xff]
        %v2309 = vld [vmem:[%s2305 + $0x18] sm:$0xff]
        %v2310 = vpack.c.bf16 %v2307, %v2306
        %v2311 = vpack.c.bf16 %v2309, %v2308
        %s2312 = scalar_lea.vmem %s11, 1
        %v2313 = vld [vmem:[%s2312] sm:$0x1]
        %v2315 = vlaneseq
        %v2316 = vshrl.u32 %v2315, 7
        %v2317 = vsub.s32 0, %v2316
        %v2318 = vrot.slane %v2313, %v2317
        %2320 = vmatprep.subr.bf16.mxu0 0
        %2321 = vmatpush1.bf16.msra.mxu0 %v2310
        %2322 = vmatprep.subr.bf16.mxu0 0
        %2323 = vmatpush1.bf16.msra.mxu0 %v2311
        %2324 = vmatprep.subr.bf16.mxu0 0
        %2325 = vmatpush1.bf16.msra.mxu0 0
        %2326 = vmatprep.subr.bf16.mxu0 0
        %2327 = vmatpush1.bf16.msra.mxu0 0
        %2328 = vmatprep.subr.bf16.mxu0 0
        %2329 = vmatpush1.bf16.msra.mxu0 0
        %2330 = vmatprep.subr.bf16.mxu0 0
        %2331 = vmatpush1.bf16.msra.mxu0 0
        %2332 = vmatprep.subr.bf16.mxu0 0
        %2333 = vmatpush1.bf16.msra.mxu0 0
        %2334 = vmatprep.subr.bf16.mxu0 0
        %2335 = vmatpush1.bf16.msra.mxu0 0
        %2336 = vmatprep.subr.bf16.mxu0 0
        %2337 = vmatpush1.bf16.msra.mxu0 0
        %2338 = vmatprep.subr.bf16.mxu0 0
        %2339 = vmatpush1.bf16.msra.mxu0 0
        %2340 = vmatprep.subr.bf16.mxu0 0
        %2341 = vmatpush1.bf16.msra.mxu0 0
        %2342 = vmatprep.subr.bf16.mxu0 0
        %2343 = vmatpush1.bf16.msra.mxu0 0
        %2344 = vmatprep.subr.bf16.mxu0 0
        %2345 = vmatpush1.bf16.msra.mxu0 0
        %2346 = vmatprep.subr.bf16.mxu0 0
        %2347 = vmatpush1.bf16.msra.mxu0 0
        %2348 = vmatprep.subr.bf16.mxu0 0
        %2349 = vmatpush1.bf16.msra.mxu0 0
        %2350 = vmatprep.subr.bf16.mxu0 0
        %2351 = vmatpush1.bf16.msra.mxu0 0
        %2352 = vmatprep.mubr.bf16.mxu0 0
        %2353 = vmatmul.mubr.bf16.gmra.mrb[0].mxu0 %v2263
        %v2354 = vpop.f32.mrb[0].mxu0
        %v2355 = vadd.f32 %v2318, %v2354
        %v2356 = vpop.f32.mrb[0].mxu0
        %v2357 = vpop.f32.mrb[0].mxu0
        %v2358 = vpop.f32.mrb[0].mxu0
        %2359 = vdwg.mxu0
        %s2360 = scalar_lea.vmem %s10, 64
        %v2361 = vld [vmem:[%s2360] sm:$0xff]
        %v2362 = vld [vmem:[%s2360 + $0x8] sm:$0xff]
        %v2363 = vld [vmem:[%s2360 + $0x10] sm:$0xff]
        %v2364 = vld [vmem:[%s2360 + $0x18] sm:$0xff]
        %v2365 = vpack.c.bf16 %v2362, %v2361
        %v2366 = vpack.c.bf16 %v2364, %v2363
        %s2367 = scalar_lea.vmem %s11, 2
        %v2368 = vld [vmem:[%s2367] sm:$0x1]
        %v2370 = vlaneseq
        %v2371 = vshrl.u32 %v2370, 7
        %v2372 = vsub.s32 0, %v2371
        %v2373 = vrot.slane %v2368, %v2372
        %2375 = vmatprep.subr.bf16.mxu0 0
        %2376 = vmatpush1.bf16.msra.mxu0 %v2365
        %2377 = vmatprep.subr.bf16.mxu0 0
        %2378 = vmatpush1.bf16.msra.mxu0 %v2366
        %2379 = vmatprep.subr.bf16.mxu0 0
        %2380 = vmatpush1.bf16.msra.mxu0 0
        %2381 = vmatprep.subr.bf16.mxu0 0
        %2382 = vmatpush1.bf16.msra.mxu0 0
        %2383 = vmatprep.subr.bf16.mxu0 0
        %2384 = vmatpush1.bf16.msra.mxu0 0
        %2385 = vmatprep.subr.bf16.mxu0 0
        %2386 = vmatpush1.bf16.msra.mxu0 0
        %2387 = vmatprep.subr.bf16.mxu0 0
        %2388 = vmatpush1.bf16.msra.mxu0 0
        %2389 = vmatprep.subr.bf16.mxu0 0
        %2390 = vmatpush1.bf16.msra.mxu0 0
        %2391 = vmatprep.subr.bf16.mxu0 0
        %2392 = vmatpush1.bf16.msra.mxu0 0
        %2393 = vmatprep.subr.bf16.mxu0 0
        %2394 = vmatpush1.bf16.msra.mxu0 0
        %2395 = vmatprep.subr.bf16.mxu0 0
        %2396 = vmatpush1.bf16.msra.mxu0 0
        %2397 = vmatprep.subr.bf16.mxu0 0
        %2398 = vmatpush1.bf16.msra.mxu0 0
        %2399 = vmatprep.subr.bf16.mxu0 0
        %2400 = vmatpush1.bf16.msra.mxu0 0
        %2401 = vmatprep.subr.bf16.mxu0 0
        %2402 = vmatpush1.bf16.msra.mxu0 0
        %2403 = vmatprep.subr.bf16.mxu0 0
        %2404 = vmatpush1.bf16.msra.mxu0 0
        %2405 = vmatprep.subr.bf16.mxu0 0
        %2406 = vmatpush1.bf16.msra.mxu0 0
        %2407 = vmatprep.mubr.bf16.mxu0 0
        %2408 = vmatmul.mubr.bf16.gmra.mrb[0].mxu0 %v2263
        %v2409 = vpop.f32.mrb[0].mxu0
        %v2410 = vadd.f32 %v2373, %v2409
        %v2411 = vpop.f32.mrb[0].mxu0
        %v2412 = vpop.f32.mrb[0].mxu0
        %v2413 = vpop.f32.mrb[0].mxu0
        %2414 = vdwg.mxu0
        %v2415 = vld [vmem:[%s12] sm:$0xff]
        %v2416 = vld [vmem:[%s12 + $0x8] sm:$0xff]
        %v2417 = vld [vmem:[%s12 + $0x10] sm:$0xff]
        %v2418 = vld [vmem:[%s12 + $0x18] sm:$0xff]
        %s2419 = scalar_lea.vmem %s12, 32
        %v2420 = vld [vmem:[%s2419] sm:$0xff]
        %v2421 = vld [vmem:[%s2419 + $0x8] sm:$0xff]
        %v2422 = vld [vmem:[%s2419 + $0x10] sm:$0xff]
        %v2423 = vld [vmem:[%s2419 + $0x18] sm:$0xff]
        %s2424 = scalar_lea.vmem %s12, 64
        %v2425 = vld [vmem:[%s2424] sm:$0xff]
        %v2426 = vld [vmem:[%s2424 + $0x8] sm:$0xff]
        %v2427 = vld [vmem:[%s2424 + $0x10] sm:$0xff]
        %v2428 = vld [vmem:[%s2424 + $0x18] sm:$0xff]
        %v2429 = vld [vmem:[%s13] sm:$0x1]
        %s2430 = scalar_lea.vmem %s13, 1
        %v2431 = vld [vmem:[%s2430] sm:$0x1]
        %s2432 = scalar_lea.vmem %s13, 2
        %v2433 = vld [vmem:[%s2432] sm:$0x1]
        %s2434 = sld [smem:[#allocation3 + %s34]]
        %v2435 = vlaneseq
        %v2436 = vshrl.u32 %v2435, 7
        %v2437 = vstv %s2434
        %vm2438 = vcmp.lt.s32.totalorder %v2436, %v2437
        %v2440 = vsel %vm597, 0.0, 0
        %2442 = vmatprep.subr.mxu0 0.0
        %2443 = vmatpush1.msra.mxu0 %v2415
        %2444 = vmatprep.subr.mxu0 0.0
        %2445 = vmatpush1.msra.mxu0 %v2416
        %2446 = vmatprep.subr.mxu0 0.0
        %2447 = vmatpush1.msra.mxu0 %v2417
        %2448 = vmatprep.subr.mxu0 0.0
        %2449 = vmatpush1.msra.mxu0 %v2418
        %2450 = vmatprep.subr.mxu0 0.0
        %2451 = vmatpush1.msra.mxu0 0.0
        %2452 = vmatprep.subr.mxu0 0.0
        %2453 = vmatpush1.msra.mxu0 0.0
        %2454 = vmatprep.subr.mxu0 0.0
        %2455 = vmatpush1.msra.mxu0 0.0
        %2456 = vmatprep.subr.mxu0 0.0
        %2457 = vmatpush1.msra.mxu0 0.0
        %2458 = vmatprep.subr.mxu0 0.0
        %2459 = vmatpush1.msra.mxu0 0.0
        %2460 = vmatprep.subr.mxu0 0.0
        %2461 = vmatpush1.msra.mxu0 0.0
        %2462 = vmatprep.subr.mxu0 0.0
        %2463 = vmatpush1.msra.mxu0 0.0
        %2464 = vmatprep.subr.mxu0 0.0
        %2465 = vmatpush1.msra.mxu0 0.0
        %2466 = vmatprep.subr.mxu0 0.0
        %2467 = vmatpush1.msra.mxu0 0.0
        %2468 = vmatprep.subr.mxu0 0.0
        %2469 = vmatpush1.msra.mxu0 0.0
        %2470 = vmatprep.subr.mxu0 0.0
        %2471 = vmatpush1.msra.mxu0 0.0
        %2472 = vmatprep.subr.mxu0 0.0
        %2473 = vmatpush1.msra.mxu0 0.0
        %2474 = vmatprep.subr.mxu0 0.0
        %2475 = vmatpush1.msra.mxu0 0.0
        %2476 = vmatprep.subr.mxu0 0.0
        %2477 = vmatpush1.msra.mxu0 0.0
        %2478 = vmatprep.subr.mxu0 0.0
        %2479 = vmatpush1.msra.mxu0 0.0
        %2480 = vmatprep.subr.mxu0 0.0
        %2481 = vmatpush1.msra.mxu0 0.0
        %2482 = vmatprep.subr.mxu0 0.0
        %2483 = vmatpush1.msra.mxu0 0.0
        %2484 = vmatprep.subr.mxu0 0.0
        %2485 = vmatpush1.msra.mxu0 0.0
        %2486 = vmatprep.subr.mxu0 0.0
        %2487 = vmatpush1.msra.mxu0 0.0
        %2488 = vmatprep.subr.mxu0 0.0
        %2489 = vmatpush1.msra.mxu0 0.0
        %2490 = vmatprep.subr.mxu0 0.0
        %2491 = vmatpush1.msra.mxu0 0.0
        %2492 = vmatprep.subr.mxu0 0.0
        %2493 = vmatpush1.msra.mxu0 0.0
        %2494 = vmatprep.subr.mxu0 0.0
        %2495 = vmatpush1.msra.mxu0 0.0
        %2496 = vmatprep.subr.mxu0 0.0
        %2497 = vmatpush1.msra.mxu0 0.0
        %2498 = vmatprep.subr.mxu0 0.0
        %2499 = vmatpush1.msra.mxu0 0.0
        %2500 = vmatprep.subr.mxu0 0.0
        %2501 = vmatpush1.msra.mxu0 0.0
        %2502 = vmatprep.subr.mxu0 0.0
        %2503 = vmatpush1.msra.mxu0 0.0
        %2504 = vmatprep.subr.mxu0 0.0
        %2505 = vmatpush1.msra.mxu0 0.0
        %2506 = vmatprep.mubr.f32.mxu0 0.0
        %2507 = vmatmul.mubr.f32.gmra.mrb[0].mxu0 %v2440
        %v2508 = vpop.f32.mrb[0].mxu0
        %v2509 = vadd.f32 0.0, %v2508
        %v2510 = vpop.f32.mrb[0].mxu0
        %2511 = vdwg.mxu0
        %v2512 = vadd.f32 %v2300, %v2509
        %v2513 = vadd.f32 %v2512, %v2429
        %v2514 = vxor.u32 %v2513, 2147483648
        %v2515 = vmul.f32 %v2514, 1.442695
        %v2516 = vpow.pop %v2515
        %v2517 = vadd.f32 %v2516, 1.0
        %v2518 = vrcp.pop %v2517
        %v2519 = vmul.f32 1.0, %v2518
        %2520 = vmatprep.subr.mxu0 0.0
        %2521 = vmatpush1.msra.mxu0 %v2420
        %2522 = vmatprep.subr.mxu0 0.0
        %2523 = vmatpush1.msra.mxu0 %v2421
        %2524 = vmatprep.subr.mxu0 0.0
        %2525 = vmatpush1.msra.mxu0 %v2422
        %2526 = vmatprep.subr.mxu0 0.0
        %2527 = vmatpush1.msra.mxu0 %v2423
        %2528 = vmatprep.subr.mxu0 0.0
        %2529 = vmatpush1.msra.mxu0 0.0
        %2530 = vmatprep.subr.mxu0 0.0
        %2531 = vmatpush1.msra.mxu0 0.0
        %2532 = vmatprep.subr.mxu0 0.0
        %2533 = vmatpush1.msra.mxu0 0.0
        %2534 = vmatprep.subr.mxu0 0.0
        %2535 = vmatpush1.msra.mxu0 0.0
        %2536 = vmatprep.subr.mxu0 0.0
        %2537 = vmatpush1.msra.mxu0 0.0
        %2538 = vmatprep.subr.mxu0 0.0
        %2539 = vmatpush1.msra.mxu0 0.0
        %2540 = vmatprep.subr.mxu0 0.0
        %2541 = vmatpush1.msra.mxu0 0.0
        %2542 = vmatprep.subr.mxu0 0.0
        %2543 = vmatpush1.msra.mxu0 0.0
        %2544 = vmatprep.subr.mxu0 0.0
        %2545 = vmatpush1.msra.mxu0 0.0
        %2546 = vmatprep.subr.mxu0 0.0
        %2547 = vmatpush1.msra.mxu0 0.0
        %2548 = vmatprep.subr.mxu0 0.0
        %2549 = vmatpush1.msra.mxu0 0.0
        %2550 = vmatprep.subr.mxu0 0.0
        %2551 = vmatpush1.msra.mxu0 0.0
        %2552 = vmatprep.subr.mxu0 0.0
        %2553 = vmatpush1.msra.mxu0 0.0
        %2554 = vmatprep.subr.mxu0 0.0
        %2555 = vmatpush1.msra.mxu0 0.0
        %2556 = vmatprep.subr.mxu0 0.0
        %2557 = vmatpush1.msra.mxu0 0.0
        %2558 = vmatprep.subr.mxu0 0.0
        %2559 = vmatpush1.msra.mxu0 0.0
        %2560 = vmatprep.subr.mxu0 0.0
        %2561 = vmatpush1.msra.mxu0 0.0
        %2562 = vmatprep.subr.mxu0 0.0
        %2563 = vmatpush1.msra.mxu0 0.0
        %2564 = vmatprep.subr.mxu0 0.0
        %2565 = vmatpush1.msra.mxu0 0.0
        %2566 = vmatprep.subr.mxu0 0.0
        %2567 = vmatpush1.msra.mxu0 0.0
        %2568 = vmatprep.subr.mxu0 0.0
        %2569 = vmatpush1.msra.mxu0 0.0
        %2570 = vmatprep.subr.mxu0 0.0
        %2571 = vmatpush1.msra.mxu0 0.0
        %2572 = vmatprep.subr.mxu0 0.0
        %2573 = vmatpush1.msra.mxu0 0.0
        %2574 = vmatprep.subr.mxu0 0.0
        %2575 = vmatpush1.msra.mxu0 0.0
        %2576 = vmatprep.subr.mxu0 0.0
        %2577 = vmatpush1.msra.mxu0 0.0
        %2578 = vmatprep.subr.mxu0 0.0
        %2579 = vmatpush1.msra.mxu0 0.0
        %2580 = vmatprep.subr.mxu0 0.0
        %2581 = vmatpush1.msra.mxu0 0.0
        %2582 = vmatprep.subr.mxu0 0.0
        %2583 = vmatpush1.msra.mxu0 0.0
        %2584 = vmatprep.mubr.f32.mxu0 0.0
        %2585 = vmatmul.mubr.f32.gmra.mrb[0].mxu0 %v2440
        %v2586 = vpop.f32.mrb[0].mxu0
        %v2587 = vadd.f32 0.0, %v2586
        %v2588 = vpop.f32.mrb[0].mxu0
        %2589 = vdwg.mxu0
        %v2590 = vadd.f32 %v2355, %v2587
        %v2591 = vadd.f32 %v2590, %v2431
        %v2592 = vxor.u32 %v2591, 2147483648
        %v2593 = vmul.f32 %v2592, 1.442695
        %v2594 = vpow.pop %v2593
        %v2595 = vadd.f32 %v2594, 1.0
        %v2596 = vrcp.pop %v2595
        %v2597 = vmul.f32 1.0, %v2596
        %2598 = vmatprep.subr.mxu0 0.0
        %2599 = vmatpush1.msra.mxu0 %v2425
        %2600 = vmatprep.subr.mxu0 0.0
        %2601 = vmatpush1.msra.mxu0 %v2426
        %2602 = vmatprep.subr.mxu0 0.0
        %2603 = vmatpush1.msra.mxu0 %v2427
        %2604 = vmatprep.subr.mxu0 0.0
        %2605 = vmatpush1.msra.mxu0 %v2428
        %2606 = vmatprep.subr.mxu0 0.0
        %2607 = vmatpush1.msra.mxu0 0.0
        %2608 = vmatprep.subr.mxu0 0.0
        %2609 = vmatpush1.msra.mxu0 0.0
        %2610 = vmatprep.subr.mxu0 0.0
        %2611 = vmatpush1.msra.mxu0 0.0
        %2612 = vmatprep.subr.mxu0 0.0
        %2613 = vmatpush1.msra.mxu0 0.0
        %2614 = vmatprep.subr.mxu0 0.0
        %2615 = vmatpush1.msra.mxu0 0.0
        %2616 = vmatprep.subr.mxu0 0.0
        %2617 = vmatpush1.msra.mxu0 0.0
        %2618 = vmatprep.subr.mxu0 0.0
        %2619 = vmatpush1.msra.mxu0 0.0
        %2620 = vmatprep.subr.mxu0 0.0
        %2621 = vmatpush1.msra.mxu0 0.0
        %2622 = vmatprep.subr.mxu0 0.0
        %2623 = vmatpush1.msra.mxu0 0.0
        %2624 = vmatprep.subr.mxu0 0.0
        %2625 = vmatpush1.msra.mxu0 0.0
        %2626 = vmatprep.subr.mxu0 0.0
        %2627 = vmatpush1.msra.mxu0 0.0
        %2628 = vmatprep.subr.mxu0 0.0
        %2629 = vmatpush1.msra.mxu0 0.0
        %2630 = vmatprep.subr.mxu0 0.0
        %2631 = vmatpush1.msra.mxu0 0.0
        %2632 = vmatprep.subr.mxu0 0.0
        %2633 = vmatpush1.msra.mxu0 0.0
        %2634 = vmatprep.subr.mxu0 0.0
        %2635 = vmatpush1.msra.mxu0 0.0
        %2636 = vmatprep.subr.mxu0 0.0
        %2637 = vmatpush1.msra.mxu0 0.0
        %2638 = vmatprep.subr.mxu0 0.0
        %2639 = vmatpush1.msra.mxu0 0.0
        %2640 = vmatprep.subr.mxu0 0.0
        %2641 = vmatpush1.msra.mxu0 0.0
        %2642 = vmatprep.subr.mxu0 0.0
        %2643 = vmatpush1.msra.mxu0 0.0
        %2644 = vmatprep.subr.mxu0 0.0
        %2645 = vmatpush1.msra.mxu0 0.0
        %2646 = vmatprep.subr.mxu0 0.0
        %2647 = vmatpush1.msra.mxu0 0.0
        %2648 = vmatprep.subr.mxu0 0.0
        %2649 = vmatpush1.msra.mxu0 0.0
        %2650 = vmatprep.subr.mxu0 0.0
        %2651 = vmatpush1.msra.mxu0 0.0
        %2652 = vmatprep.subr.mxu0 0.0
        %2653 = vmatpush1.msra.mxu0 0.0
        %2654 = vmatprep.subr.mxu0 0.0
        %2655 = vmatpush1.msra.mxu0 0.0
        %2656 = vmatprep.subr.mxu0 0.0
        %2657 = vmatpush1.msra.mxu0 0.0
        %2658 = vmatprep.subr.mxu0 0.0
        %2659 = vmatpush1.msra.mxu0 0.0
        %2660 = vmatprep.subr.mxu0 0.0
        %2661 = vmatpush1.msra.mxu0 0.0
        %2662 = vmatprep.mubr.f32.mxu0 0.0
        %2663 = vmatmul.mubr.f32.gmra.mrb[0].mxu0 %v2440
        %v2664 = vpop.f32.mrb[0].mxu0
        %v2665 = vadd.f32 %v2433, %v2664
        %v2666 = vpop.f32.mrb[0].mxu0
        %2667 = vdwg.mxu0
        %v2668 = vmul.f32 %v2519, %v2665
        %v2669 = vadd.f32 %v2410, %v2668
        %v2670 = vtanh.pop %v2669
        %v2671 = vsub.f32 1.0, %v2597
        %v2672 = vmul.f32 %v2671, %v2670
        %v2673 = vmul.f32 %v2597, 0.0
        %v2674 = vadd.f32 %v2672, %v2673
        %v2675 = vsel %vm2438, 1, 0
        %vm2676 = vcmp.eq.s32.totalorder %v2675, 1
        %v2677 = vsel %vm2676, %v2674, 0.0
        %v2679 = vsel %vm597, %v2677, 0
        %2681 = vmatprep.subr.mxu0 0.0
        %2682 = vmatpush1.msra.mxu0 %v2415
        %2683 = vmatprep.subr.mxu0 0.0
        %2684 = vmatpush1.msra.mxu0 %v2416
        %2685 = vmatprep.subr.mxu0 0.0
        %2686 = vmatpush1.msra.mxu0 %v2417
        %2687 = vmatprep.subr.mxu0 0.0
        %2688 = vmatpush1.msra.mxu0 %v2418
        %2689 = vmatprep.subr.mxu0 0.0
        %2690 = vmatpush1.msra.mxu0 0.0
        %2691 = vmatprep.subr.mxu0 0.0
        %2692 = vmatpush1.msra.mxu0 0.0
        %2693 = vmatprep.subr.mxu0 0.0
        %2694 = vmatpush1.msra.mxu0 0.0
        %2695 = vmatprep.subr.mxu0 0.0
        %2696 = vmatpush1.msra.mxu0 0.0
        %2697 = vmatprep.subr.mxu0 0.0
        %2698 = vmatpush1.msra.mxu0 0.0
        %2699 = vmatprep.subr.mxu0 0.0
        %2700 = vmatpush1.msra.mxu0 0.0
        %2701 = vmatprep.subr.mxu0 0.0
        %2702 = vmatpush1.msra.mxu0 0.0
        %2703 = vmatprep.subr.mxu0 0.0
        %2704 = vmatpush1.msra.mxu0 0.0
        %2705 = vmatprep.subr.mxu0 0.0
        %2706 = vmatpush1.msra.mxu0 0.0
        %2707 = vmatprep.subr.mxu0 0.0
        %2708 = vmatpush1.msra.mxu0 0.0
        %2709 = vmatprep.subr.mxu0 0.0
        %2710 = vmatpush1.msra.mxu0 0.0
        %2711 = vmatprep.subr.mxu0 0.0
        %2712 = vmatpush1.msra.mxu0 0.0
        %2713 = vmatprep.subr.mxu0 0.0
        %2714 = vmatpush1.msra.mxu0 0.0
        %2715 = vmatprep.subr.mxu0 0.0
        %2716 = vmatpush1.msra.mxu0 0.0
        %2717 = vmatprep.subr.mxu0 0.0
        %2718 = vmatpush1.msra.mxu0 0.0
        %2719 = vmatprep.subr.mxu0 0.0
        %2720 = vmatpush1.msra.mxu0 0.0
        %2721 = vmatprep.subr.mxu0 0.0
        %2722 = vmatpush1.msra.mxu0 0.0
        %2723 = vmatprep.subr.mxu0 0.0
        %2724 = vmatpush1.msra.mxu0 0.0
        %2725 = vmatprep.subr.mxu0 0.0
        %2726 = vmatpush1.msra.mxu0 0.0
        %2727 = vmatprep.subr.mxu0 0.0
        %2728 = vmatpush1.msra.mxu0 0.0
        %2729 = vmatprep.subr.mxu0 0.0
        %2730 = vmatpush1.msra.mxu0 0.0
        %2731 = vmatprep.subr.mxu0 0.0
        %2732 = vmatpush1.msra.mxu0 0.0
        %2733 = vmatprep.subr.mxu0 0.0
        %2734 = vmatpush1.msra.mxu0 0.0
        %2735 = vmatprep.subr.mxu0 0.0
        %2736 = vmatpush1.msra.mxu0 0.0
        %2737 = vmatprep.subr.mxu0 0.0
        %2738 = vmatpush1.msra.mxu0 0.0
        %2739 = vmatprep.subr.mxu0 0.0
        %2740 = vmatpush1.msra.mxu0 0.0
        %2741 = vmatprep.subr.mxu0 0.0
        %2742 = vmatpush1.msra.mxu0 0.0
        %2743 = vmatprep.subr.mxu0 0.0
        %2744 = vmatpush1.msra.mxu0 0.0
        %2745 = vmatprep.mubr.f32.mxu0 0.0
        %2746 = vmatmul.mubr.f32.gmra.mrb[0].mxu0 %v2679
        %v2747 = vpop.f32.mrb[0].mxu0
        %v2748 = vadd.f32 0.0, %v2747
        %v2749 = vpop.f32.mrb[0].mxu0
        %2750 = vdwg.mxu0
        %v2752 = vrot.slane %v2748, 7
        %v2754 = vadd.f32 %v2300, %v2752
        %v2756 = vlaneseq
        %v2757 = vshrl.u32 %v2756, 7
        %v2758 = vsub.s32 0, %v2757
        %v2759 = vrot.slane %v2429, %v2758
        %v2761 = vadd.f32 %v2754, %v2759
        %v2762 = vxor.u32 %v2761, 2147483648
        %v2763 = vmul.f32 %v2762, 1.442695
        %v2764 = vpow.pop %v2763
        %v2765 = vadd.f32 %v2764, 1.0
        %v2766 = vrcp.pop %v2765
        %v2767 = vmul.f32 1.0, %v2766
        %2768 = vmatprep.subr.mxu0 0.0
        %2769 = vmatpush1.msra.mxu0 %v2420
        %2770 = vmatprep.subr.mxu0 0.0
        %2771 = vmatpush1.msra.mxu0 %v2421
        %2772 = vmatprep.subr.mxu0 0.0
        %2773 = vmatpush1.msra.mxu0 %v2422
        %2774 = vmatprep.subr.mxu0 0.0
        %2775 = vmatpush1.msra.mxu0 %v2423
        %2776 = vmatprep.subr.mxu0 0.0
        %2777 = vmatpush1.msra.mxu0 0.0
        %2778 = vmatprep.subr.mxu0 0.0
        %2779 = vmatpush1.msra.mxu0 0.0
        %2780 = vmatprep.subr.mxu0 0.0
        %2781 = vmatpush1.msra.mxu0 0.0
        %2782 = vmatprep.subr.mxu0 0.0
        %2783 = vmatpush1.msra.mxu0 0.0
        %2784 = vmatprep.subr.mxu0 0.0
        %2785 = vmatpush1.msra.mxu0 0.0
        %2786 = vmatprep.subr.mxu0 0.0
        %2787 = vmatpush1.msra.mxu0 0.0
        %2788 = vmatprep.subr.mxu0 0.0
        %2789 = vmatpush1.msra.mxu0 0.0
        %2790 = vmatprep.subr.mxu0 0.0
        %2791 = vmatpush1.msra.mxu0 0.0
        %2792 = vmatprep.subr.mxu0 0.0
        %2793 = vmatpush1.msra.mxu0 0.0
        %2794 = vmatprep.subr.mxu0 0.0
        %2795 = vmatpush1.msra.mxu0 0.0
        %2796 = vmatprep.subr.mxu0 0.0
        %2797 = vmatpush1.msra.mxu0 0.0
        %2798 = vmatprep.subr.mxu0 0.0
        %2799 = vmatpush1.msra.mxu0 0.0
        %2800 = vmatprep.subr.mxu0 0.0
        %2801 = vmatpush1.msra.mxu0 0.0
        %2802 = vmatprep.subr.mxu0 0.0
        %2803 = vmatpush1.msra.mxu0 0.0
        %2804 = vmatprep.subr.mxu0 0.0
        %2805 = vmatpush1.msra.mxu0 0.0
        %2806 = vmatprep.subr.mxu0 0.0
        %2807 = vmatpush1.msra.mxu0 0.0
        %2808 = vmatprep.subr.mxu0 0.0
        %2809 = vmatpush1.msra.mxu0 0.0
        %2810 = vmatprep.subr.mxu0 0.0
        %2811 = vmatpush1.msra.mxu0 0.0
        %2812 = vmatprep.subr.mxu0 0.0
        %2813 = vmatpush1.msra.mxu0 0.0
        %2814 = vmatprep.subr.mxu0 0.0
        %2815 = vmatpush1.msra.mxu0 0.0
        %2816 = vmatprep.subr.mxu0 0.0
        %2817 = vmatpush1.msra.mxu0 0.0
        %2818 = vmatprep.subr.mxu0 0.0
        %2819 = vmatpush1.msra.mxu0 0.0
        %2820 = vmatprep.subr.mxu0 0.0
        %2821 = vmatpush1.msra.mxu0 0.0
        %2822 = vmatprep.subr.mxu0 0.0
        %2823 = vmatpush1.msra.mxu0 0.0
        %2824 = vmatprep.subr.mxu0 0.0
        %2825 = vmatpush1.msra.mxu0 0.0
        %2826 = vmatprep.subr.mxu0 0.0
        %2827 = vmatpush1.msra.mxu0 0.0
        %2828 = vmatprep.subr.mxu0 0.0
        %2829 = vmatpush1.msra.mxu0 0.0
        %2830 = vmatprep.subr.mxu0 0.0
        %2831 = vmatpush1.msra.mxu0 0.0
        %2832 = vmatprep.mubr.f32.mxu0 0.0
        %2833 = vmatmul.mubr.f32.gmra.mrb[0].mxu0 %v2679
        %v2834 = vpop.f32.mrb[0].mxu0
        %v2835 = vadd.f32 0.0, %v2834
        %v2836 = vpop.f32.mrb[0].mxu0
        %2837 = vdwg.mxu0
        %v2839 = vrot.slane %v2835, 7
        %v2841 = vadd.f32 %v2355, %v2839
        %v2843 = vlaneseq
        %v2844 = vshrl.u32 %v2843, 7
        %v2845 = vsub.s32 0, %v2844
        %v2846 = vrot.slane %v2431, %v2845
        %v2848 = vadd.f32 %v2841, %v2846
        %v2849 = vxor.u32 %v2848, 2147483648
        %v2850 = vmul.f32 %v2849, 1.442695
        %v2851 = vpow.pop %v2850
        %v2852 = vadd.f32 %v2851, 1.0
        %v2853 = vrcp.pop %v2852
        %v2854 = vmul.f32 1.0, %v2853
        %2855 = vmatprep.subr.mxu0 0.0
        %2856 = vmatpush1.msra.mxu0 %v2425
        %2857 = vmatprep.subr.mxu0 0.0
        %2858 = vmatpush1.msra.mxu0 %v2426
        %2859 = vmatprep.subr.mxu0 0.0
        %2860 = vmatpush1.msra.mxu0 %v2427
        %2861 = vmatprep.subr.mxu0 0.0
        %2862 = vmatpush1.msra.mxu0 %v2428
        %2863 = vmatprep.subr.mxu0 0.0
        %2864 = vmatpush1.msra.mxu0 0.0
        %2865 = vmatprep.subr.mxu0 0.0
        %2866 = vmatpush1.msra.mxu0 0.0
        %2867 = vmatprep.subr.mxu0 0.0
        %2868 = vmatpush1.msra.mxu0 0.0
        %2869 = vmatprep.subr.mxu0 0.0
        %2870 = vmatpush1.msra.mxu0 0.0
        %2871 = vmatprep.subr.mxu0 0.0
        %2872 = vmatpush1.msra.mxu0 0.0
        %2873 = vmatprep.subr.mxu0 0.0
        %2874 = vmatpush1.msra.mxu0 0.0
        %2875 = vmatprep.subr.mxu0 0.0
        %2876 = vmatpush1.msra.mxu0 0.0
        %2877 = vmatprep.subr.mxu0 0.0
        %2878 = vmatpush1.msra.mxu0 0.0
        %2879 = vmatprep.subr.mxu0 0.0
        %2880 = vmatpush1.msra.mxu0 0.0
        %2881 = vmatprep.subr.mxu0 0.0
        %2882 = vmatpush1.msra.mxu0 0.0
        %2883 = vmatprep.subr.mxu0 0.0
        %2884 = vmatpush1.msra.mxu0 0.0
        %2885 = vmatprep.subr.mxu0 0.0
        %2886 = vmatpush1.msra.mxu0 0.0
        %2887 = vmatprep.subr.mxu0 0.0
        %2888 = vmatpush1.msra.mxu0 0.0
        %2889 = vmatprep.subr.mxu0 0.0
        %2890 = vmatpush1.msra.mxu0 0.0
        %2891 = vmatprep.subr.mxu0 0.0
        %2892 = vmatpush1.msra.mxu0 0.0
        %2893 = vmatprep.subr.mxu0 0.0
        %2894 = vmatpush1.msra.mxu0 0.0
        %2895 = vmatprep.subr.mxu0 0.0
        %2896 = vmatpush1.msra.mxu0 0.0
        %2897 = vmatprep.subr.mxu0 0.0
        %2898 = vmatpush1.msra.mxu0 0.0
        %2899 = vmatprep.subr.mxu0 0.0
        %2900 = vmatpush1.msra.mxu0 0.0
        %2901 = vmatprep.subr.mxu0 0.0
        %2902 = vmatpush1.msra.mxu0 0.0
        %2903 = vmatprep.subr.mxu0 0.0
        %2904 = vmatpush1.msra.mxu0 0.0
        %2905 = vmatprep.subr.mxu0 0.0
        %2906 = vmatpush1.msra.mxu0 0.0
        %2907 = vmatprep.subr.mxu0 0.0
        %2908 = vmatpush1.msra.mxu0 0.0
        %2909 = vmatprep.subr.mxu0 0.0
        %2910 = vmatpush1.msra.mxu0 0.0
        %2911 = vmatprep.subr.mxu0 0.0
        %2912 = vmatpush1.msra.mxu0 0.0
        %2913 = vmatprep.subr.mxu0 0.0
        %2914 = vmatpush1.msra.mxu0 0.0
        %2915 = vmatprep.subr.mxu0 0.0
        %2916 = vmatpush1.msra.mxu0 0.0
        %2917 = vmatprep.subr.mxu0 0.0
        %2918 = vmatpush1.msra.mxu0 0.0
        %2919 = vmatprep.mubr.f32.mxu0 0.0
        %2920 = vmatmul.mubr.f32.gmra.mrb[0].mxu0 %v2679
        %v2921 = vpop.f32.mrb[0].mxu0
        %v2922 = vadd.f32 %v2433, %v2921
        %v2923 = vpop.f32.mrb[0].mxu0
        %2924 = vdwg.mxu0
        %v2926 = vrot.slane %v2922, 7
        %v2928 = vmul.f32 %v2767, %v2926
        %v2929 = vadd.f32 %v2410, %v2928
        %v2930 = vtanh.pop %v2929
        %v2931 = vsub.f32 1.0, %v2854
        %v2932 = vmul.f32 %v2931, %v2930
        %v2933 = vrot.slane %v2677, 7
        %v2935 = vmul.f32 %v2854, %v2933
        %v2936 = vadd.f32 %v2932, %v2935
        %v2937 = vsel %vm2676, %v2936, %v2933
        %v2939 = vrot.slane %v2937, 1
        %v2940 = vsel %vm597, %v2939, 0
        %2942 = vmatprep.subr.mxu0 0.0
        %2943 = vmatpush1.msra.mxu0 %v2415
        %2944 = vmatprep.subr.mxu0 0.0
        %2945 = vmatpush1.msra.mxu0 %v2416
        %2946 = vmatprep.subr.mxu0 0.0
        %2947 = vmatpush1.msra.mxu0 %v2417
        %2948 = vmatprep.subr.mxu0 0.0
        %2949 = vmatpush1.msra.mxu0 %v2418
        %2950 = vmatprep.subr.mxu0 0.0
        %2951 = vmatpush1.msra.mxu0 0.0
        %2952 = vmatprep.subr.mxu0 0.0
        %2953 = vmatpush1.msra.mxu0 0.0
        %2954 = vmatprep.subr.mxu0 0.0
        %2955 = vmatpush1.msra.mxu0 0.0
        %2956 = vmatprep.subr.mxu0 0.0
        %2957 = vmatpush1.msra.mxu0 0.0
        %2958 = vmatprep.subr.mxu0 0.0
        %2959 = vmatpush1.msra.mxu0 0.0
        %2960 = vmatprep.subr.mxu0 0.0
        %2961 = vmatpush1.msra.mxu0 0.0
        %2962 = vmatprep.subr.mxu0 0.0
        %2963 = vmatpush1.msra.mxu0 0.0
        %2964 = vmatprep.subr.mxu0 0.0
        %2965 = vmatpush1.msra.mxu0 0.0
        %2966 = vmatprep.subr.mxu0 0.0
        %2967 = vmatpush1.msra.mxu0 0.0
        %2968 = vmatprep.subr.mxu0 0.0
        %2969 = vmatpush1.msra.mxu0 0.0
        %2970 = vmatprep.subr.mxu0 0.0
        %2971 = vmatpush1.msra.mxu0 0.0
        %2972 = vmatprep.subr.mxu0 0.0
        %2973 = vmatpush1.msra.mxu0 0.0
        %2974 = vmatprep.subr.mxu0 0.0
        %2975 = vmatpush1.msra.mxu0 0.0
        %2976 = vmatprep.subr.mxu0 0.0
        %2977 = vmatpush1.msra.mxu0 0.0
        %2978 = vmatprep.subr.mxu0 0.0
        %2979 = vmatpush1.msra.mxu0 0.0
        %2980 = vmatprep.subr.mxu0 0.0
        %2981 = vmatpush1.msra.mxu0 0.0
        %2982 = vmatprep.subr.mxu0 0.0
        %2983 = vmatpush1.msra.mxu0 0.0
        %2984 = vmatprep.subr.mxu0 0.0
        %2985 = vmatpush1.msra.mxu0 0.0
        %2986 = vmatprep.subr.mxu0 0.0
        %2987 = vmatpush1.msra.mxu0 0.0
        %2988 = vmatprep.subr.mxu0 0.0
        %2989 = vmatpush1.msra.mxu0 0.0
        %2990 = vmatprep.subr.mxu0 0.0
        %2991 = vmatpush1.msra.mxu0 0.0
        %2992 = vmatprep.subr.mxu0 0.0
        %2993 = vmatpush1.msra.mxu0 0.0
        %2994 = vmatprep.subr.mxu0 0.0
        %2995 = vmatpush1.msra.mxu0 0.0
        %2996 = vmatprep.subr.mxu0 0.0
        %2997 = vmatpush1.msra.mxu0 0.0
        %2998 = vmatprep.subr.mxu0 0.0
        %2999 = vmatpush1.msra.mxu0 0.0
        %3000 = vmatprep.subr.mxu0 0.0
        %3001 = vmatpush1.msra.mxu0 0.0
        %3002 = vmatprep.subr.mxu0 0.0
        %3003 = vmatpush1.msra.mxu0 0.0
        %3004 = vmatprep.subr.mxu0 0.0
        %3005 = vmatpush1.msra.mxu0 0.0
        %3006 = vmatprep.mubr.f32.mxu0 0.0
        %3007 = vmatmul.mubr.f32.gmra.mrb[0].mxu0 %v2940
        %v3008 = vpop.f32.mrb[0].mxu0
        %v3009 = vadd.f32 0.0, %v3008
        %v3010 = vpop.f32.mrb[0].mxu0
        %3011 = vdwg.mxu0
        %v3013 = vrot.slane %v3009, 6
        %v3015 = vadd.f32 %v2300, %v3013
        %v3016 = vadd.f32 %v3015, %v2759
        %v3017 = vxor.u32 %v3016, 2147483648
        %v3018 = vmul.f32 %v3017, 1.442695
        %v3019 = vpow.pop %v3018
        %v3020 = vadd.f32 %v3019, 1.0
        %v3021 = vrcp.pop %v3020
        %v3022 = vmul.f32 1.0, %v3021
        %3023 = vmatprep.subr.mxu0 0.0
        %3024 = vmatpush1.msra.mxu0 %v2420
        %3025 = vmatprep.subr.mxu0 0.0
        %3026 = vmatpush1.msra.mxu0 %v2421
        %3027 = vmatprep.subr.mxu0 0.0
        %3028 = vmatpush1.msra.mxu0 %v2422
        %3029 = vmatprep.subr.mxu0 0.0
        %3030 = vmatpush1.msra.mxu0 %v2423
        %3031 = vmatprep.subr.mxu0 0.0
        %3032 = vmatpush1.msra.mxu0 0.0
        %3033 = vmatprep.subr.mxu0 0.0
        %3034 = vmatpush1.msra.mxu0 0.0
        %3035 = vmatprep.subr.mxu0 0.0
        %3036 = vmatpush1.msra.mxu0 0.0
        %3037 = vmatprep.subr.mxu0 0.0
        %3038 = vmatpush1.msra.mxu0 0.0
        %3039 = vmatprep.subr.mxu0 0.0
        %3040 = vmatpush1.msra.mxu0 0.0
        %3041 = vmatprep.subr.mxu0 0.0
        %3042 = vmatpush1.msra.mxu0 0.0
        %3043 = vmatprep.subr.mxu0 0.0
        %3044 = vmatpush1.msra.mxu0 0.0
        %3045 = vmatprep.subr.mxu0 0.0
        %3046 = vmatpush1.msra.mxu0 0.0
        %3047 = vmatprep.subr.mxu0 0.0
        %3048 = vmatpush1.msra.mxu0 0.0
        %3049 = vmatprep.subr.mxu0 0.0
        %3050 = vmatpush1.msra.mxu0 0.0
        %3051 = vmatprep.subr.mxu0 0.0
        %3052 = vmatpush1.msra.mxu0 0.0
        %3053 = vmatprep.subr.mxu0 0.0
        %3054 = vmatpush1.msra.mxu0 0.0
        %3055 = vmatprep.subr.mxu0 0.0
        %3056 = vmatpush1.msra.mxu0 0.0
        %3057 = vmatprep.subr.mxu0 0.0
        %3058 = vmatpush1.msra.mxu0 0.0
        %3059 = vmatprep.subr.mxu0 0.0
        %3060 = vmatpush1.msra.mxu0 0.0
        %3061 = vmatprep.subr.mxu0 0.0
        %3062 = vmatpush1.msra.mxu0 0.0
        %3063 = vmatprep.subr.mxu0 0.0
        %3064 = vmatpush1.msra.mxu0 0.0
        %3065 = vmatprep.subr.mxu0 0.0
        %3066 = vmatpush1.msra.mxu0 0.0
        %3067 = vmatprep.subr.mxu0 0.0
        %3068 = vmatpush1.msra.mxu0 0.0
        %3069 = vmatprep.subr.mxu0 0.0
        %3070 = vmatpush1.msra.mxu0 0.0
        %3071 = vmatprep.subr.mxu0 0.0
        %3072 = vmatpush1.msra.mxu0 0.0
        %3073 = vmatprep.subr.mxu0 0.0
        %3074 = vmatpush1.msra.mxu0 0.0
        %3075 = vmatprep.subr.mxu0 0.0
        %3076 = vmatpush1.msra.mxu0 0.0
        %3077 = vmatprep.subr.mxu0 0.0
        %3078 = vmatpush1.msra.mxu0 0.0
        %3079 = vmatprep.subr.mxu0 0.0
        %3080 = vmatpush1.msra.mxu0 0.0
        %3081 = vmatprep.subr.mxu0 0.0
        %3082 = vmatpush1.msra.mxu0 0.0
        %3083 = vmatprep.subr.mxu0 0.0
        %3084 = vmatpush1.msra.mxu0 0.0
        %3085 = vmatprep.subr.mxu0 0.0
        %3086 = vmatpush1.msra.mxu0 0.0
        %3087 = vmatprep.mubr.f32.mxu0 0.0
        %3088 = vmatmul.mubr.f32.gmra.mrb[0].mxu0 %v2940
        %v3089 = vpop.f32.mrb[0].mxu0
        %v3090 = vadd.f32 0.0, %v3089
        %v3091 = vpop.f32.mrb[0].mxu0
        %3092 = vdwg.mxu0
        %v3094 = vrot.slane %v3090, 6
        %v3096 = vadd.f32 %v2355, %v3094
        %v3097 = vadd.f32 %v3096, %v2846
        %v3098 = vxor.u32 %v3097, 2147483648
        %v3099 = vmul.f32 %v3098, 1.442695
        %v3100 = vpow.pop %v3099
        %v3101 = vadd.f32 %v3100, 1.0
        %v3102 = vrcp.pop %v3101
        %v3103 = vmul.f32 1.0, %v3102
        %3104 = vmatprep.subr.mxu0 0.0
        %3105 = vmatpush1.msra.mxu0 %v2425
        %3106 = vmatprep.subr.mxu0 0.0
        %3107 = vmatpush1.msra.mxu0 %v2426
        %3108 = vmatprep.subr.mxu0 0.0
        %3109 = vmatpush1.msra.mxu0 %v2427
        %3110 = vmatprep.subr.mxu0 0.0
        %3111 = vmatpush1.msra.mxu0 %v2428
        %3112 = vmatprep.subr.mxu0 0.0
        %3113 = vmatpush1.msra.mxu0 0.0
        %3114 = vmatprep.subr.mxu0 0.0
        %3115 = vmatpush1.msra.mxu0 0.0
        %3116 = vmatprep.subr.mxu0 0.0
        %3117 = vmatpush1.msra.mxu0 0.0
        %3118 = vmatprep.subr.mxu0 0.0
        %3119 = vmatpush1.msra.mxu0 0.0
        %3120 = vmatprep.subr.mxu0 0.0
        %3121 = vmatpush1.msra.mxu0 0.0
        %3122 = vmatprep.subr.mxu0 0.0
        %3123 = vmatpush1.msra.mxu0 0.0
        %3124 = vmatprep.subr.mxu0 0.0
        %3125 = vmatpush1.msra.mxu0 0.0
        %3126 = vmatprep.subr.mxu0 0.0
        %3127 = vmatpush1.msra.mxu0 0.0
        %3128 = vmatprep.subr.mxu0 0.0
        %3129 = vmatpush1.msra.mxu0 0.0
        %3130 = vmatprep.subr.mxu0 0.0
        %3131 = vmatpush1.msra.mxu0 0.0
        %3132 = vmatprep.subr.mxu0 0.0
        %3133 = vmatpush1.msra.mxu0 0.0
        %3134 = vmatprep.subr.mxu0 0.0
        %3135 = vmatpush1.msra.mxu0 0.0
        %3136 = vmatprep.subr.mxu0 0.0
        %3137 = vmatpush1.msra.mxu0 0.0
        %3138 = vmatprep.subr.mxu0 0.0
        %3139 = vmatpush1.msra.mxu0 0.0
        %3140 = vmatprep.subr.mxu0 0.0
        %3141 = vmatpush1.msra.mxu0 0.0
        %3142 = vmatprep.subr.mxu0 0.0
        %3143 = vmatpush1.msra.mxu0 0.0
        %3144 = vmatprep.subr.mxu0 0.0
        %3145 = vmatpush1.msra.mxu0 0.0
        %3146 = vmatprep.subr.mxu0 0.0
        %3147 = vmatpush1.msra.mxu0 0.0
        %3148 = vmatprep.subr.mxu0 0.0
        %3149 = vmatpush1.msra.mxu0 0.0
        %3150 = vmatprep.subr.mxu0 0.0
        %3151 = vmatpush1.msra.mxu0 0.0
        %3152 = vmatprep.subr.mxu0 0.0
        %3153 = vmatpush1.msra.mxu0 0.0
        %3154 = vmatprep.subr.mxu0 0.0
        %3155 = vmatpush1.msra.mxu0 0.0
        %3156 = vmatprep.subr.mxu0 0.0
        %3157 = vmatpush1.msra.mxu0 0.0
        %3158 = vmatprep.subr.mxu0 0.0
        %3159 = vmatpush1.msra.mxu0 0.0
        %3160 = vmatprep.subr.mxu0 0.0
        %3161 = vmatpush1.msra.mxu0 0.0
        %3162 = vmatprep.subr.mxu0 0.0
        %3163 = vmatpush1.msra.mxu0 0.0
        %3164 = vmatprep.subr.mxu0 0.0
        %3165 = vmatpush1.msra.mxu0 0.0
        %3166 = vmatprep.subr.mxu0 0.0
        %3167 = vmatpush1.msra.mxu0 0.0
        %3168 = vmatprep.mubr.f32.mxu0 0.0
        %3169 = vmatmul.mubr.f32.gmra.mrb[0].mxu0 %v2940
        %v3170 = vpop.f32.mrb[0].mxu0
        %v3171 = vadd.f32 %v2433, %v3170
        %v3172 = vpop.f32.mrb[0].mxu0
        %3173 = vdwg.mxu0
        %v3175 = vrot.slane %v3171, 6
        %v3177 = vmul.f32 %v3022, %v3175
        %v3178 = vadd.f32 %v2410, %v3177
        %v3179 = vtanh.pop %v3178
        %v3180 = vsub.f32 1.0, %v3103
        %v3181 = vmul.f32 %v3180, %v3179
        %v3182 = vrot.slane %v2937, 7
        %v3184 = vmul.f32 %v3103, %v3182
        %v3185 = vadd.f32 %v3181, %v3184
        %v3186 = vsel %vm2676, %v3185, %v3182
        %v3188 = vrot.slane %v3186, 2
        %v3189 = vsel %vm597, %v3188, 0
        %3191 = vmatprep.subr.mxu0 0.0
        %3192 = vmatpush1.msra.mxu0 %v2415
        %3193 = vmatprep.subr.mxu0 0.0
        %3194 = vmatpush1.msra.mxu0 %v2416
        %3195 = vmatprep.subr.mxu0 0.0
        %3196 = vmatpush1.msra.mxu0 %v2417
        %3197 = vmatprep.subr.mxu0 0.0
        %3198 = vmatpush1.msra.mxu0 %v2418
        %3199 = vmatprep.subr.mxu0 0.0
        %3200 = vmatpush1.msra.mxu0 0.0
        %3201 = vmatprep.subr.mxu0 0.0
        %3202 = vmatpush1.msra.mxu0 0.0
        %3203 = vmatprep.subr.mxu0 0.0
        %3204 = vmatpush1.msra.mxu0 0.0
        %3205 = vmatprep.subr.mxu0 0.0
        %3206 = vmatpush1.msra.mxu0 0.0
        %3207 = vmatprep.subr.mxu0 0.0
        %3208 = vmatpush1.msra.mxu0 0.0
        %3209 = vmatprep.subr.mxu0 0.0
        %3210 = vmatpush1.msra.mxu0 0.0
        %3211 = vmatprep.subr.mxu0 0.0
        %3212 = vmatpush1.msra.mxu0 0.0
        %3213 = vmatprep.subr.mxu0 0.0
        %3214 = vmatpush1.msra.mxu0 0.0
        %3215 = vmatprep.subr.mxu0 0.0
        %3216 = vmatpush1.msra.mxu0 0.0
        %3217 = vmatprep.subr.mxu0 0.0
        %3218 = vmatpush1.msra.mxu0 0.0
        %3219 = vmatprep.subr.mxu0 0.0
        %3220 = vmatpush1.msra.mxu0 0.0
        %3221 = vmatprep.subr.mxu0 0.0
        %3222 = vmatpush1.msra.mxu0 0.0
        %3223 = vmatprep.subr.mxu0 0.0
        %3224 = vmatpush1.msra.mxu0 0.0
        %3225 = vmatprep.subr.mxu0 0.0
        %3226 = vmatpush1.msra.mxu0 0.0
        %3227 = vmatprep.subr.mxu0 0.0
        %3228 = vmatpush1.msra.mxu0 0.0
        %3229 = vmatprep.subr.mxu0 0.0
        %3230 = vmatpush1.msra.mxu0 0.0
        %3231 = vmatprep.subr.mxu0 0.0
        %3232 = vmatpush1.msra.mxu0 0.0
        %3233 = vmatprep.subr.mxu0 0.0
        %3234 = vmatpush1.msra.mxu0 0.0
        %3235 = vmatprep.subr.mxu0 0.0
        %3236 = vmatpush1.msra.mxu0 0.0
        %3237 = vmatprep.subr.mxu0 0.0
        %3238 = vmatpush1.msra.mxu0 0.0
        %3239 = vmatprep.subr.mxu0 0.0
        %3240 = vmatpush1.msra.mxu0 0.0
        %3241 = vmatprep.subr.mxu0 0.0
        %3242 = vmatpush1.msra.mxu0 0.0
        %3243 = vmatprep.subr.mxu0 0.0
        %3244 = vmatpush1.msra.mxu0 0.0
        %3245 = vmatprep.subr.mxu0 0.0
        %3246 = vmatpush1.msra.mxu0 0.0
        %3247 = vmatprep.subr.mxu0 0.0
        %3248 = vmatpush1.msra.mxu0 0.0
        %3249 = vmatprep.subr.mxu0 0.0
        %3250 = vmatpush1.msra.mxu0 0.0
        %3251 = vmatprep.subr.mxu0 0.0
        %3252 = vmatpush1.msra.mxu0 0.0
        %3253 = vmatprep.subr.mxu0 0.0
        %3254 = vmatpush1.msra.mxu0 0.0
        %3255 = vmatprep.mubr.f32.mxu0 0.0
        %3256 = vmatmul.mubr.f32.gmra.mrb[0].mxu0 %v3189
        %v3257 = vpop.f32.mrb[0].mxu0
        %v3258 = vadd.f32 0.0, %v3257
        %v3259 = vpop.f32.mrb[0].mxu0
        %3260 = vdwg.mxu0
        %v3262 = vrot.slane %v3258, 5
        %v3264 = vadd.f32 %v2300, %v3262
        %v3265 = vadd.f32 %v3264, %v2759
        %v3266 = vxor.u32 %v3265, 2147483648
        %v3267 = vmul.f32 %v3266, 1.442695
        %v3268 = vpow.pop %v3267
        %v3269 = vadd.f32 %v3268, 1.0
        %v3270 = vrcp.pop %v3269
        %v3271 = vmul.f32 1.0, %v3270
        %3272 = vmatprep.subr.mxu0 0.0
        %3273 = vmatpush1.msra.mxu0 %v2420
        %3274 = vmatprep.subr.mxu0 0.0
        %3275 = vmatpush1.msra.mxu0 %v2421
        %3276 = vmatprep.subr.mxu0 0.0
        %3277 = vmatpush1.msra.mxu0 %v2422
        %3278 = vmatprep.subr.mxu0 0.0
        %3279 = vmatpush1.msra.mxu0 %v2423
        %3280 = vmatprep.subr.mxu0 0.0
        %3281 = vmatpush1.msra.mxu0 0.0
        %3282 = vmatprep.subr.mxu0 0.0
        %3283 = vmatpush1.msra.mxu0 0.0
        %3284 = vmatprep.subr.mxu0 0.0
        %3285 = vmatpush1.msra.mxu0 0.0
        %3286 = vmatprep.subr.mxu0 0.0
        %3287 = vmatpush1.msra.mxu0 0.0
        %3288 = vmatprep.subr.mxu0 0.0
        %3289 = vmatpush1.msra.mxu0 0.0
        %3290 = vmatprep.subr.mxu0 0.0
        %3291 = vmatpush1.msra.mxu0 0.0
        %3292 = vmatprep.subr.mxu0 0.0
        %3293 = vmatpush1.msra.mxu0 0.0
        %3294 = vmatprep.subr.mxu0 0.0
        %3295 = vmatpush1.msra.mxu0 0.0
        %3296 = vmatprep.subr.mxu0 0.0
        %3297 = vmatpush1.msra.mxu0 0.0
        %3298 = vmatprep.subr.mxu0 0.0
        %3299 = vmatpush1.msra.mxu0 0.0
        %3300 = vmatprep.subr.mxu0 0.0
        %3301 = vmatpush1.msra.mxu0 0.0
        %3302 = vmatprep.subr.mxu0 0.0
        %3303 = vmatpush1.msra.mxu0 0.0
        %3304 = vmatprep.subr.mxu0 0.0
        %3305 = vmatpush1.msra.mxu0 0.0
        %3306 = vmatprep.subr.mxu0 0.0
        %3307 = vmatpush1.msra.mxu0 0.0
        %3308 = vmatprep.subr.mxu0 0.0
        %3309 = vmatpush1.msra.mxu0 0.0
        %3310 = vmatprep.subr.mxu0 0.0
        %3311 = vmatpush1.msra.mxu0 0.0
        %3312 = vmatprep.subr.mxu0 0.0
        %3313 = vmatpush1.msra.mxu0 0.0
        %3314 = vmatprep.subr.mxu0 0.0
        %3315 = vmatpush1.msra.mxu0 0.0
        %3316 = vmatprep.subr.mxu0 0.0
        %3317 = vmatpush1.msra.mxu0 0.0
        %3318 = vmatprep.subr.mxu0 0.0
        %3319 = vmatpush1.msra.mxu0 0.0
        %3320 = vmatprep.subr.mxu0 0.0
        %3321 = vmatpush1.msra.mxu0 0.0
        %3322 = vmatprep.subr.mxu0 0.0
        %3323 = vmatpush1.msra.mxu0 0.0
        %3324 = vmatprep.subr.mxu0 0.0
        %3325 = vmatpush1.msra.mxu0 0.0
        %3326 = vmatprep.subr.mxu0 0.0
        %3327 = vmatpush1.msra.mxu0 0.0
        %3328 = vmatprep.subr.mxu0 0.0
        %3329 = vmatpush1.msra.mxu0 0.0
        %3330 = vmatprep.subr.mxu0 0.0
        %3331 = vmatpush1.msra.mxu0 0.0
        %3332 = vmatprep.subr.mxu0 0.0
        %3333 = vmatpush1.msra.mxu0 0.0
        %3334 = vmatprep.subr.mxu0 0.0
        %3335 = vmatpush1.msra.mxu0 0.0
        %3336 = vmatprep.mubr.f32.mxu0 0.0
        %3337 = vmatmul.mubr.f32.gmra.mrb[0].mxu0 %v3189
        %v3338 = vpop.f32.mrb[0].mxu0
        %v3339 = vadd.f32 0.0, %v3338
        %v3340 = vpop.f32.mrb[0].mxu0
        %3341 = vdwg.mxu0
        %v3343 = vrot.slane %v3339, 5
        %v3345 = vadd.f32 %v2355, %v3343
        %v3346 = vadd.f32 %v3345, %v2846
        %v3347 = vxor.u32 %v3346, 2147483648
        %v3348 = vmul.f32 %v3347, 1.442695
        %v3349 = vpow.pop %v3348
        %v3350 = vadd.f32 %v3349, 1.0
        %v3351 = vrcp.pop %v3350
        %v3352 = vmul.f32 1.0, %v3351
        %3353 = vmatprep.subr.mxu0 0.0
        %3354 = vmatpush1.msra.mxu0 %v2425
        %3355 = vmatprep.subr.mxu0 0.0
        %3356 = vmatpush1.msra.mxu0 %v2426
        %3357 = vmatprep.subr.mxu0 0.0
        %3358 = vmatpush1.msra.mxu0 %v2427
        %3359 = vmatprep.subr.mxu0 0.0
        %3360 = vmatpush1.msra.mxu0 %v2428
        %3361 = vmatprep.subr.mxu0 0.0
        %3362 = vmatpush1.msra.mxu0 0.0
        %3363 = vmatprep.subr.mxu0 0.0
        %3364 = vmatpush1.msra.mxu0 0.0
        %3365 = vmatprep.subr.mxu0 0.0
        %3366 = vmatpush1.msra.mxu0 0.0
        %3367 = vmatprep.subr.mxu0 0.0
        %3368 = vmatpush1.msra.mxu0 0.0
        %3369 = vmatprep.subr.mxu0 0.0
        %3370 = vmatpush1.msra.mxu0 0.0
        %3371 = vmatprep.subr.mxu0 0.0
        %3372 = vmatpush1.msra.mxu0 0.0
        %3373 = vmatprep.subr.mxu0 0.0
        %3374 = vmatpush1.msra.mxu0 0.0
        %3375 = vmatprep.subr.mxu0 0.0
        %3376 = vmatpush1.msra.mxu0 0.0
        %3377 = vmatprep.subr.mxu0 0.0
        %3378 = vmatpush1.msra.mxu0 0.0
        %3379 = vmatprep.subr.mxu0 0.0
        %3380 = vmatpush1.msra.mxu0 0.0
        %3381 = vmatprep.subr.mxu0 0.0
        %3382 = vmatpush1.msra.mxu0 0.0
        %3383 = vmatprep.subr.mxu0 0.0
        %3384 = vmatpush1.msra.mxu0 0.0
        %3385 = vmatprep.subr.mxu0 0.0
        %3386 = vmatpush1.msra.mxu0 0.0
        %3387 = vmatprep.subr.mxu0 0.0
        %3388 = vmatpush1.msra.mxu0 0.0
        %3389 = vmatprep.subr.mxu0 0.0
        %3390 = vmatpush1.msra.mxu0 0.0
        %3391 = vmatprep.subr.mxu0 0.0
        %3392 = vmatpush1.msra.mxu0 0.0
        %3393 = vmatprep.subr.mxu0 0.0
        %3394 = vmatpush1.msra.mxu0 0.0
        %3395 = vmatprep.subr.mxu0 0.0
        %3396 = vmatpush1.msra.mxu0 0.0
        %3397 = vmatprep.subr.mxu0 0.0
        %3398 = vmatpush1.msra.mxu0 0.0
        %3399 = vmatprep.subr.mxu0 0.0
        %3400 = vmatpush1.msra.mxu0 0.0
        %3401 = vmatprep.subr.mxu0 0.0
        %3402 = vmatpush1.msra.mxu0 0.0
        %3403 = vmatprep.subr.mxu0 0.0
        %3404 = vmatpush1.msra.mxu0 0.0
        %3405 = vmatprep.subr.mxu0 0.0
        %3406 = vmatpush1.msra.mxu0 0.0
        %3407 = vmatprep.subr.mxu0 0.0
        %3408 = vmatpush1.msra.mxu0 0.0
        %3409 = vmatprep.subr.mxu0 0.0
        %3410 = vmatpush1.msra.mxu0 0.0
        %3411 = vmatprep.subr.mxu0 0.0
        %3412 = vmatpush1.msra.mxu0 0.0
        %3413 = vmatprep.subr.mxu0 0.0
        %3414 = vmatpush1.msra.mxu0 0.0
        %3415 = vmatprep.subr.mxu0 0.0
        %3416 = vmatpush1.msra.mxu0 0.0
        %3417 = vmatprep.mubr.f32.mxu0 0.0
        %3418 = vmatmul.mubr.f32.gmra.mrb[0].mxu0 %v3189
        %v3419 = vpop.f32.mrb[0].mxu0
        %v3420 = vadd.f32 %v2433, %v3419
        %v3421 = vpop.f32.mrb[0].mxu0
        %3422 = vdwg.mxu0
        %v3424 = vrot.slane %v3420, 5
        %v3426 = vmul.f32 %v3271, %v3424
        %v3427 = vadd.f32 %v2410, %v3426
        %v3428 = vtanh.pop %v3427
        %v3429 = vsub.f32 1.0, %v3352
        %v3430 = vmul.f32 %v3429, %v3428
        %v3431 = vrot.slane %v3186, 7
        %v3433 = vmul.f32 %v3352, %v3431
        %v3434 = vadd.f32 %v3430, %v3433
        %v3435 = vsel %vm2676, %v3434, %v3431
        %v3437 = vrot.slane %v3435, 3
        %v3438 = vsel %vm597, %v3437, 0
        %3440 = vmatprep.subr.mxu0 0.0
        %3441 = vmatpush1.msra.mxu0 %v2415
        %3442 = vmatprep.subr.mxu0 0.0
        %3443 = vmatpush1.msra.mxu0 %v2416
        %3444 = vmatprep.subr.mxu0 0.0
        %3445 = vmatpush1.msra.mxu0 %v2417
        %3446 = vmatprep.subr.mxu0 0.0
        %3447 = vmatpush1.msra.mxu0 %v2418
        %3448 = vmatprep.subr.mxu0 0.0
        %3449 = vmatpush1.msra.mxu0 0.0
        %3450 = vmatprep.subr.mxu0 0.0
        %3451 = vmatpush1.msra.mxu0 0.0
        %3452 = vmatprep.subr.mxu0 0.0
        %3453 = vmatpush1.msra.mxu0 0.0
        %3454 = vmatprep.subr.mxu0 0.0
        %3455 = vmatpush1.msra.mxu0 0.0
        %3456 = vmatprep.subr.mxu0 0.0
        %3457 = vmatpush1.msra.mxu0 0.0
        %3458 = vmatprep.subr.mxu0 0.0
        %3459 = vmatpush1.msra.mxu0 0.0
        %3460 = vmatprep.subr.mxu0 0.0
        %3461 = vmatpush1.msra.mxu0 0.0
        %3462 = vmatprep.subr.mxu0 0.0
        %3463 = vmatpush1.msra.mxu0 0.0
        %3464 = vmatprep.subr.mxu0 0.0
        %3465 = vmatpush1.msra.mxu0 0.0
        %3466 = vmatprep.subr.mxu0 0.0
        %3467 = vmatpush1.msra.mxu0 0.0
        %3468 = vmatprep.subr.mxu0 0.0
        %3469 = vmatpush1.msra.mxu0 0.0
        %3470 = vmatprep.subr.mxu0 0.0
        %3471 = vmatpush1.msra.mxu0 0.0
        %3472 = vmatprep.subr.mxu0 0.0
        %3473 = vmatpush1.msra.mxu0 0.0
        %3474 = vmatprep.subr.mxu0 0.0
        %3475 = vmatpush1.msra.mxu0 0.0
        %3476 = vmatprep.subr.mxu0 0.0
        %3477 = vmatpush1.msra.mxu0 0.0
        %3478 = vmatprep.subr.mxu0 0.0
        %3479 = vmatpush1.msra.mxu0 0.0
        %3480 = vmatprep.subr.mxu0 0.0
        %3481 = vmatpush1.msra.mxu0 0.0
        %3482 = vmatprep.subr.mxu0 0.0
        %3483 = vmatpush1.msra.mxu0 0.0
        %3484 = vmatprep.subr.mxu0 0.0
        %3485 = vmatpush1.msra.mxu0 0.0
        %3486 = vmatprep.subr.mxu0 0.0
        %3487 = vmatpush1.msra.mxu0 0.0
        %3488 = vmatprep.subr.mxu0 0.0
        %3489 = vmatpush1.msra.mxu0 0.0
        %3490 = vmatprep.subr.mxu0 0.0
        %3491 = vmatpush1.msra.mxu0 0.0
        %3492 = vmatprep.subr.mxu0 0.0
        %3493 = vmatpush1.msra.mxu0 0.0
        %3494 = vmatprep.subr.mxu0 0.0
        %3495 = vmatpush1.msra.mxu0 0.0
        %3496 = vmatprep.subr.mxu0 0.0
        %3497 = vmatpush1.msra.mxu0 0.0
        %3498 = vmatprep.subr.mxu0 0.0
        %3499 = vmatpush1.msra.mxu0 0.0
        %3500 = vmatprep.subr.mxu0 0.0
        %3501 = vmatpush1.msra.mxu0 0.0
        %3502 = vmatprep.subr.mxu0 0.0
        %3503 = vmatpush1.msra.mxu0 0.0
        %3504 = vmatprep.mubr.f32.mxu0 0.0
        %3505 = vmatmul.mubr.f32.gmra.mrb[0].mxu0 %v3438
        %v3506 = vpop.f32.mrb[0].mxu0
        %v3507 = vadd.f32 0.0, %v3506
        %v3508 = vpop.f32.mrb[0].mxu0
        %3509 = vdwg.mxu0
        %v3511 = vrot.slane %v3507, 4
        %v3513 = vadd.f32 %v2300, %v3511
        %v3514 = vadd.f32 %v3513, %v2759
        %v3515 = vxor.u32 %v3514, 2147483648
        %v3516 = vmul.f32 %v3515, 1.442695
        %v3517 = vpow.pop %v3516
        %v3518 = vadd.f32 %v3517, 1.0
        %v3519 = vrcp.pop %v3518
        %v3520 = vmul.f32 1.0, %v3519
        %3521 = vmatprep.subr.mxu0 0.0
        %3522 = vmatpush1.msra.mxu0 %v2420
        %3523 = vmatprep.subr.mxu0 0.0
        %3524 = vmatpush1.msra.mxu0 %v2421
        %3525 = vmatprep.subr.mxu0 0.0
        %3526 = vmatpush1.msra.mxu0 %v2422
        %3527 = vmatprep.subr.mxu0 0.0
        %3528 = vmatpush1.msra.mxu0 %v2423
        %3529 = vmatprep.subr.mxu0 0.0
        %3530 = vmatpush1.msra.mxu0 0.0
        %3531 = vmatprep.subr.mxu0 0.0
        %3532 = vmatpush1.msra.mxu0 0.0
        %3533 = vmatprep.subr.mxu0 0.0
        %3534 = vmatpush1.msra.mxu0 0.0
        %3535 = vmatprep.subr.mxu0 0.0
        %3536 = vmatpush1.msra.mxu0 0.0
        %3537 = vmatprep.subr.mxu0 0.0
        %3538 = vmatpush1.msra.mxu0 0.0
        %3539 = vmatprep.subr.mxu0 0.0
        %3540 = vmatpush1.msra.mxu0 0.0
        %3541 = vmatprep.subr.mxu0 0.0
        %3542 = vmatpush1.msra.mxu0 0.0
        %3543 = vmatprep.subr.mxu0 0.0
        %3544 = vmatpush1.msra.mxu0 0.0
        %3545 = vmatprep.subr.mxu0 0.0
        %3546 = vmatpush1.msra.mxu0 0.0
        %3547 = vmatprep.subr.mxu0 0.0
        %3548 = vmatpush1.msra.mxu0 0.0
        %3549 = vmatprep.subr.mxu0 0.0
        %3550 = vmatpush1.msra.mxu0 0.0
        %3551 = vmatprep.subr.mxu0 0.0
        %3552 = vmatpush1.msra.mxu0 0.0
        %3553 = vmatprep.subr.mxu0 0.0
        %3554 = vmatpush1.msra.mxu0 0.0
        %3555 = vmatprep.subr.mxu0 0.0
        %3556 = vmatpush1.msra.mxu0 0.0
        %3557 = vmatprep.subr.mxu0 0.0
        %3558 = vmatpush1.msra.mxu0 0.0
        %3559 = vmatprep.subr.mxu0 0.0
        %3560 = vmatpush1.msra.mxu0 0.0
        %3561 = vmatprep.subr.mxu0 0.0
        %3562 = vmatpush1.msra.mxu0 0.0
        %3563 = vmatprep.subr.mxu0 0.0
        %3564 = vmatpush1.msra.mxu0 0.0
        %3565 = vmatprep.subr.mxu0 0.0
        %3566 = vmatpush1.msra.mxu0 0.0
        %3567 = vmatprep.subr.mxu0 0.0
        %3568 = vmatpush1.msra.mxu0 0.0
        %3569 = vmatprep.subr.mxu0 0.0
        %3570 = vmatpush1.msra.mxu0 0.0
        %3571 = vmatprep.subr.mxu0 0.0
        %3572 = vmatpush1.msra.mxu0 0.0
        %3573 = vmatprep.subr.mxu0 0.0
        %3574 = vmatpush1.msra.mxu0 0.0
        %3575 = vmatprep.subr.mxu0 0.0
        %3576 = vmatpush1.msra.mxu0 0.0
        %3577 = vmatprep.subr.mxu0 0.0
        %3578 = vmatpush1.msra.mxu0 0.0
        %3579 = vmatprep.subr.mxu0 0.0
        %3580 = vmatpush1.msra.mxu0 0.0
        %3581 = vmatprep.subr.mxu0 0.0
        %3582 = vmatpush1.msra.mxu0 0.0
        %3583 = vmatprep.subr.mxu0 0.0
        %3584 = vmatpush1.msra.mxu0 0.0
        %3585 = vmatprep.mubr.f32.mxu0 0.0
        %3586 = vmatmul.mubr.f32.gmra.mrb[0].mxu0 %v3438
        %v3587 = vpop.f32.mrb[0].mxu0
        %v3588 = vadd.f32 0.0, %v3587
        %v3589 = vpop.f32.mrb[0].mxu0
        %3590 = vdwg.mxu0
        %v3592 = vrot.slane %v3588, 4
        %v3594 = vadd.f32 %v2355, %v3592
        %v3595 = vadd.f32 %v3594, %v2846
        %v3596 = vxor.u32 %v3595, 2147483648
        %v3597 = vmul.f32 %v3596, 1.442695
        %v3598 = vpow.pop %v3597
        %v3599 = vadd.f32 %v3598, 1.0
        %v3600 = vrcp.pop %v3599
        %v3601 = vmul.f32 1.0, %v3600
        %3602 = vmatprep.subr.mxu0 0.0
        %3603 = vmatpush1.msra.mxu0 %v2425
        %3604 = vmatprep.subr.mxu0 0.0
        %3605 = vmatpush1.msra.mxu0 %v2426
        %3606 = vmatprep.subr.mxu0 0.0
        %3607 = vmatpush1.msra.mxu0 %v2427
        %3608 = vmatprep.subr.mxu0 0.0
        %3609 = vmatpush1.msra.mxu0 %v2428
        %3610 = vmatprep.subr.mxu0 0.0
        %3611 = vmatpush1.msra.mxu0 0.0
        %3612 = vmatprep.subr.mxu0 0.0
        %3613 = vmatpush1.msra.mxu0 0.0
        %3614 = vmatprep.subr.mxu0 0.0
        %3615 = vmatpush1.msra.mxu0 0.0
        %3616 = vmatprep.subr.mxu0 0.0
        %3617 = vmatpush1.msra.mxu0 0.0
        %3618 = vmatprep.subr.mxu0 0.0
        %3619 = vmatpush1.msra.mxu0 0.0
        %3620 = vmatprep.subr.mxu0 0.0
        %3621 = vmatpush1.msra.mxu0 0.0
        %3622 = vmatprep.subr.mxu0 0.0
        %3623 = vmatpush1.msra.mxu0 0.0
        %3624 = vmatprep.subr.mxu0 0.0
        %3625 = vmatpush1.msra.mxu0 0.0
        %3626 = vmatprep.subr.mxu0 0.0
        %3627 = vmatpush1.msra.mxu0 0.0
        %3628 = vmatprep.subr.mxu0 0.0
        %3629 = vmatpush1.msra.mxu0 0.0
        %3630 = vmatprep.subr.mxu0 0.0
        %3631 = vmatpush1.msra.mxu0 0.0
        %3632 = vmatprep.subr.mxu0 0.0
        %3633 = vmatpush1.msra.mxu0 0.0
        %3634 = vmatprep.subr.mxu0 0.0
        %3635 = vmatpush1.msra.mxu0 0.0
        %3636 = vmatprep.subr.mxu0 0.0
        %3637 = vmatpush1.msra.mxu0 0.0
        %3638 = vmatprep.subr.mxu0 0.0
        %3639 = vmatpush1.msra.mxu0 0.0
        %3640 = vmatprep.subr.mxu0 0.0
        %3641 = vmatpush1.msra.mxu0 0.0
        %3642 = vmatprep.subr.mxu0 0.0
        %3643 = vmatpush1.msra.mxu0 0.0
        %3644 = vmatprep.subr.mxu0 0.0
        %3645 = vmatpush1.msra.mxu0 0.0
        %3646 = vmatprep.subr.mxu0 0.0
        %3647 = vmatpush1.msra.mxu0 0.0
        %3648 = vmatprep.subr.mxu0 0.0
        %3649 = vmatpush1.msra.mxu0 0.0
        %3650 = vmatprep.subr.mxu0 0.0
        %3651 = vmatpush1.msra.mxu0 0.0
        %3652 = vmatprep.subr.mxu0 0.0
        %3653 = vmatpush1.msra.mxu0 0.0
        %3654 = vmatprep.subr.mxu0 0.0
        %3655 = vmatpush1.msra.mxu0 0.0
        %3656 = vmatprep.subr.mxu0 0.0
        %3657 = vmatpush1.msra.mxu0 0.0
        %3658 = vmatprep.subr.mxu0 0.0
        %3659 = vmatpush1.msra.mxu0 0.0
        %3660 = vmatprep.subr.mxu0 0.0
        %3661 = vmatpush1.msra.mxu0 0.0
        %3662 = vmatprep.subr.mxu0 0.0
        %3663 = vmatpush1.msra.mxu0 0.0
        %3664 = vmatprep.subr.mxu0 0.0
        %3665 = vmatpush1.msra.mxu0 0.0
        %3666 = vmatprep.mubr.f32.mxu0 0.0
        %3667 = vmatmul.mubr.f32.gmra.mrb[0].mxu0 %v3438
        %v3668 = vpop.f32.mrb[0].mxu0
        %v3669 = vadd.f32 %v2433, %v3668
        %v3670 = vpop.f32.mrb[0].mxu0
        %3671 = vdwg.mxu0
        %v3673 = vrot.slane %v3669, 4
        %v3675 = vmul.f32 %v3520, %v3673
        %v3676 = vadd.f32 %v2410, %v3675
        %v3677 = vtanh.pop %v3676
        %v3678 = vsub.f32 1.0, %v3601
        %v3679 = vmul.f32 %v3678, %v3677
        %v3680 = vrot.slane %v3435, 7
        %v3682 = vmul.f32 %v3601, %v3680
        %v3683 = vadd.f32 %v3679, %v3682
        %v3684 = vsel %vm2676, %v3683, %v3680
        %v3686 = vrot.slane %v3684, 4
        %v3687 = vsel %vm597, %v3686, 0
        %3689 = vmatprep.subr.mxu0 0.0
        %3690 = vmatpush1.msra.mxu0 %v2415
        %3691 = vmatprep.subr.mxu0 0.0
        %3692 = vmatpush1.msra.mxu0 %v2416
        %3693 = vmatprep.subr.mxu0 0.0
        %3694 = vmatpush1.msra.mxu0 %v2417
        %3695 = vmatprep.subr.mxu0 0.0
        %3696 = vmatpush1.msra.mxu0 %v2418
        %3697 = vmatprep.subr.mxu0 0.0
        %3698 = vmatpush1.msra.mxu0 0.0
        %3699 = vmatprep.subr.mxu0 0.0
        %3700 = vmatpush1.msra.mxu0 0.0
        %3701 = vmatprep.subr.mxu0 0.0
        %3702 = vmatpush1.msra.mxu0 0.0
        %3703 = vmatprep.subr.mxu0 0.0
        %3704 = vmatpush1.msra.mxu0 0.0
        %3705 = vmatprep.subr.mxu0 0.0
        %3706 = vmatpush1.msra.mxu0 0.0
        %3707 = vmatprep.subr.mxu0 0.0
        %3708 = vmatpush1.msra.mxu0 0.0
        %3709 = vmatprep.subr.mxu0 0.0
        %3710 = vmatpush1.msra.mxu0 0.0
        %3711 = vmatprep.subr.mxu0 0.0
        %3712 = vmatpush1.msra.mxu0 0.0
        %3713 = vmatprep.subr.mxu0 0.0
        %3714 = vmatpush1.msra.mxu0 0.0
        %3715 = vmatprep.subr.mxu0 0.0
        %3716 = vmatpush1.msra.mxu0 0.0
        %3717 = vmatprep.subr.mxu0 0.0
        %3718 = vmatpush1.msra.mxu0 0.0
        %3719 = vmatprep.subr.mxu0 0.0
        %3720 = vmatpush1.msra.mxu0 0.0
        %3721 = vmatprep.subr.mxu0 0.0
        %3722 = vmatpush1.msra.mxu0 0.0
        %3723 = vmatprep.subr.mxu0 0.0
        %3724 = vmatpush1.msra.mxu0 0.0
        %3725 = vmatprep.subr.mxu0 0.0
        %3726 = vmatpush1.msra.mxu0 0.0
        %3727 = vmatprep.subr.mxu0 0.0
        %3728 = vmatpush1.msra.mxu0 0.0
        %3729 = vmatprep.subr.mxu0 0.0
        %3730 = vmatpush1.msra.mxu0 0.0
        %3731 = vmatprep.subr.mxu0 0.0
        %3732 = vmatpush1.msra.mxu0 0.0
        %3733 = vmatprep.subr.mxu0 0.0
        %3734 = vmatpush1.msra.mxu0 0.0
        %3735 = vmatprep.subr.mxu0 0.0
        %3736 = vmatpush1.msra.mxu0 0.0
        %3737 = vmatprep.subr.mxu0 0.0
        %3738 = vmatpush1.msra.mxu0 0.0
        %3739 = vmatprep.subr.mxu0 0.0
        %3740 = vmatpush1.msra.mxu0 0.0
        %3741 = vmatprep.subr.mxu0 0.0
        %3742 = vmatpush1.msra.mxu0 0.0
        %3743 = vmatprep.subr.mxu0 0.0
        %3744 = vmatpush1.msra.mxu0 0.0
        %3745 = vmatprep.subr.mxu0 0.0
        %3746 = vmatpush1.msra.mxu0 0.0
        %3747 = vmatprep.subr.mxu0 0.0
        %3748 = vmatpush1.msra.mxu0 0.0
        %3749 = vmatprep.subr.mxu0 0.0
        %3750 = vmatpush1.msra.mxu0 0.0
        %3751 = vmatprep.subr.mxu0 0.0
        %3752 = vmatpush1.msra.mxu0 0.0
        %3753 = vmatprep.mubr.f32.mxu0 0.0
        %3754 = vmatmul.mubr.f32.gmra.mrb[0].mxu0 %v3687
        %v3755 = vpop.f32.mrb[0].mxu0
        %v3756 = vadd.f32 0.0, %v3755
        %v3757 = vpop.f32.mrb[0].mxu0
        %3758 = vdwg.mxu0
        %v3760 = vrot.slane %v3756, 3
        %v3762 = vadd.f32 %v2300, %v3760
        %v3763 = vadd.f32 %v3762, %v2759
        %v3764 = vxor.u32 %v3763, 2147483648
        %v3765 = vmul.f32 %v3764, 1.442695
        %v3766 = vpow.pop %v3765
        %v3767 = vadd.f32 %v3766, 1.0
        %v3768 = vrcp.pop %v3767
        %v3769 = vmul.f32 1.0, %v3768
        %3770 = vmatprep.subr.mxu0 0.0
        %3771 = vmatpush1.msra.mxu0 %v2420
        %3772 = vmatprep.subr.mxu0 0.0
        %3773 = vmatpush1.msra.mxu0 %v2421
        %3774 = vmatprep.subr.mxu0 0.0
        %3775 = vmatpush1.msra.mxu0 %v2422
        %3776 = vmatprep.subr.mxu0 0.0
        %3777 = vmatpush1.msra.mxu0 %v2423
        %3778 = vmatprep.subr.mxu0 0.0
        %3779 = vmatpush1.msra.mxu0 0.0
        %3780 = vmatprep.subr.mxu0 0.0
        %3781 = vmatpush1.msra.mxu0 0.0
        %3782 = vmatprep.subr.mxu0 0.0
        %3783 = vmatpush1.msra.mxu0 0.0
        %3784 = vmatprep.subr.mxu0 0.0
        %3785 = vmatpush1.msra.mxu0 0.0
        %3786 = vmatprep.subr.mxu0 0.0
        %3787 = vmatpush1.msra.mxu0 0.0
        %3788 = vmatprep.subr.mxu0 0.0
        %3789 = vmatpush1.msra.mxu0 0.0
        %3790 = vmatprep.subr.mxu0 0.0
        %3791 = vmatpush1.msra.mxu0 0.0
        %3792 = vmatprep.subr.mxu0 0.0
        %3793 = vmatpush1.msra.mxu0 0.0
        %3794 = vmatprep.subr.mxu0 0.0
        %3795 = vmatpush1.msra.mxu0 0.0
        %3796 = vmatprep.subr.mxu0 0.0
        %3797 = vmatpush1.msra.mxu0 0.0
        %3798 = vmatprep.subr.mxu0 0.0
        %3799 = vmatpush1.msra.mxu0 0.0
        %3800 = vmatprep.subr.mxu0 0.0
        %3801 = vmatpush1.msra.mxu0 0.0
        %3802 = vmatprep.subr.mxu0 0.0
        %3803 = vmatpush1.msra.mxu0 0.0
        %3804 = vmatprep.subr.mxu0 0.0
        %3805 = vmatpush1.msra.mxu0 0.0
        %3806 = vmatprep.subr.mxu0 0.0
        %3807 = vmatpush1.msra.mxu0 0.0
        %3808 = vmatprep.subr.mxu0 0.0
        %3809 = vmatpush1.msra.mxu0 0.0
        %3810 = vmatprep.subr.mxu0 0.0
        %3811 = vmatpush1.msra.mxu0 0.0
        %3812 = vmatprep.subr.mxu0 0.0
        %3813 = vmatpush1.msra.mxu0 0.0
        %3814 = vmatprep.subr.mxu0 0.0
        %3815 = vmatpush1.msra.mxu0 0.0
        %3816 = vmatprep.subr.mxu0 0.0
        %3817 = vmatpush1.msra.mxu0 0.0
        %3818 = vmatprep.subr.mxu0 0.0
        %3819 = vmatpush1.msra.mxu0 0.0
        %3820 = vmatprep.subr.mxu0 0.0
        %3821 = vmatpush1.msra.mxu0 0.0
        %3822 = vmatprep.subr.mxu0 0.0
        %3823 = vmatpush1.msra.mxu0 0.0
        %3824 = vmatprep.subr.mxu0 0.0
        %3825 = vmatpush1.msra.mxu0 0.0
        %3826 = vmatprep.subr.mxu0 0.0
        %3827 = vmatpush1.msra.mxu0 0.0
        %3828 = vmatprep.subr.mxu0 0.0
        %3829 = vmatpush1.msra.mxu0 0.0
        %3830 = vmatprep.subr.mxu0 0.0
        %3831 = vmatpush1.msra.mxu0 0.0
        %3832 = vmatprep.subr.mxu0 0.0
        %3833 = vmatpush1.msra.mxu0 0.0
        %3834 = vmatprep.mubr.f32.mxu0 0.0
        %3835 = vmatmul.mubr.f32.gmra.mrb[0].mxu0 %v3687
        %v3836 = vpop.f32.mrb[0].mxu0
        %v3837 = vadd.f32 0.0, %v3836
        %v3838 = vpop.f32.mrb[0].mxu0
        %3839 = vdwg.mxu0
        %v3841 = vrot.slane %v3837, 3
        %v3843 = vadd.f32 %v2355, %v3841
        %v3844 = vadd.f32 %v3843, %v2846
        %v3845 = vxor.u32 %v3844, 2147483648
        %v3846 = vmul.f32 %v3845, 1.442695
        %v3847 = vpow.pop %v3846
        %v3848 = vadd.f32 %v3847, 1.0
        %v3849 = vrcp.pop %v3848
        %v3850 = vmul.f32 1.0, %v3849
        %3851 = vmatprep.subr.mxu0 0.0
        %3852 = vmatpush1.msra.mxu0 %v2425
        %3853 = vmatprep.subr.mxu0 0.0
        %3854 = vmatpush1.msra.mxu0 %v2426
        %3855 = vmatprep.subr.mxu0 0.0
        %3856 = vmatpush1.msra.mxu0 %v2427
        %3857 = vmatprep.subr.mxu0 0.0
        %3858 = vmatpush1.msra.mxu0 %v2428
        %3859 = vmatprep.subr.mxu0 0.0
        %3860 = vmatpush1.msra.mxu0 0.0
        %3861 = vmatprep.subr.mxu0 0.0
        %3862 = vmatpush1.msra.mxu0 0.0
        %3863 = vmatprep.subr.mxu0 0.0
        %3864 = vmatpush1.msra.mxu0 0.0
        %3865 = vmatprep.subr.mxu0 0.0
        %3866 = vmatpush1.msra.mxu0 0.0
        %3867 = vmatprep.subr.mxu0 0.0
        %3868 = vmatpush1.msra.mxu0 0.0
        %3869 = vmatprep.subr.mxu0 0.0
        %3870 = vmatpush1.msra.mxu0 0.0
        %3871 = vmatprep.subr.mxu0 0.0
        %3872 = vmatpush1.msra.mxu0 0.0
        %3873 = vmatprep.subr.mxu0 0.0
        %3874 = vmatpush1.msra.mxu0 0.0
        %3875 = vmatprep.subr.mxu0 0.0
        %3876 = vmatpush1.msra.mxu0 0.0
        %3877 = vmatprep.subr.mxu0 0.0
        %3878 = vmatpush1.msra.mxu0 0.0
        %3879 = vmatprep.subr.mxu0 0.0
        %3880 = vmatpush1.msra.mxu0 0.0
        %3881 = vmatprep.subr.mxu0 0.0
        %3882 = vmatpush1.msra.mxu0 0.0
        %3883 = vmatprep.subr.mxu0 0.0
        %3884 = vmatpush1.msra.mxu0 0.0
        %3885 = vmatprep.subr.mxu0 0.0
        %3886 = vmatpush1.msra.mxu0 0.0
        %3887 = vmatprep.subr.mxu0 0.0
        %3888 = vmatpush1.msra.mxu0 0.0
        %3889 = vmatprep.subr.mxu0 0.0
        %3890 = vmatpush1.msra.mxu0 0.0
        %3891 = vmatprep.subr.mxu0 0.0
        %3892 = vmatpush1.msra.mxu0 0.0
        %3893 = vmatprep.subr.mxu0 0.0
        %3894 = vmatpush1.msra.mxu0 0.0
        %3895 = vmatprep.subr.mxu0 0.0
        %3896 = vmatpush1.msra.mxu0 0.0
        %3897 = vmatprep.subr.mxu0 0.0
        %3898 = vmatpush1.msra.mxu0 0.0
        %3899 = vmatprep.subr.mxu0 0.0
        %3900 = vmatpush1.msra.mxu0 0.0
        %3901 = vmatprep.subr.mxu0 0.0
        %3902 = vmatpush1.msra.mxu0 0.0
        %3903 = vmatprep.subr.mxu0 0.0
        %3904 = vmatpush1.msra.mxu0 0.0
        %3905 = vmatprep.subr.mxu0 0.0
        %3906 = vmatpush1.msra.mxu0 0.0
        %3907 = vmatprep.subr.mxu0 0.0
        %3908 = vmatpush1.msra.mxu0 0.0
        %3909 = vmatprep.subr.mxu0 0.0
        %3910 = vmatpush1.msra.mxu0 0.0
        %3911 = vmatprep.subr.mxu0 0.0
        %3912 = vmatpush1.msra.mxu0 0.0
        %3913 = vmatprep.subr.mxu0 0.0
        %3914 = vmatpush1.msra.mxu0 0.0
        %3915 = vmatprep.mubr.f32.mxu0 0.0
        %3916 = vmatmul.mubr.f32.gmra.mrb[0].mxu0 %v3687
        %v3917 = vpop.f32.mrb[0].mxu0
        %v3918 = vadd.f32 %v2433, %v3917
        %v3919 = vpop.f32.mrb[0].mxu0
        %3920 = vdwg.mxu0
        %v3922 = vrot.slane %v3918, 3
        %v3924 = vmul.f32 %v3769, %v3922
        %v3925 = vadd.f32 %v2410, %v3924
        %v3926 = vtanh.pop %v3925
        %v3927 = vsub.f32 1.0, %v3850
        %v3928 = vmul.f32 %v3927, %v3926
        %v3929 = vrot.slane %v3684, 7
        %v3931 = vmul.f32 %v3850, %v3929
        %v3932 = vadd.f32 %v3928, %v3931
        %v3933 = vsel %vm2676, %v3932, %v3929
        %v3935 = vrot.slane %v3933, 5
        %v3936 = vsel %vm597, %v3935, 0
        %3938 = vmatprep.subr.mxu0 0.0
        %3939 = vmatpush1.msra.mxu0 %v2415
        %3940 = vmatprep.subr.mxu0 0.0
        %3941 = vmatpush1.msra.mxu0 %v2416
        %3942 = vmatprep.subr.mxu0 0.0
        %3943 = vmatpush1.msra.mxu0 %v2417
        %3944 = vmatprep.subr.mxu0 0.0
        %3945 = vmatpush1.msra.mxu0 %v2418
        %3946 = vmatprep.subr.mxu0 0.0
        %3947 = vmatpush1.msra.mxu0 0.0
        %3948 = vmatprep.subr.mxu0 0.0
        %3949 = vmatpush1.msra.mxu0 0.0
        %3950 = vmatprep.subr.mxu0 0.0
        %3951 = vmatpush1.msra.mxu0 0.0
        %3952 = vmatprep.subr.mxu0 0.0
        %3953 = vmatpush1.msra.mxu0 0.0
        %3954 = vmatprep.subr.mxu0 0.0
        %3955 = vmatpush1.msra.mxu0 0.0
        %3956 = vmatprep.subr.mxu0 0.0
        %3957 = vmatpush1.msra.mxu0 0.0
        %3958 = vmatprep.subr.mxu0 0.0
        %3959 = vmatpush1.msra.mxu0 0.0
        %3960 = vmatprep.subr.mxu0 0.0
        %3961 = vmatpush1.msra.mxu0 0.0
        %3962 = vmatprep.subr.mxu0 0.0
        %3963 = vmatpush1.msra.mxu0 0.0
        %3964 = vmatprep.subr.mxu0 0.0
        %3965 = vmatpush1.msra.mxu0 0.0
        %3966 = vmatprep.subr.mxu0 0.0
        %3967 = vmatpush1.msra.mxu0 0.0
        %3968 = vmatprep.subr.mxu0 0.0
        %3969 = vmatpush1.msra.mxu0 0.0
        %3970 = vmatprep.subr.mxu0 0.0
        %3971 = vmatpush1.msra.mxu0 0.0
        %3972 = vmatprep.subr.mxu0 0.0
        %3973 = vmatpush1.msra.mxu0 0.0
        %3974 = vmatprep.subr.mxu0 0.0
        %3975 = vmatpush1.msra.mxu0 0.0
        %3976 = vmatprep.subr.mxu0 0.0
        %3977 = vmatpush1.msra.mxu0 0.0
        %3978 = vmatprep.subr.mxu0 0.0
        %3979 = vmatpush1.msra.mxu0 0.0
        %3980 = vmatprep.subr.mxu0 0.0
        %3981 = vmatpush1.msra.mxu0 0.0
        %3982 = vmatprep.subr.mxu0 0.0
        %3983 = vmatpush1.msra.mxu0 0.0
        %3984 = vmatprep.subr.mxu0 0.0
        %3985 = vmatpush1.msra.mxu0 0.0
        %3986 = vmatprep.subr.mxu0 0.0
        %3987 = vmatpush1.msra.mxu0 0.0
        %3988 = vmatprep.subr.mxu0 0.0
        %3989 = vmatpush1.msra.mxu0 0.0
        %3990 = vmatprep.subr.mxu0 0.0
        %3991 = vmatpush1.msra.mxu0 0.0
        %3992 = vmatprep.subr.mxu0 0.0
        %3993 = vmatpush1.msra.mxu0 0.0
        %3994 = vmatprep.subr.mxu0 0.0
        %3995 = vmatpush1.msra.mxu0 0.0
        %3996 = vmatprep.subr.mxu0 0.0
        %3997 = vmatpush1.msra.mxu0 0.0
        %3998 = vmatprep.subr.mxu0 0.0
        %3999 = vmatpush1.msra.mxu0 0.0
        %4000 = vmatprep.subr.mxu0 0.0
        %4001 = vmatpush1.msra.mxu0 0.0
        %4002 = vmatprep.mubr.f32.mxu0 0.0
        %4003 = vmatmul.mubr.f32.gmra.mrb[0].mxu0 %v3936
        %v4004 = vpop.f32.mrb[0].mxu0
        %v4005 = vadd.f32 0.0, %v4004
        %v4006 = vpop.f32.mrb[0].mxu0
        %4007 = vdwg.mxu0
        %v4009 = vrot.slane %v4005, 2
        %v4011 = vadd.f32 %v2300, %v4009
        %v4012 = vadd.f32 %v4011, %v2759
        %v4013 = vxor.u32 %v4012, 2147483648
        %v4014 = vmul.f32 %v4013, 1.442695
        %v4015 = vpow.pop %v4014
        %v4016 = vadd.f32 %v4015, 1.0
        %v4017 = vrcp.pop %v4016
        %v4018 = vmul.f32 1.0, %v4017
        %4019 = vmatprep.subr.mxu0 0.0
        %4020 = vmatpush1.msra.mxu0 %v2420
        %4021 = vmatprep.subr.mxu0 0.0
        %4022 = vmatpush1.msra.mxu0 %v2421
        %4023 = vmatprep.subr.mxu0 0.0
        %4024 = vmatpush1.msra.mxu0 %v2422
        %4025 = vmatprep.subr.mxu0 0.0
        %4026 = vmatpush1.msra.mxu0 %v2423
        %4027 = vmatprep.subr.mxu0 0.0
        %4028 = vmatpush1.msra.mxu0 0.0
        %4029 = vmatprep.subr.mxu0 0.0
        %4030 = vmatpush1.msra.mxu0 0.0
        %4031 = vmatprep.subr.mxu0 0.0
        %4032 = vmatpush1.msra.mxu0 0.0
        %4033 = vmatprep.subr.mxu0 0.0
        %4034 = vmatpush1.msra.mxu0 0.0
        %4035 = vmatprep.subr.mxu0 0.0
        %4036 = vmatpush1.msra.mxu0 0.0
        %4037 = vmatprep.subr.mxu0 0.0
        %4038 = vmatpush1.msra.mxu0 0.0
        %4039 = vmatprep.subr.mxu0 0.0
        %4040 = vmatpush1.msra.mxu0 0.0
        %4041 = vmatprep.subr.mxu0 0.0
        %4042 = vmatpush1.msra.mxu0 0.0
        %4043 = vmatprep.subr.mxu0 0.0
        %4044 = vmatpush1.msra.mxu0 0.0
        %4045 = vmatprep.subr.mxu0 0.0
        %4046 = vmatpush1.msra.mxu0 0.0
        %4047 = vmatprep.subr.mxu0 0.0
        %4048 = vmatpush1.msra.mxu0 0.0
        %4049 = vmatprep.subr.mxu0 0.0
        %4050 = vmatpush1.msra.mxu0 0.0
        %4051 = vmatprep.subr.mxu0 0.0
        %4052 = vmatpush1.msra.mxu0 0.0
        %4053 = vmatprep.subr.mxu0 0.0
        %4054 = vmatpush1.msra.mxu0 0.0
        %4055 = vmatprep.subr.mxu0 0.0
        %4056 = vmatpush1.msra.mxu0 0.0
        %4057 = vmatprep.subr.mxu0 0.0
        %4058 = vmatpush1.msra.mxu0 0.0
        %4059 = vmatprep.subr.mxu0 0.0
        %4060 = vmatpush1.msra.mxu0 0.0
        %4061 = vmatprep.subr.mxu0 0.0
        %4062 = vmatpush1.msra.mxu0 0.0
        %4063 = vmatprep.subr.mxu0 0.0
        %4064 = vmatpush1.msra.mxu0 0.0
        %4065 = vmatprep.subr.mxu0 0.0
        %4066 = vmatpush1.msra.mxu0 0.0
        %4067 = vmatprep.subr.mxu0 0.0
        %4068 = vmatpush1.msra.mxu0 0.0
        %4069 = vmatprep.subr.mxu0 0.0
        %4070 = vmatpush1.msra.mxu0 0.0
        %4071 = vmatprep.subr.mxu0 0.0
        %4072 = vmatpush1.msra.mxu0 0.0
        %4073 = vmatprep.subr.mxu0 0.0
        %4074 = vmatpush1.msra.mxu0 0.0
        %4075 = vmatprep.subr.mxu0 0.0
        %4076 = vmatpush1.msra.mxu0 0.0
        %4077 = vmatprep.subr.mxu0 0.0
        %4078 = vmatpush1.msra.mxu0 0.0
        %4079 = vmatprep.subr.mxu0 0.0
        %4080 = vmatpush1.msra.mxu0 0.0
        %4081 = vmatprep.subr.mxu0 0.0
        %4082 = vmatpush1.msra.mxu0 0.0
        %4083 = vmatprep.mubr.f32.mxu0 0.0
        %4084 = vmatmul.mubr.f32.gmra.mrb[0].mxu0 %v3936
        %v4085 = vpop.f32.mrb[0].mxu0
        %v4086 = vadd.f32 0.0, %v4085
        %v4087 = vpop.f32.mrb[0].mxu0
        %4088 = vdwg.mxu0
        %v4090 = vrot.slane %v4086, 2
        %v4092 = vadd.f32 %v2355, %v4090
        %v4093 = vadd.f32 %v4092, %v2846
        %v4094 = vxor.u32 %v4093, 2147483648
        %v4095 = vmul.f32 %v4094, 1.442695
        %v4096 = vpow.pop %v4095
        %v4097 = vadd.f32 %v4096, 1.0
        %v4098 = vrcp.pop %v4097
        %v4099 = vmul.f32 1.0, %v4098
        %4100 = vmatprep.subr.mxu0 0.0
        %4101 = vmatpush1.msra.mxu0 %v2425
        %4102 = vmatprep.subr.mxu0 0.0
        %4103 = vmatpush1.msra.mxu0 %v2426
        %4104 = vmatprep.subr.mxu0 0.0
        %4105 = vmatpush1.msra.mxu0 %v2427
        %4106 = vmatprep.subr.mxu0 0.0
        %4107 = vmatpush1.msra.mxu0 %v2428
        %4108 = vmatprep.subr.mxu0 0.0
        %4109 = vmatpush1.msra.mxu0 0.0
        %4110 = vmatprep.subr.mxu0 0.0
        %4111 = vmatpush1.msra.mxu0 0.0
        %4112 = vmatprep.subr.mxu0 0.0
        %4113 = vmatpush1.msra.mxu0 0.0
        %4114 = vmatprep.subr.mxu0 0.0
        %4115 = vmatpush1.msra.mxu0 0.0
        %4116 = vmatprep.subr.mxu0 0.0
        %4117 = vmatpush1.msra.mxu0 0.0
        %4118 = vmatprep.subr.mxu0 0.0
        %4119 = vmatpush1.msra.mxu0 0.0
        %4120 = vmatprep.subr.mxu0 0.0
        %4121 = vmatpush1.msra.mxu0 0.0
        %4122 = vmatprep.subr.mxu0 0.0
        %4123 = vmatpush1.msra.mxu0 0.0
        %4124 = vmatprep.subr.mxu0 0.0
        %4125 = vmatpush1.msra.mxu0 0.0
        %4126 = vmatprep.subr.mxu0 0.0
        %4127 = vmatpush1.msra.mxu0 0.0
        %4128 = vmatprep.subr.mxu0 0.0
        %4129 = vmatpush1.msra.mxu0 0.0
        %4130 = vmatprep.subr.mxu0 0.0
        %4131 = vmatpush1.msra.mxu0 0.0
        %4132 = vmatprep.subr.mxu0 0.0
        %4133 = vmatpush1.msra.mxu0 0.0
        %4134 = vmatprep.subr.mxu0 0.0
        %4135 = vmatpush1.msra.mxu0 0.0
        %4136 = vmatprep.subr.mxu0 0.0
        %4137 = vmatpush1.msra.mxu0 0.0
        %4138 = vmatprep.subr.mxu0 0.0
        %4139 = vmatpush1.msra.mxu0 0.0
        %4140 = vmatprep.subr.mxu0 0.0
        %4141 = vmatpush1.msra.mxu0 0.0
        %4142 = vmatprep.subr.mxu0 0.0
        %4143 = vmatpush1.msra.mxu0 0.0
        %4144 = vmatprep.subr.mxu0 0.0
        %4145 = vmatpush1.msra.mxu0 0.0
        %4146 = vmatprep.subr.mxu0 0.0
        %4147 = vmatpush1.msra.mxu0 0.0
        %4148 = vmatprep.subr.mxu0 0.0
        %4149 = vmatpush1.msra.mxu0 0.0
        %4150 = vmatprep.subr.mxu0 0.0
        %4151 = vmatpush1.msra.mxu0 0.0
        %4152 = vmatprep.subr.mxu0 0.0
        %4153 = vmatpush1.msra.mxu0 0.0
        %4154 = vmatprep.subr.mxu0 0.0
        %4155 = vmatpush1.msra.mxu0 0.0
        %4156 = vmatprep.subr.mxu0 0.0
        %4157 = vmatpush1.msra.mxu0 0.0
        %4158 = vmatprep.subr.mxu0 0.0
        %4159 = vmatpush1.msra.mxu0 0.0
        %4160 = vmatprep.subr.mxu0 0.0
        %4161 = vmatpush1.msra.mxu0 0.0
        %4162 = vmatprep.subr.mxu0 0.0
        %4163 = vmatpush1.msra.mxu0 0.0
        %4164 = vmatprep.mubr.f32.mxu0 0.0
        %4165 = vmatmul.mubr.f32.gmra.mrb[0].mxu0 %v3936
        %v4166 = vpop.f32.mrb[0].mxu0
        %v4167 = vadd.f32 %v2433, %v4166
        %v4168 = vpop.f32.mrb[0].mxu0
        %4169 = vdwg.mxu0
        %v4171 = vrot.slane %v4167, 2
        %v4173 = vmul.f32 %v4018, %v4171
        %v4174 = vadd.f32 %v2410, %v4173
        %v4175 = vtanh.pop %v4174
        %v4176 = vsub.f32 1.0, %v4099
        %v4177 = vmul.f32 %v4176, %v4175
        %v4178 = vrot.slane %v3933, 7
        %v4180 = vmul.f32 %v4099, %v4178
        %v4181 = vadd.f32 %v4177, %v4180
        %v4182 = vsel %vm2676, %v4181, %v4178
        %v4184 = vrot.slane %v4182, 6
        %v4185 = vsel %vm597, %v4184, 0
        %4187 = vmatprep.subr.mxu0 0.0
        %4188 = vmatpush1.msra.mxu0 %v2415
        %4189 = vmatprep.subr.mxu0 0.0
        %4190 = vmatpush1.msra.mxu0 %v2416
        %4191 = vmatprep.subr.mxu0 0.0
        %4192 = vmatpush1.msra.mxu0 %v2417
        %4193 = vmatprep.subr.mxu0 0.0
        %4194 = vmatpush1.msra.mxu0 %v2418
        %4195 = vmatprep.subr.mxu0 0.0
        %4196 = vmatpush1.msra.mxu0 0.0
        %4197 = vmatprep.subr.mxu0 0.0
        %4198 = vmatpush1.msra.mxu0 0.0
        %4199 = vmatprep.subr.mxu0 0.0
        %4200 = vmatpush1.msra.mxu0 0.0
        %4201 = vmatprep.subr.mxu0 0.0
        %4202 = vmatpush1.msra.mxu0 0.0
        %4203 = vmatprep.subr.mxu0 0.0
        %4204 = vmatpush1.msra.mxu0 0.0
        %4205 = vmatprep.subr.mxu0 0.0
        %4206 = vmatpush1.msra.mxu0 0.0
        %4207 = vmatprep.subr.mxu0 0.0
        %4208 = vmatpush1.msra.mxu0 0.0
        %4209 = vmatprep.subr.mxu0 0.0
        %4210 = vmatpush1.msra.mxu0 0.0
        %4211 = vmatprep.subr.mxu0 0.0
        %4212 = vmatpush1.msra.mxu0 0.0
        %4213 = vmatprep.subr.mxu0 0.0
        %4214 = vmatpush1.msra.mxu0 0.0
        %4215 = vmatprep.subr.mxu0 0.0
        %4216 = vmatpush1.msra.mxu0 0.0
        %4217 = vmatprep.subr.mxu0 0.0
        %4218 = vmatpush1.msra.mxu0 0.0
        %4219 = vmatprep.subr.mxu0 0.0
        %4220 = vmatpush1.msra.mxu0 0.0
        %4221 = vmatprep.subr.mxu0 0.0
        %4222 = vmatpush1.msra.mxu0 0.0
        %4223 = vmatprep.subr.mxu0 0.0
        %4224 = vmatpush1.msra.mxu0 0.0
        %4225 = vmatprep.subr.mxu0 0.0
        %4226 = vmatpush1.msra.mxu0 0.0
        %4227 = vmatprep.subr.mxu0 0.0
        %4228 = vmatpush1.msra.mxu0 0.0
        %4229 = vmatprep.subr.mxu0 0.0
        %4230 = vmatpush1.msra.mxu0 0.0
        %4231 = vmatprep.subr.mxu0 0.0
        %4232 = vmatpush1.msra.mxu0 0.0
        %4233 = vmatprep.subr.mxu0 0.0
        %4234 = vmatpush1.msra.mxu0 0.0
        %4235 = vmatprep.subr.mxu0 0.0
        %4236 = vmatpush1.msra.mxu0 0.0
        %4237 = vmatprep.subr.mxu0 0.0
        %4238 = vmatpush1.msra.mxu0 0.0
        %4239 = vmatprep.subr.mxu0 0.0
        %4240 = vmatpush1.msra.mxu0 0.0
        %4241 = vmatprep.subr.mxu0 0.0
        %4242 = vmatpush1.msra.mxu0 0.0
        %4243 = vmatprep.subr.mxu0 0.0
        %4244 = vmatpush1.msra.mxu0 0.0
        %4245 = vmatprep.subr.mxu0 0.0
        %4246 = vmatpush1.msra.mxu0 0.0
        %4247 = vmatprep.subr.mxu0 0.0
        %4248 = vmatpush1.msra.mxu0 0.0
        %4249 = vmatprep.subr.mxu0 0.0
        %4250 = vmatpush1.msra.mxu0 0.0
        %4251 = vmatprep.mubr.f32.mxu0 0.0
        %4252 = vmatmul.mubr.f32.gmra.mrb[0].mxu0 %v4185
        %v4253 = vpop.f32.mrb[0].mxu0
        %v4254 = vadd.f32 0.0, %v4253
        %v4255 = vpop.f32.mrb[0].mxu0
        %4256 = vdwg.mxu0
        %v4258 = vrot.slane %v4254, 1
        %v4260 = vadd.f32 %v2300, %v4258
        %v4261 = vadd.f32 %v4260, %v2759
        %v4262 = vxor.u32 %v4261, 2147483648
        %v4263 = vmul.f32 %v4262, 1.442695
        %v4264 = vpow.pop %v4263
        %v4265 = vadd.f32 %v4264, 1.0
        %v4266 = vrcp.pop %v4265
        %v4267 = vmul.f32 1.0, %v4266
        %4268 = vmatprep.subr.mxu0 0.0
        %4269 = vmatpush1.msra.mxu0 %v2420
        %4270 = vmatprep.subr.mxu0 0.0
        %4271 = vmatpush1.msra.mxu0 %v2421
        %4272 = vmatprep.subr.mxu0 0.0
        %4273 = vmatpush1.msra.mxu0 %v2422
        %4274 = vmatprep.subr.mxu0 0.0
        %4275 = vmatpush1.msra.mxu0 %v2423
        %4276 = vmatprep.subr.mxu0 0.0
        %4277 = vmatpush1.msra.mxu0 0.0
        %4278 = vmatprep.subr.mxu0 0.0
        %4279 = vmatpush1.msra.mxu0 0.0
        %4280 = vmatprep.subr.mxu0 0.0
        %4281 = vmatpush1.msra.mxu0 0.0
        %4282 = vmatprep.subr.mxu0 0.0
        %4283 = vmatpush1.msra.mxu0 0.0
        %4284 = vmatprep.subr.mxu0 0.0
        %4285 = vmatpush1.msra.mxu0 0.0
        %4286 = vmatprep.subr.mxu0 0.0
        %4287 = vmatpush1.msra.mxu0 0.0
        %4288 = vmatprep.subr.mxu0 0.0
        %4289 = vmatpush1.msra.mxu0 0.0
        %4290 = vmatprep.subr.mxu0 0.0
        %4291 = vmatpush1.msra.mxu0 0.0
        %4292 = vmatprep.subr.mxu0 0.0
        %4293 = vmatpush1.msra.mxu0 0.0
        %4294 = vmatprep.subr.mxu0 0.0
        %4295 = vmatpush1.msra.mxu0 0.0
        %4296 = vmatprep.subr.mxu0 0.0
        %4297 = vmatpush1.msra.mxu0 0.0
        %4298 = vmatprep.subr.mxu0 0.0
        %4299 = vmatpush1.msra.mxu0 0.0
        %4300 = vmatprep.subr.mxu0 0.0
        %4301 = vmatpush1.msra.mxu0 0.0
        %4302 = vmatprep.subr.mxu0 0.0
        %4303 = vmatpush1.msra.mxu0 0.0
        %4304 = vmatprep.subr.mxu0 0.0
        %4305 = vmatpush1.msra.mxu0 0.0
        %4306 = vmatprep.subr.mxu0 0.0
        %4307 = vmatpush1.msra.mxu0 0.0
        %4308 = vmatprep.subr.mxu0 0.0
        %4309 = vmatpush1.msra.mxu0 0.0
        %4310 = vmatprep.subr.mxu0 0.0
        %4311 = vmatpush1.msra.mxu0 0.0
        %4312 = vmatprep.subr.mxu0 0.0
        %4313 = vmatpush1.msra.mxu0 0.0
        %4314 = vmatprep.subr.mxu0 0.0
        %4315 = vmatpush1.msra.mxu0 0.0
        %4316 = vmatprep.subr.mxu0 0.0
        %4317 = vmatpush1.msra.mxu0 0.0
        %4318 = vmatprep.subr.mxu0 0.0
        %4319 = vmatpush1.msra.mxu0 0.0
        %4320 = vmatprep.subr.mxu0 0.0
        %4321 = vmatpush1.msra.mxu0 0.0
        %4322 = vmatprep.subr.mxu0 0.0
        %4323 = vmatpush1.msra.mxu0 0.0
        %4324 = vmatprep.subr.mxu0 0.0
        %4325 = vmatpush1.msra.mxu0 0.0
        %4326 = vmatprep.subr.mxu0 0.0
        %4327 = vmatpush1.msra.mxu0 0.0
        %4328 = vmatprep.subr.mxu0 0.0
        %4329 = vmatpush1.msra.mxu0 0.0
        %4330 = vmatprep.subr.mxu0 0.0
        %4331 = vmatpush1.msra.mxu0 0.0
        %4332 = vmatprep.mubr.f32.mxu0 0.0
        %4333 = vmatmul.mubr.f32.gmra.mrb[0].mxu0 %v4185
        %v4334 = vpop.f32.mrb[0].mxu0
        %v4335 = vadd.f32 0.0, %v4334
        %v4336 = vpop.f32.mrb[0].mxu0
        %4337 = vdwg.mxu0
        %v4339 = vrot.slane %v4335, 1
        %v4341 = vadd.f32 %v2355, %v4339
        %v4342 = vadd.f32 %v4341, %v2846
        %v4343 = vxor.u32 %v4342, 2147483648
        %v4344 = vmul.f32 %v4343, 1.442695
        %v4345 = vpow.pop %v4344
        %v4346 = vadd.f32 %v4345, 1.0
        %v4347 = vrcp.pop %v4346
        %v4348 = vmul.f32 1.0, %v4347
        %4349 = vmatprep.subr.mxu0 0.0
        %4350 = vmatpush1.msra.mxu0 %v2425
        %4351 = vmatprep.subr.mxu0 0.0
        %4352 = vmatpush1.msra.mxu0 %v2426
        %4353 = vmatprep.subr.mxu0 0.0
        %4354 = vmatpush1.msra.mxu0 %v2427
        %4355 = vmatprep.subr.mxu0 0.0
        %4356 = vmatpush1.msra.mxu0 %v2428
        %4357 = vmatprep.subr.mxu0 0.0
        %4358 = vmatpush1.msra.mxu0 0.0
        %4359 = vmatprep.subr.mxu0 0.0
        %4360 = vmatpush1.msra.mxu0 0.0
        %4361 = vmatprep.subr.mxu0 0.0
        %4362 = vmatpush1.msra.mxu0 0.0
        %4363 = vmatprep.subr.mxu0 0.0
        %4364 = vmatpush1.msra.mxu0 0.0
        %4365 = vmatprep.subr.mxu0 0.0
        %4366 = vmatpush1.msra.mxu0 0.0
        %4367 = vmatprep.subr.mxu0 0.0
        %4368 = vmatpush1.msra.mxu0 0.0
        %4369 = vmatprep.subr.mxu0 0.0
        %4370 = vmatpush1.msra.mxu0 0.0
        %4371 = vmatprep.subr.mxu0 0.0
        %4372 = vmatpush1.msra.mxu0 0.0
        %4373 = vmatprep.subr.mxu0 0.0
        %4374 = vmatpush1.msra.mxu0 0.0
        %4375 = vmatprep.subr.mxu0 0.0
        %4376 = vmatpush1.msra.mxu0 0.0
        %4377 = vmatprep.subr.mxu0 0.0
        %4378 = vmatpush1.msra.mxu0 0.0
        %4379 = vmatprep.subr.mxu0 0.0
        %4380 = vmatpush1.msra.mxu0 0.0
        %4381 = vmatprep.subr.mxu0 0.0
        %4382 = vmatpush1.msra.mxu0 0.0
        %4383 = vmatprep.subr.mxu0 0.0
        %4384 = vmatpush1.msra.mxu0 0.0
        %4385 = vmatprep.subr.mxu0 0.0
        %4386 = vmatpush1.msra.mxu0 0.0
        %4387 = vmatprep.subr.mxu0 0.0
        %4388 = vmatpush1.msra.mxu0 0.0
        %4389 = vmatprep.subr.mxu0 0.0
        %4390 = vmatpush1.msra.mxu0 0.0
        %4391 = vmatprep.subr.mxu0 0.0
        %4392 = vmatpush1.msra.mxu0 0.0
        %4393 = vmatprep.subr.mxu0 0.0
        %4394 = vmatpush1.msra.mxu0 0.0
        %4395 = vmatprep.subr.mxu0 0.0
        %4396 = vmatpush1.msra.mxu0 0.0
        %4397 = vmatprep.subr.mxu0 0.0
        %4398 = vmatpush1.msra.mxu0 0.0
        %4399 = vmatprep.subr.mxu0 0.0
        %4400 = vmatpush1.msra.mxu0 0.0
        %4401 = vmatprep.subr.mxu0 0.0
        %4402 = vmatpush1.msra.mxu0 0.0
        %4403 = vmatprep.subr.mxu0 0.0
        %4404 = vmatpush1.msra.mxu0 0.0
        %4405 = vmatprep.subr.mxu0 0.0
        %4406 = vmatpush1.msra.mxu0 0.0
        %4407 = vmatprep.subr.mxu0 0.0
        %4408 = vmatpush1.msra.mxu0 0.0
        %4409 = vmatprep.subr.mxu0 0.0
        %4410 = vmatpush1.msra.mxu0 0.0
        %4411 = vmatprep.subr.mxu0 0.0
        %4412 = vmatpush1.msra.mxu0 0.0
        %4413 = vmatprep.mubr.f32.mxu0 0.0
        %4414 = vmatmul.mubr.f32.gmra.mrb[0].mxu0 %v4185
        %v4415 = vpop.f32.mrb[0].mxu0
        %v4416 = vadd.f32 %v2433, %v4415
        %v4417 = vpop.f32.mrb[0].mxu0
        %4418 = vdwg.mxu0
        %v4420 = vrot.slane %v4416, 1
        %v4422 = vmul.f32 %v4267, %v4420
        %v4423 = vadd.f32 %v2410, %v4422
        %v4424 = vtanh.pop %v4423
        %v4425 = vsub.f32 1.0, %v4348
        %v4426 = vmul.f32 %v4425, %v4424
        %v4427 = vrot.slane %v4182, 7
        %v4429 = vmul.f32 %v4348, %v4427
        %v4430 = vadd.f32 %v4426, %v4429
        %v4431 = vsel %vm2676, %v4430, %v4427
        %v4433 = vrot.slane %v4431, 7
        %v4438 = vrot.slane %v1093, 7
        %v4439 = vsel %vm770, %v4438, %v1092
        %v4440 = vrot.slane %v1094, 6
        %v4441 = vsel %vm772, %v4440, %v4439
        %v4442 = vrot.slane %v1095, 5
        %v4443 = vsel %vm774, %v4442, %v4441
        %v4444 = vsel %vm597, %v4433, 0
        %v4446 = vsel %vm597, %v4443, 0
        %4448 = vmatprep.subr.mxu0 0.0
        %4449 = vmatpush1.xpose.msra.mxu0 %v4446
        %4450 = vmatprep.subr.mxu0 0.0
        %4451 = vmatpush1.xpose.msra.mxu0 0.0
        %4452 = vmatprep.subr.mxu0 0.0
        %4453 = vmatpush1.xpose.msra.mxu0 0.0
        %4454 = vmatprep.subr.mxu0 0.0
        %4455 = vmatpush1.xpose.msra.mxu0 0.0
        %4456 = vmatprep.subr.mxu0 0.0
        %4457 = vmatpush1.xpose.msra.mxu0 0.0
        %4458 = vmatprep.subr.mxu0 0.0
        %4459 = vmatpush1.xpose.msra.mxu0 0.0
        %4460 = vmatprep.subr.mxu0 0.0
        %4461 = vmatpush1.xpose.msra.mxu0 0.0
        %4462 = vmatprep.subr.mxu0 0.0
        %4463 = vmatpush1.xpose.msra.mxu0 0.0
        %4464 = vmatprep.subr.mxu0 0.0
        %4465 = vmatpush1.xpose.msra.mxu0 0.0
        %4466 = vmatprep.subr.mxu0 0.0
        %4467 = vmatpush1.xpose.msra.mxu0 0.0
        %4468 = vmatprep.subr.mxu0 0.0
        %4469 = vmatpush1.xpose.msra.mxu0 0.0
        %4470 = vmatprep.subr.mxu0 0.0
        %4471 = vmatpush1.xpose.msra.mxu0 0.0
        %4472 = vmatprep.subr.mxu0 0.0
        %4473 = vmatpush1.xpose.msra.mxu0 0.0
        %4474 = vmatprep.subr.mxu0 0.0
        %4475 = vmatpush1.xpose.msra.mxu0 0.0
        %4476 = vmatprep.subr.mxu0 0.0
        %4477 = vmatpush1.xpose.msra.mxu0 0.0
        %4478 = vmatprep.subr.mxu0 0.0
        %4479 = vmatpush1.xpose.msra.mxu0 0.0
        %4480 = vmatprep.subr.mxu0 0.0
        %4481 = vmatpush1.xpose.msra.mxu0 0.0
        %4482 = vmatprep.subr.mxu0 0.0
        %4483 = vmatpush1.xpose.msra.mxu0 0.0
        %4484 = vmatprep.subr.mxu0 0.0
        %4485 = vmatpush1.xpose.msra.mxu0 0.0
        %4486 = vmatprep.subr.mxu0 0.0
        %4487 = vmatpush1.xpose.msra.mxu0 0.0
        %4488 = vmatprep.subr.mxu0 0.0
        %4489 = vmatpush1.xpose.msra.mxu0 0.0
        %4490 = vmatprep.subr.mxu0 0.0
        %4491 = vmatpush1.xpose.msra.mxu0 0.0
        %4492 = vmatprep.subr.mxu0 0.0
        %4493 = vmatpush1.xpose.msra.mxu0 0.0
        %4494 = vmatprep.subr.mxu0 0.0
        %4495 = vmatpush1.xpose.msra.mxu0 0.0
        %4496 = vmatprep.subr.mxu0 0.0
        %4497 = vmatpush1.xpose.msra.mxu0 0.0
        %4498 = vmatprep.subr.mxu0 0.0
        %4499 = vmatpush1.xpose.msra.mxu0 0.0
        %4500 = vmatprep.subr.mxu0 0.0
        %4501 = vmatpush1.xpose.msra.mxu0 0.0
        %4502 = vmatprep.subr.mxu0 0.0
        %4503 = vmatpush1.xpose.msra.mxu0 0.0
        %4504 = vmatprep.subr.mxu0 0.0
        %4505 = vmatpush1.xpose.msra.mxu0 0.0
        %4506 = vmatprep.subr.mxu0 0.0
        %4507 = vmatpush1.xpose.msra.mxu0 0.0
        %4508 = vmatprep.subr.mxu0 0.0
        %4509 = vmatpush1.xpose.msra.mxu0 0.0
        %4510 = vmatprep.subr.mxu0 0.0
        %4511 = vmatpush1.xpose.msra.mxu0 0.0
        %4512 = vmatprep.mubr.f32.mxu0 0.0
        %4513 = vmatmul.mubr.f32.gmra.mrb[0].mxu0 %v4444
        %v4514 = vpop.f32.mrb[0].mxu0
        %v4515 = vadd.f32 0.0, %v4514
        %v4516 = vpop.f32.mrb[0].mxu0
        %4517 = vdwg.mxu0
        %vm4518 = vcmask 24576
        %4519 = vst.msk [vmem:[%s454] sm:$0x1] %vm4518, %v4515
        %s4520 = sand.u32 %s325, 1
        %s4521 = scalar_lea.sflag [#allocation5], %s4520
        %s4522 = sand.u32 %s325, 1
        %s4523 = scalar_lea.vmem [#allocation4], %s4522
        // Predicated region
        $region73: #{gru_model_forward.1} parent=71 // pred_check
          %p4524 = pneg %p335
        $region74: #{gru_model_forward.1} parent=71 // pred_check_branch
          %4526 = sbr.rel (%p4524) target = $region76
        $region75: #{gru_model_forward.1} parent=71 // pred_region
          %s4528 = ssub.s32 16, 16
          %4529 = vsyncadd %s4521, %s4528
          %s4530 = smul.addr %s34, 16
          %s4531 = scalar_lea.hbm %s14, %s4530
          %s4533 = sshll.u32 %s4523, 4
          %s4534 = int_to_ptr.vmem [resolvable:$true] %s4533
          %4536 = dma.vmem_to_hbm [thread:$0]  %s4534, 16, %s4531, %s4521
        $region76: #{gru_model_forward.1} parent=71 // pred_fallthru
          _
      $region72: #{gru_model_forward.1} parent=5 // pred_fallthru
        _
      %p4537 = scmp.le.s32.totalorder 2, %s29
      // Predicated region
      $region77: #{gru_model_forward.1} parent=5 // pred_check
        %p4538 = pneg %p4537
      $region78: #{gru_model_forward.1} parent=5 // pred_check_branch
        %4540 = sbr.rel (%p4538) target = $region80
      $region79: #{gru_model_forward.1} parent=5 // pred_region
        %s4541 = ssub.s32 %s29, 2
        // Predicated region
        $region81: #{gru_model_forward.1} parent=79 // pred_check
          %p4542 = pneg %p341
        $region82: #{gru_model_forward.1} parent=79 // pred_check_branch
          %4544 = sbr.rel (%p4542) target = $region84
        $region83: #{gru_model_forward.1} parent=79 // pred_region
          %s4545 = sand.u32 %s326, 1
          %s4546 = scalar_lea.sflag [#allocation5], %s4545
          %s4547 = sand.u32 %s326, 1
          %s4548 = scalar_lea.vmem [#allocation4], %s4547
          %4549 = dma.done %s4546, 16
        $region84: #{gru_model_forward.1} parent=79 // pred_fallthru
          _
      $region80: #{gru_model_forward.1} parent=5 // pred_fallthru
        _
    $region6: #{gru_model_forward.1} parent=1 // loop_footer
      %s33 = sadd.s32 1, %s29
    $region7: #{gru_model_forward.1} parent=1 // loop_footer_branch
      %28 = sbr.rel target = $region3
    $region8: #{gru_model_forward.1} parent=1 // loop_exit
      _
    %4550 = vsyncpa [#allocation5], 1
    %s4551 = scalar_lea.sflag [#allocation5], 1
    %4552 = vsyncpa %s4551, 1

</llo_original>
